<compile_context>
chip_gen: v7x
topology: tpu7x:2x2x1
jax: 0.10.0
libtpu: 0.0.40
codegen_flags: <defaults>
</compile_context>

<pallas_src>
import functools

import jax
import jax.numpy as jnp
from jax.experimental import pallas as pl
from jax.experimental.pallas import tpu as pltpu


# ------------------------------ fused kernel --------------------------------
def _make_fused_kernel(num_layers):
    """Fused DeepClustering forward for `num_layers` BLSTM layers.

    Ref order (inputs, output):
      x          : (B, T, In)       whole input, batch-major
      per layer  : W_ih_aug  (In_aug, 8H)  zero-padded, gate-dir interleaved columns
                   bias      (1, 8H)       b_ih + b_hh, both directions, same order
                   W_hh_blk  (2H, 8H)      block-diagonal recurrent weights
      W_lin^T    : (2H, F*D)
      b_lin      : (1, F*D)
      out        : (B, T, F*D)
    Gate column layout (width H each): [i_f,i_b, f_f,f_b, o_f,o_b, g_f,g_b].
    """

    def kernel(*refs):
        x_ref = refs[0]
        layer_refs = [refs[1 + 3 * l: 4 + 3 * l] for l in range(num_layers)]
        wlin_ref = refs[1 + 3 * num_layers]
        blin_ref = refs[2 + 3 * num_layers]
        o_ref = refs[3 + 3 * num_layers]

        B, T, FD = o_ref.shape
        H = layer_refs[0][2].shape[0] // 2       # W_hh_blk is (2H, 8H)

        # ---- first-layer augmented time-major input, built in registers ----
        # Row block s = [x(:, s, :) | x(:, T-1-s, :)]  -> fwd sees time s, bwd sees
        # time T-1-s, matching the zero-padded row layout of W_ih_aug.
        x = x_ref[...]                                           # (B, T, In)
        x_aug = jnp.concatenate(
            [jnp.concatenate([x[:, s, :], x[:, T - 1 - s, :]], axis=1)
             for s in range(T)], axis=0)                         # (T*B, 2*In)

        hs = None
        for l in range(num_layers):
            wih_ref, b_ref, whh_ref = layer_refs[l]

            # Hoisted input projection + bias for BOTH directions, all steps: (T*B, 8H)
            p = jnp.dot(x_aug, wih_ref[...],
                        preferred_element_type=jnp.float32) + b_ref[...]
            whh = whh_ref[...]                                   # (2H, 8H)

            h = jnp.zeros((B, 2 * H), jnp.float32)               # [h_f | h_b]
            c = jnp.zeros((B, 2 * H), jnp.float32)
            hs = []
            # Fully-unrolled static time loop; fwd walks t=s, bwd walks t=T-1-s in the
            # same iteration.  One MXU dot + one fused elementwise cell per step.
            for s in range(T):
                gates = p[s * B:(s + 1) * B, :] + jnp.dot(
                    h, whh, preferred_element_type=jnp.float32)  # (B, 8H)
                sig = jax.nn.sigmoid(gates[:, :6 * H])           # i,f,o both dirs
                g = jnp.tanh(gates[:, 6 * H:])
                c = sig[:, 2 * H:4 * H] * c + sig[:, :2 * H] * g
                h = sig[:, 4 * H:6 * H] * jnp.tanh(c)
                hs.append(h)                                     # h_f(s) | h_b(T-1-s)

            if l < num_layers - 1:
                # Next layer's augmented input: row block s =
                #   [h_f(s) | h_b(T-1-s) | h_f(T-1-s) | h_b(s)]  (weights permuted to
                # match at prep time), kept entirely in registers.
                x_aug = jnp.concatenate(
                    [jnp.concatenate([hs[s], hs[T - 1 - s]], axis=1)
                     for s in range(T)], axis=0)                 # (T*B, 4H)

        # ---- Linear + Tanh head: one matmul over (B*T, 2H), one dense store ----
        ys = [jnp.concatenate([hs[t][:, :H], hs[T - 1 - t][:, H:]], axis=1)
              for t in range(T)]                                 # y(t) = [h_f(t)|h_b(t)]
        y = jnp.concatenate([yt[:, None, :] for yt in ys], axis=1)   # (B, T, 2H)
        z = jnp.dot(y.reshape(B * T, 2 * H), wlin_ref[...],
                    preferred_element_type=jnp.float32) + blin_ref[...]
        o_ref[...] = jnp.tanh(z).reshape(B, T, FD)               # 256-lane dense store

    return kernel


# ------------------------------ wrapper --------------------------------------
def deep_clustering_forward(x, kparams, emb_D, is_train=True):
    """x: (B, T, F) if is_train else (T, F). Returns (B, T*F, emb_D) / (T*F, emb_D)."""
    if not is_train:
        x = x[None, ...]
    B, T, F = x.shape
    layers = kparams['layers']
    wlin, blin = kparams['linear']
    num_layers = len(layers)
    FD = wlin.shape[1]

    # Fully-unrolled static kernel: only valid for small static shapes.
    assert T <= 64 and B * T <= 256 and F <= 512, \
        "fused DeepClustering kernel assumes small static (B, T, F)"

    flat_layer_args = [a for layer in layers for a in layer]
    out = pl.pallas_call(
        _make_fused_kernel(num_layers),
        out_shape=jax.ShapeDtypeStruct((B, T, FD), jnp.float32),
    )(x, *flat_layer_args, wlin, blin)

    if is_train:
        return out.reshape(B, -1, emb_D)         # (B, T*F, emb_D)  (module contract)
    return out.reshape(-1, emb_D)


# --------------------------- parameter handling ------------------------------
_GATE_ORDER = (0, 1, 3, 2)   # kernel gate order (i, f, o, g) -> PyTorch (i, f, g, o)


def _gate(w, g, H):
    return w[g * H:(g + 1) * H]


def init_params(key, input_size, hidden_size, num_layers, emb_D):
    """Raw parameters in PyTorch layout (consumed by the pure-JAX reference)."""
    params = {'lstm': []}
    k = key
    bound = 1.0 / (hidden_size ** 0.5)
    for layer in range(num_layers):
        in_sz = input_size if layer == 0 else 2 * hidden_size
        lp = {}
        for dirn in ('fwd', 'bwd'):
            k, k1, k2, k3, k4 = jax.random.split(k, 5)
            w_ih = jax.random.uniform(k1, (4 * hidden_size, in_sz),
                                      minval=-bound, maxval=bound, dtype=jnp.float32)
            w_hh = jax.random.uniform(k2, (4 * hidden_size, hidden_size),
                                      minval=-bound, maxval=bound, dtype=jnp.float32)
            b_ih = jax.random.uniform(k3, (4 * hidden_size,),
                                      minval=-bound, maxval=bound, dtype=jnp.float32)
            b_hh = jax.random.uniform(k4, (4 * hidden_size,),
                                      minval=-bound, maxval=bound, dtype=jnp.float32)
            lp[dirn] = (w_ih, w_hh, b_ih, b_hh)
        params['lstm'].append(lp)
    k, k1, k2 = jax.random.split(k, 3)
    out_features = input_size * emb_D
    bound_l = 1.0 / ((2 * hidden_size) ** 0.5)
    w_lin = jax.random.uniform(k1, (out_features, 2 * hidden_size),
                               minval=-bound_l, maxval=bound_l, dtype=jnp.float32)
    b_lin = jax.random.uniform(k2, (out_features,),
                               minval=-bound_l, maxval=bound_l, dtype=jnp.float32)
    params['linear'] = (w_lin, b_lin)
    return params


def prepare_kernel_params(raw):
    """Build the fused/interleaved kernel weights from PyTorch-layout params.

    Gate columns (width H each): [i_f,i_b, f_f,f_b, o_f,o_b, g_f,g_b].
      W_hh_blk (2H, 8H): rows 0:H = h_f -> fwd columns, rows H:2H = h_b -> bwd columns.
      W_ih_aug layer 0 (2*In, 8H): rows 0:In = x(s) -> fwd cols, rows In:2In = x(T-1-s)
        -> bwd cols.
      W_ih_aug layer l>0 (4H, 8H): augmented input columns are
        [h_f(s) | h_b(T-1-s) | h_f(T-1-s) | h_b(s)], weights scattered to match.
    """
    layers = []
    for l, lp in enumerate(raw['lstm']):
        w_ih_f, w_hh_f, b_ih_f, b_hh_f = lp['fwd']
        w_ih_b, w_hh_b, b_ih_b, b_hh_b = lp['bwd']
        H = w_hh_f.shape[1]
        In = w_ih_f.shape[1]
        first = (l == 0)

        whh = jnp.zeros((2 * H, 8 * H), jnp.float32)
        wih = jnp.zeros(((2 * In) if first else (4 * H), 8 * H), jnp.float32)
        bsum_f = b_ih_f + b_hh_f
        bsum_b = b_ih_b + b_hh_b
        bias_parts = []
        for k, gp in enumerate(_GATE_ORDER):
            cf = slice(2 * k * H, (2 * k + 1) * H)        # fwd columns of gate k
            cb = slice((2 * k + 1) * H, (2 * k + 2) * H)  # bwd columns of gate k
            whh = whh.at[0:H, cf].set(_gate(w_hh_f, gp, H).T)
            whh = whh.at[H:2 * H, cb].set(_gate(w_hh_b, gp, H).T)
            bias_parts += [bsum_f[gp * H:(gp + 1) * H], bsum_b[gp * H:(gp + 1) * H]]
            wfT = _gate(w_ih_f, gp, H).T                  # (In, H)
            wbT = _gate(w_ih_b, gp, H).T
            if first:
                wih = wih.at[0:In, cf].set(wfT)
                wih = wih.at[In:2 * In, cb].set(wbT)
            else:
                # input features: rows 0:H = prev fwd output, H:2H = prev bwd output
                wih = wih.at[0:H, cf].set(wfT[0:H])           # h_f(s)      -> fwd
                wih = wih.at[3 * H:4 * H, cf].set(wfT[H:2 * H])  # h_b(s)    -> fwd
                wih = wih.at[2 * H:3 * H, cb].set(wbT[0:H])      # h_f(T-1-s) -> bwd
                wih = wih.at[H:2 * H, cb].set(wbT[H:2 * H])      # h_b(T-1-s) -> bwd
        bias = jnp.concatenate(bias_parts)[None, :]           # (1, 8H)
        layers.append((wih, bias, whh))

    w_lin, b_lin = raw['linear']
    return {'layers': layers, 'linear': (w_lin.T, b_lin[None, :])}


# --------------------------- pure-JAX reference ------------------------------
def _lstm_dir_ref(x, w_ih, w_hh, b_ih, b_hh):
    B = x.shape[0]
    H = w_hh.shape[1]

    def step(carry, x_t):
        h, c = carry
        gates = x_t @ w_ih.T + h @ w_hh.T + b_ih + b_hh
        i, f, g, o = jnp.split(gates, 4, axis=-1)
        c = jax.nn.sigmoid(f) * c + jax.nn.sigmoid(i) * jnp.tanh(g)
        h = jax.nn.sigmoid(o) * jnp.tanh(c)
        return (h, c), h

    init = (jnp.zeros((B, H), jnp.float32), jnp.zeros((B, H), jnp.float32))
    _, ys = jax.lax.scan(step, init, jnp.transpose(x, (1, 0, 2)))
    return jnp.transpose(ys, (1, 0, 2))


def forward_ref(x, raw, emb_D):
    h = x
    for lp in raw['lstm']:
        fwd = _lstm_dir_ref(h, *lp['fwd'])
        bwd = _lstm_dir_ref(h[:, ::-1, :], *lp['bwd'])[:, ::-1, :]
        h = jnp.concatenate([fwd, bwd], axis=-1)
    B, T, _ = h.shape
    w_lin, b_lin = raw['linear']
    out = jnp.tanh(h.reshape(B * T, -1) @ w_lin.T + b_lin)
    return out.reshape(B, -1, emb_D)


# ----------------------------------- main -------------------------------------
if __name__ == "__main__":
    config = {
        'transform': {'n_fft': 62},  # -> input_size = 62/2 + 1 = 32
        'network': {'hidden_size': 32, 'num_layer': 2, 'emb_D': 8,
                    'dropout': 0.0, 'bidirectional': True, 'activation': 'Tanh'},
    }
    input_size = int(config['transform']['n_fft'] / 2 + 1)
    hidden_size = config['network']['hidden_size']
    num_layers = config['network']['num_layer']
    emb_D = config['network']['emb_D']

    key = jax.random.PRNGKey(0)
    pkey, xkey = jax.random.split(key)
    raw_params = init_params(pkey, input_size, hidden_size, num_layers, emb_D)
    kparams = prepare_kernel_params(raw_params)

    B, T = 2, 8
    x = jax.random.normal(xkey, (B, T, input_size), dtype=jnp.float32)

    fwd = jax.jit(functools.partial(deep_clustering_forward,
                                    emb_D=emb_D, is_train=True))
    out = jax.block_until_ready(fwd(x, kparams))

    assert out.shape == (B, T * input_size, emb_D), out.shape
    ref = forward_ref(x, raw_params, emb_D)
    max_err = float(jnp.max(jnp.abs(out - ref)))
    assert jnp.allclose(out, ref, atol=1e-5, rtol=1e-5), max_err
    print("KERNEL_OK")
</pallas_src>

<mosaic_0001>
module attributes {stable_mosaic.version = 11 : i64} {
  func.func @kernel(%arg0: memref<2x8x32xf32, #tpu.memory_space<vmem>>, %arg1: memref<64x256xf32, #tpu.memory_space<vmem>>, %arg2: memref<1x256xf32, #tpu.memory_space<vmem>>, %arg3: memref<64x256xf32, #tpu.memory_space<vmem>>, %arg4: memref<128x256xf32, #tpu.memory_space<vmem>>, %arg5: memref<1x256xf32, #tpu.memory_space<vmem>>, %arg6: memref<64x256xf32, #tpu.memory_space<vmem>>, %arg7: memref<64x256xf32, #tpu.memory_space<vmem>>, %arg8: memref<1x256xf32, #tpu.memory_space<vmem>>, %arg9: memref<2x8x256xf32, #tpu.memory_space<vmem>>) attributes {dimension_semantics = [], scalar_prefetch = 0 : i64, scratch_operands = 0 : i64, tpu.core_type = #tpu.core_type<tc>} {
    %c0 = arith.constant 0 : index
    %c0_0 = arith.constant 0 : index
    %c0_1 = arith.constant 0 : index
    %0 = vector.load %arg0[%c0, %c0_0, %c0_1] : memref<2x8x32xf32, #tpu.memory_space<vmem>>, vector<2x8x32xf32>
    %1 = vector.extract_strided_slice %0 {offsets = [0, 0, 0], sizes = [2, 1, 32], strides = [1, 1, 1]} : vector<2x8x32xf32> to vector<2x1x32xf32>
    %2 = vector.shape_cast %1 : vector<2x1x32xf32> to vector<2x32xf32>
    %3 = vector.extract_strided_slice %0 {offsets = [0, 7, 0], sizes = [2, 1, 32], strides = [1, 1, 1]} : vector<2x8x32xf32> to vector<2x1x32xf32>
    %4 = vector.shape_cast %3 : vector<2x1x32xf32> to vector<2x32xf32>
    %5 = tpu.concatenate %2, %4 in 1 : vector<2x32xf32>, vector<2x32xf32> -> vector<2x64xf32>
    %6 = vector.extract_strided_slice %0 {offsets = [0, 1, 0], sizes = [2, 1, 32], strides = [1, 1, 1]} : vector<2x8x32xf32> to vector<2x1x32xf32>
    %7 = vector.shape_cast %6 : vector<2x1x32xf32> to vector<2x32xf32>
    %8 = vector.extract_strided_slice %0 {offsets = [0, 6, 0], sizes = [2, 1, 32], strides = [1, 1, 1]} : vector<2x8x32xf32> to vector<2x1x32xf32>
    %9 = vector.shape_cast %8 : vector<2x1x32xf32> to vector<2x32xf32>
    %10 = tpu.concatenate %7, %9 in 1 : vector<2x32xf32>, vector<2x32xf32> -> vector<2x64xf32>
    %11 = vector.extract_strided_slice %0 {offsets = [0, 2, 0], sizes = [2, 1, 32], strides = [1, 1, 1]} : vector<2x8x32xf32> to vector<2x1x32xf32>
    %12 = vector.shape_cast %11 : vector<2x1x32xf32> to vector<2x32xf32>
    %13 = vector.extract_strided_slice %0 {offsets = [0, 5, 0], sizes = [2, 1, 32], strides = [1, 1, 1]} : vector<2x8x32xf32> to vector<2x1x32xf32>
    %14 = vector.shape_cast %13 : vector<2x1x32xf32> to vector<2x32xf32>
    %15 = tpu.concatenate %12, %14 in 1 : vector<2x32xf32>, vector<2x32xf32> -> vector<2x64xf32>
    %16 = vector.extract_strided_slice %0 {offsets = [0, 3, 0], sizes = [2, 1, 32], strides = [1, 1, 1]} : vector<2x8x32xf32> to vector<2x1x32xf32>
    %17 = vector.shape_cast %16 : vector<2x1x32xf32> to vector<2x32xf32>
    %18 = vector.extract_strided_slice %0 {offsets = [0, 4, 0], sizes = [2, 1, 32], strides = [1, 1, 1]} : vector<2x8x32xf32> to vector<2x1x32xf32>
    %19 = vector.shape_cast %18 : vector<2x1x32xf32> to vector<2x32xf32>
    %20 = tpu.concatenate %17, %19 in 1 : vector<2x32xf32>, vector<2x32xf32> -> vector<2x64xf32>
    %21 = vector.extract_strided_slice %0 {offsets = [0, 4, 0], sizes = [2, 1, 32], strides = [1, 1, 1]} : vector<2x8x32xf32> to vector<2x1x32xf32>
    %22 = vector.shape_cast %21 : vector<2x1x32xf32> to vector<2x32xf32>
    %23 = vector.extract_strided_slice %0 {offsets = [0, 3, 0], sizes = [2, 1, 32], strides = [1, 1, 1]} : vector<2x8x32xf32> to vector<2x1x32xf32>
    %24 = vector.shape_cast %23 : vector<2x1x32xf32> to vector<2x32xf32>
    %25 = tpu.concatenate %22, %24 in 1 : vector<2x32xf32>, vector<2x32xf32> -> vector<2x64xf32>
    %26 = vector.extract_strided_slice %0 {offsets = [0, 5, 0], sizes = [2, 1, 32], strides = [1, 1, 1]} : vector<2x8x32xf32> to vector<2x1x32xf32>
    %27 = vector.shape_cast %26 : vector<2x1x32xf32> to vector<2x32xf32>
    %28 = vector.extract_strided_slice %0 {offsets = [0, 2, 0], sizes = [2, 1, 32], strides = [1, 1, 1]} : vector<2x8x32xf32> to vector<2x1x32xf32>
    %29 = vector.shape_cast %28 : vector<2x1x32xf32> to vector<2x32xf32>
    %30 = tpu.concatenate %27, %29 in 1 : vector<2x32xf32>, vector<2x32xf32> -> vector<2x64xf32>
    %31 = vector.extract_strided_slice %0 {offsets = [0, 6, 0], sizes = [2, 1, 32], strides = [1, 1, 1]} : vector<2x8x32xf32> to vector<2x1x32xf32>
    %32 = vector.shape_cast %31 : vector<2x1x32xf32> to vector<2x32xf32>
    %33 = vector.extract_strided_slice %0 {offsets = [0, 1, 0], sizes = [2, 1, 32], strides = [1, 1, 1]} : vector<2x8x32xf32> to vector<2x1x32xf32>
    %34 = vector.shape_cast %33 : vector<2x1x32xf32> to vector<2x32xf32>
    %35 = tpu.concatenate %32, %34 in 1 : vector<2x32xf32>, vector<2x32xf32> -> vector<2x64xf32>
    %36 = vector.extract_strided_slice %0 {offsets = [0, 7, 0], sizes = [2, 1, 32], strides = [1, 1, 1]} : vector<2x8x32xf32> to vector<2x1x32xf32>
    %37 = vector.shape_cast %36 : vector<2x1x32xf32> to vector<2x32xf32>
    %38 = vector.extract_strided_slice %0 {offsets = [0, 0, 0], sizes = [2, 1, 32], strides = [1, 1, 1]} : vector<2x8x32xf32> to vector<2x1x32xf32>
    %39 = vector.shape_cast %38 : vector<2x1x32xf32> to vector<2x32xf32>
    %40 = tpu.concatenate %37, %39 in 1 : vector<2x32xf32>, vector<2x32xf32> -> vector<2x64xf32>
    %41 = tpu.concatenate %5, %10, %15, %20, %25, %30, %35, %40 in 0 : vector<2x64xf32>, vector<2x64xf32>, vector<2x64xf32>, vector<2x64xf32>, vector<2x64xf32>, vector<2x64xf32>, vector<2x64xf32>, vector<2x64xf32> -> vector<16x64xf32>
    %c0_2 = arith.constant 0 : index
    %c0_3 = arith.constant 0 : index
    %42 = vector.load %arg1[%c0_2, %c0_3] : memref<64x256xf32, #tpu.memory_space<vmem>>, vector<64x256xf32>
    %cst = arith.constant dense<0.000000e+00> : vector<16x256xf32>
    %43 = tpu.matmul %41, %42, %cst {dimension_numbers = #tpu.dot_dimension_numbers<[1], [0], [0], [1], [0, 0, 1, 1], [], []>} : vector<16x64xf32>, vector<64x256xf32>, vector<16x256xf32> -> vector<16x256xf32>
    %c0_4 = arith.constant 0 : index
    %c0_5 = arith.constant 0 : index
    %44 = vector.load %arg2[%c0_4, %c0_5] : memref<1x256xf32, #tpu.memory_space<vmem>>, vector<1x256xf32>
    %45 = vector.broadcast %44 : vector<1x256xf32> to vector<16x256xf32>
    %46 = arith.addf %43, %45 : vector<16x256xf32>
    %c0_6 = arith.constant 0 : index
    %c0_7 = arith.constant 0 : index
    %47 = vector.load %arg3[%c0_6, %c0_7] : memref<64x256xf32, #tpu.memory_space<vmem>>, vector<64x256xf32>
    %cst_8 = arith.constant 0.000000e+00 : f32
    %48 = vector.broadcast %cst_8 : f32 to vector<2x64xf32>
    %cst_9 = arith.constant 0.000000e+00 : f32
    %49 = vector.broadcast %cst_9 : f32 to vector<2x64xf32>
    %50 = vector.extract_strided_slice %46 {offsets = [0, 0], sizes = [2, 256], strides = [1, 1]} : vector<16x256xf32> to vector<2x256xf32>
    %cst_10 = arith.constant dense<0.000000e+00> : vector<2x256xf32>
    %51 = tpu.matmul %48, %47, %cst_10 {dimension_numbers = #tpu.dot_dimension_numbers<[1], [0], [0], [1], [0, 0, 1, 1], [], []>} : vector<2x64xf32>, vector<64x256xf32>, vector<2x256xf32> -> vector<2x256xf32>
    %52 = arith.addf %50, %51 : vector<2x256xf32>
    %53 = vector.extract_strided_slice %52 {offsets = [0, 0], sizes = [2, 192], strides = [1, 1]} : vector<2x256xf32> to vector<2x192xf32>
    %54 = arith.negf %53 : vector<2x192xf32>
    %55 = math.exp %54 : vector<2x192xf32>
    %cst_11 = arith.constant 1.000000e+00 : f32
    %56 = vector.broadcast %cst_11 : f32 to vector<2x192xf32>
    %57 = arith.addf %56, %55 : vector<2x192xf32>
    %58 = arith.divf %56, %57 : vector<2x192xf32>
    %59 = vector.extract_strided_slice %52 {offsets = [0, 192], sizes = [2, 64], strides = [1, 1]} : vector<2x256xf32> to vector<2x64xf32>
    %60 = math.tanh %59 : vector<2x64xf32>
    %61 = vector.extract_strided_slice %58 {offsets = [0, 64], sizes = [2, 64], strides = [1, 1]} : vector<2x192xf32> to vector<2x64xf32>
    %62 = arith.mulf %61, %49 : vector<2x64xf32>
    %63 = vector.extract_strided_slice %58 {offsets = [0, 0], sizes = [2, 64], strides = [1, 1]} : vector<2x192xf32> to vector<2x64xf32>
    %64 = arith.mulf %63, %60 : vector<2x64xf32>
    %65 = arith.addf %62, %64 : vector<2x64xf32>
    %66 = vector.extract_strided_slice %58 {offsets = [0, 128], sizes = [2, 64], strides = [1, 1]} : vector<2x192xf32> to vector<2x64xf32>
    %67 = math.tanh %65 : vector<2x64xf32>
    %68 = arith.mulf %66, %67 : vector<2x64xf32>
    %69 = vector.extract_strided_slice %46 {offsets = [2, 0], sizes = [2, 256], strides = [1, 1]} : vector<16x256xf32> to vector<2x256xf32>
    %cst_12 = arith.constant dense<0.000000e+00> : vector<2x256xf32>
    %70 = tpu.matmul %68, %47, %cst_12 {dimension_numbers = #tpu.dot_dimension_numbers<[1], [0], [0], [1], [0, 0, 1, 1], [], []>} : vector<2x64xf32>, vector<64x256xf32>, vector<2x256xf32> -> vector<2x256xf32>
    %71 = arith.addf %69, %70 : vector<2x256xf32>
    %72 = vector.extract_strided_slice %71 {offsets = [0, 0], sizes = [2, 192], strides = [1, 1]} : vector<2x256xf32> to vector<2x192xf32>
    %73 = arith.negf %72 : vector<2x192xf32>
    %74 = math.exp %73 : vector<2x192xf32>
    %cst_13 = arith.constant 1.000000e+00 : f32
    %75 = vector.broadcast %cst_13 : f32 to vector<2x192xf32>
    %76 = arith.addf %75, %74 : vector<2x192xf32>
    %77 = arith.divf %75, %76 : vector<2x192xf32>
    %78 = vector.extract_strided_slice %71 {offsets = [0, 192], sizes = [2, 64], strides = [1, 1]} : vector<2x256xf32> to vector<2x64xf32>
    %79 = math.tanh %78 : vector<2x64xf32>
    %80 = vector.extract_strided_slice %77 {offsets = [0, 64], sizes = [2, 64], strides = [1, 1]} : vector<2x192xf32> to vector<2x64xf32>
    %81 = arith.mulf %80, %65 : vector<2x64xf32>
    %82 = vector.extract_strided_slice %77 {offsets = [0, 0], sizes = [2, 64], strides = [1, 1]} : vector<2x192xf32> to vector<2x64xf32>
    %83 = arith.mulf %82, %79 : vector<2x64xf32>
    %84 = arith.addf %81, %83 : vector<2x64xf32>
    %85 = vector.extract_strided_slice %77 {offsets = [0, 128], sizes = [2, 64], strides = [1, 1]} : vector<2x192xf32> to vector<2x64xf32>
    %86 = math.tanh %84 : vector<2x64xf32>
    %87 = arith.mulf %85, %86 : vector<2x64xf32>
    %88 = vector.extract_strided_slice %46 {offsets = [4, 0], sizes = [2, 256], strides = [1, 1]} : vector<16x256xf32> to vector<2x256xf32>
    %cst_14 = arith.constant dense<0.000000e+00> : vector<2x256xf32>
    %89 = tpu.matmul %87, %47, %cst_14 {dimension_numbers = #tpu.dot_dimension_numbers<[1], [0], [0], [1], [0, 0, 1, 1], [], []>} : vector<2x64xf32>, vector<64x256xf32>, vector<2x256xf32> -> vector<2x256xf32>
    %90 = arith.addf %88, %89 : vector<2x256xf32>
    %91 = vector.extract_strided_slice %90 {offsets = [0, 0], sizes = [2, 192], strides = [1, 1]} : vector<2x256xf32> to vector<2x192xf32>
    %92 = arith.negf %91 : vector<2x192xf32>
    %93 = math.exp %92 : vector<2x192xf32>
    %cst_15 = arith.constant 1.000000e+00 : f32
    %94 = vector.broadcast %cst_15 : f32 to vector<2x192xf32>
    %95 = arith.addf %94, %93 : vector<2x192xf32>
    %96 = arith.divf %94, %95 : vector<2x192xf32>
    %97 = vector.extract_strided_slice %90 {offsets = [0, 192], sizes = [2, 64], strides = [1, 1]} : vector<2x256xf32> to vector<2x64xf32>
    %98 = math.tanh %97 : vector<2x64xf32>
    %99 = vector.extract_strided_slice %96 {offsets = [0, 64], sizes = [2, 64], strides = [1, 1]} : vector<2x192xf32> to vector<2x64xf32>
    %100 = arith.mulf %99, %84 : vector<2x64xf32>
    %101 = vector.extract_strided_slice %96 {offsets = [0, 0], sizes = [2, 64], strides = [1, 1]} : vector<2x192xf32> to vector<2x64xf32>
    %102 = arith.mulf %101, %98 : vector<2x64xf32>
    %103 = arith.addf %100, %102 : vector<2x64xf32>
    %104 = vector.extract_strided_slice %96 {offsets = [0, 128], sizes = [2, 64], strides = [1, 1]} : vector<2x192xf32> to vector<2x64xf32>
    %105 = math.tanh %103 : vector<2x64xf32>
    %106 = arith.mulf %104, %105 : vector<2x64xf32>
    %107 = vector.extract_strided_slice %46 {offsets = [6, 0], sizes = [2, 256], strides = [1, 1]} : vector<16x256xf32> to vector<2x256xf32>
    %cst_16 = arith.constant dense<0.000000e+00> : vector<2x256xf32>
    %108 = tpu.matmul %106, %47, %cst_16 {dimension_numbers = #tpu.dot_dimension_numbers<[1], [0], [0], [1], [0, 0, 1, 1], [], []>} : vector<2x64xf32>, vector<64x256xf32>, vector<2x256xf32> -> vector<2x256xf32>
    %109 = arith.addf %107, %108 : vector<2x256xf32>
    %110 = vector.extract_strided_slice %109 {offsets = [0, 0], sizes = [2, 192], strides = [1, 1]} : vector<2x256xf32> to vector<2x192xf32>
    %111 = arith.negf %110 : vector<2x192xf32>
    %112 = math.exp %111 : vector<2x192xf32>
    %cst_17 = arith.constant 1.000000e+00 : f32
    %113 = vector.broadcast %cst_17 : f32 to vector<2x192xf32>
    %114 = arith.addf %113, %112 : vector<2x192xf32>
    %115 = arith.divf %113, %114 : vector<2x192xf32>
    %116 = vector.extract_strided_slice %109 {offsets = [0, 192], sizes = [2, 64], strides = [1, 1]} : vector<2x256xf32> to vector<2x64xf32>
    %117 = math.tanh %116 : vector<2x64xf32>
    %118 = vector.extract_strided_slice %115 {offsets = [0, 64], sizes = [2, 64], strides = [1, 1]} : vector<2x192xf32> to vector<2x64xf32>
    %119 = arith.mulf %118, %103 : vector<2x64xf32>
    %120 = vector.extract_strided_slice %115 {offsets = [0, 0], sizes = [2, 64], strides = [1, 1]} : vector<2x192xf32> to vector<2x64xf32>
    %121 = arith.mulf %120, %117 : vector<2x64xf32>
    %122 = arith.addf %119, %121 : vector<2x64xf32>
    %123 = vector.extract_strided_slice %115 {offsets = [0, 128], sizes = [2, 64], strides = [1, 1]} : vector<2x192xf32> to vector<2x64xf32>
    %124 = math.tanh %122 : vector<2x64xf32>
    %125 = arith.mulf %123, %124 : vector<2x64xf32>
    %126 = vector.extract_strided_slice %46 {offsets = [8, 0], sizes = [2, 256], strides = [1, 1]} : vector<16x256xf32> to vector<2x256xf32>
    %cst_18 = arith.constant dense<0.000000e+00> : vector<2x256xf32>
    %127 = tpu.matmul %125, %47, %cst_18 {dimension_numbers = #tpu.dot_dimension_numbers<[1], [0], [0], [1], [0, 0, 1, 1], [], []>} : vector<2x64xf32>, vector<64x256xf32>, vector<2x256xf32> -> vector<2x256xf32>
    %128 = arith.addf %126, %127 : vector<2x256xf32>
    %129 = vector.extract_strided_slice %128 {offsets = [0, 0], sizes = [2, 192], strides = [1, 1]} : vector<2x256xf32> to vector<2x192xf32>
    %130 = arith.negf %129 : vector<2x192xf32>
    %131 = math.exp %130 : vector<2x192xf32>
    %cst_19 = arith.constant 1.000000e+00 : f32
    %132 = vector.broadcast %cst_19 : f32 to vector<2x192xf32>
    %133 = arith.addf %132, %131 : vector<2x192xf32>
    %134 = arith.divf %132, %133 : vector<2x192xf32>
    %135 = vector.extract_strided_slice %128 {offsets = [0, 192], sizes = [2, 64], strides = [1, 1]} : vector<2x256xf32> to vector<2x64xf32>
    %136 = math.tanh %135 : vector<2x64xf32>
    %137 = vector.extract_strided_slice %134 {offsets = [0, 64], sizes = [2, 64], strides = [1, 1]} : vector<2x192xf32> to vector<2x64xf32>
    %138 = arith.mulf %137, %122 : vector<2x64xf32>
    %139 = vector.extract_strided_slice %134 {offsets = [0, 0], sizes = [2, 64], strides = [1, 1]} : vector<2x192xf32> to vector<2x64xf32>
    %140 = arith.mulf %139, %136 : vector<2x64xf32>
    %141 = arith.addf %138, %140 : vector<2x64xf32>
    %142 = vector.extract_strided_slice %134 {offsets = [0, 128], sizes = [2, 64], strides = [1, 1]} : vector<2x192xf32> to vector<2x64xf32>
    %143 = math.tanh %141 : vector<2x64xf32>
    %144 = arith.mulf %142, %143 : vector<2x64xf32>
    %145 = vector.extract_strided_slice %46 {offsets = [10, 0], sizes = [2, 256], strides = [1, 1]} : vector<16x256xf32> to vector<2x256xf32>
    %cst_20 = arith.constant dense<0.000000e+00> : vector<2x256xf32>
    %146 = tpu.matmul %144, %47, %cst_20 {dimension_numbers = #tpu.dot_dimension_numbers<[1], [0], [0], [1], [0, 0, 1, 1], [], []>} : vector<2x64xf32>, vector<64x256xf32>, vector<2x256xf32> -> vector<2x256xf32>
    %147 = arith.addf %145, %146 : vector<2x256xf32>
    %148 = vector.extract_strided_slice %147 {offsets = [0, 0], sizes = [2, 192], strides = [1, 1]} : vector<2x256xf32> to vector<2x192xf32>
    %149 = arith.negf %148 : vector<2x192xf32>
    %150 = math.exp %149 : vector<2x192xf32>
    %cst_21 = arith.constant 1.000000e+00 : f32
    %151 = vector.broadcast %cst_21 : f32 to vector<2x192xf32>
    %152 = arith.addf %151, %150 : vector<2x192xf32>
    %153 = arith.divf %151, %152 : vector<2x192xf32>
    %154 = vector.extract_strided_slice %147 {offsets = [0, 192], sizes = [2, 64], strides = [1, 1]} : vector<2x256xf32> to vector<2x64xf32>
    %155 = math.tanh %154 : vector<2x64xf32>
    %156 = vector.extract_strided_slice %153 {offsets = [0, 64], sizes = [2, 64], strides = [1, 1]} : vector<2x192xf32> to vector<2x64xf32>
    %157 = arith.mulf %156, %141 : vector<2x64xf32>
    %158 = vector.extract_strided_slice %153 {offsets = [0, 0], sizes = [2, 64], strides = [1, 1]} : vector<2x192xf32> to vector<2x64xf32>
    %159 = arith.mulf %158, %155 : vector<2x64xf32>
    %160 = arith.addf %157, %159 : vector<2x64xf32>
    %161 = vector.extract_strided_slice %153 {offsets = [0, 128], sizes = [2, 64], strides = [1, 1]} : vector<2x192xf32> to vector<2x64xf32>
    %162 = math.tanh %160 : vector<2x64xf32>
    %163 = arith.mulf %161, %162 : vector<2x64xf32>
    %164 = vector.extract_strided_slice %46 {offsets = [12, 0], sizes = [2, 256], strides = [1, 1]} : vector<16x256xf32> to vector<2x256xf32>
    %cst_22 = arith.constant dense<0.000000e+00> : vector<2x256xf32>
    %165 = tpu.matmul %163, %47, %cst_22 {dimension_numbers = #tpu.dot_dimension_numbers<[1], [0], [0], [1], [0, 0, 1, 1], [], []>} : vector<2x64xf32>, vector<64x256xf32>, vector<2x256xf32> -> vector<2x256xf32>
    %166 = arith.addf %164, %165 : vector<2x256xf32>
    %167 = vector.extract_strided_slice %166 {offsets = [0, 0], sizes = [2, 192], strides = [1, 1]} : vector<2x256xf32> to vector<2x192xf32>
    %168 = arith.negf %167 : vector<2x192xf32>
    %169 = math.exp %168 : vector<2x192xf32>
    %cst_23 = arith.constant 1.000000e+00 : f32
    %170 = vector.broadcast %cst_23 : f32 to vector<2x192xf32>
    %171 = arith.addf %170, %169 : vector<2x192xf32>
    %172 = arith.divf %170, %171 : vector<2x192xf32>
    %173 = vector.extract_strided_slice %166 {offsets = [0, 192], sizes = [2, 64], strides = [1, 1]} : vector<2x256xf32> to vector<2x64xf32>
    %174 = math.tanh %173 : vector<2x64xf32>
    %175 = vector.extract_strided_slice %172 {offsets = [0, 64], sizes = [2, 64], strides = [1, 1]} : vector<2x192xf32> to vector<2x64xf32>
    %176 = arith.mulf %175, %160 : vector<2x64xf32>
    %177 = vector.extract_strided_slice %172 {offsets = [0, 0], sizes = [2, 64], strides = [1, 1]} : vector<2x192xf32> to vector<2x64xf32>
    %178 = arith.mulf %177, %174 : vector<2x64xf32>
    %179 = arith.addf %176, %178 : vector<2x64xf32>
    %180 = vector.extract_strided_slice %172 {offsets = [0, 128], sizes = [2, 64], strides = [1, 1]} : vector<2x192xf32> to vector<2x64xf32>
    %181 = math.tanh %179 : vector<2x64xf32>
    %182 = arith.mulf %180, %181 : vector<2x64xf32>
    %183 = vector.extract_strided_slice %46 {offsets = [14, 0], sizes = [2, 256], strides = [1, 1]} : vector<16x256xf32> to vector<2x256xf32>
    %cst_24 = arith.constant dense<0.000000e+00> : vector<2x256xf32>
    %184 = tpu.matmul %182, %47, %cst_24 {dimension_numbers = #tpu.dot_dimension_numbers<[1], [0], [0], [1], [0, 0, 1, 1], [], []>} : vector<2x64xf32>, vector<64x256xf32>, vector<2x256xf32> -> vector<2x256xf32>
    %185 = arith.addf %183, %184 : vector<2x256xf32>
    %186 = vector.extract_strided_slice %185 {offsets = [0, 0], sizes = [2, 192], strides = [1, 1]} : vector<2x256xf32> to vector<2x192xf32>
    %187 = arith.negf %186 : vector<2x192xf32>
    %188 = math.exp %187 : vector<2x192xf32>
    %cst_25 = arith.constant 1.000000e+00 : f32
    %189 = vector.broadcast %cst_25 : f32 to vector<2x192xf32>
    %190 = arith.addf %189, %188 : vector<2x192xf32>
    %191 = arith.divf %189, %190 : vector<2x192xf32>
    %192 = vector.extract_strided_slice %185 {offsets = [0, 192], sizes = [2, 64], strides = [1, 1]} : vector<2x256xf32> to vector<2x64xf32>
    %193 = math.tanh %192 : vector<2x64xf32>
    %194 = vector.extract_strided_slice %191 {offsets = [0, 64], sizes = [2, 64], strides = [1, 1]} : vector<2x192xf32> to vector<2x64xf32>
    %195 = arith.mulf %194, %179 : vector<2x64xf32>
    %196 = vector.extract_strided_slice %191 {offsets = [0, 0], sizes = [2, 64], strides = [1, 1]} : vector<2x192xf32> to vector<2x64xf32>
    %197 = arith.mulf %196, %193 : vector<2x64xf32>
    %198 = arith.addf %195, %197 : vector<2x64xf32>
    %199 = vector.extract_strided_slice %191 {offsets = [0, 128], sizes = [2, 64], strides = [1, 1]} : vector<2x192xf32> to vector<2x64xf32>
    %200 = math.tanh %198 : vector<2x64xf32>
    %201 = arith.mulf %199, %200 : vector<2x64xf32>
    %202 = tpu.concatenate %68, %201 in 1 : vector<2x64xf32>, vector<2x64xf32> -> vector<2x128xf32>
    %203 = tpu.concatenate %87, %182 in 1 : vector<2x64xf32>, vector<2x64xf32> -> vector<2x128xf32>
    %204 = tpu.concatenate %106, %163 in 1 : vector<2x64xf32>, vector<2x64xf32> -> vector<2x128xf32>
    %205 = tpu.concatenate %125, %144 in 1 : vector<2x64xf32>, vector<2x64xf32> -> vector<2x128xf32>
    %206 = tpu.concatenate %144, %125 in 1 : vector<2x64xf32>, vector<2x64xf32> -> vector<2x128xf32>
    %207 = tpu.concatenate %163, %106 in 1 : vector<2x64xf32>, vector<2x64xf32> -> vector<2x128xf32>
    %208 = tpu.concatenate %182, %87 in 1 : vector<2x64xf32>, vector<2x64xf32> -> vector<2x128xf32>
    %209 = tpu.concatenate %201, %68 in 1 : vector<2x64xf32>, vector<2x64xf32> -> vector<2x128xf32>
    %210 = tpu.concatenate %202, %203, %204, %205, %206, %207, %208, %209 in 0 : vector<2x128xf32>, vector<2x128xf32>, vector<2x128xf32>, vector<2x128xf32>, vector<2x128xf32>, vector<2x128xf32>, vector<2x128xf32>, vector<2x128xf32> -> vector<16x128xf32>
    %c0_26 = arith.constant 0 : index
    %c0_27 = arith.constant 0 : index
    %211 = vector.load %arg4[%c0_26, %c0_27] : memref<128x256xf32, #tpu.memory_space<vmem>>, vector<128x256xf32>
    %cst_28 = arith.constant dense<0.000000e+00> : vector<16x256xf32>
    %212 = tpu.matmul %210, %211, %cst_28 {dimension_numbers = #tpu.dot_dimension_numbers<[1], [0], [0], [1], [0, 0, 1, 1], [], []>} : vector<16x128xf32>, vector<128x256xf32>, vector<16x256xf32> -> vector<16x256xf32>
    %c0_29 = arith.constant 0 : index
    %c0_30 = arith.constant 0 : index
    %213 = vector.load %arg5[%c0_29, %c0_30] : memref<1x256xf32, #tpu.memory_space<vmem>>, vector<1x256xf32>
    %214 = vector.broadcast %213 : vector<1x256xf32> to vector<16x256xf32>
    %215 = arith.addf %212, %214 : vector<16x256xf32>
    %c0_31 = arith.constant 0 : index
    %c0_32 = arith.constant 0 : index
    %216 = vector.load %arg6[%c0_31, %c0_32] : memref<64x256xf32, #tpu.memory_space<vmem>>, vector<64x256xf32>
    %cst_33 = arith.constant 0.000000e+00 : f32
    %217 = vector.broadcast %cst_33 : f32 to vector<2x64xf32>
    %cst_34 = arith.constant 0.000000e+00 : f32
    %218 = vector.broadcast %cst_34 : f32 to vector<2x64xf32>
    %219 = vector.extract_strided_slice %215 {offsets = [0, 0], sizes = [2, 256], strides = [1, 1]} : vector<16x256xf32> to vector<2x256xf32>
    %cst_35 = arith.constant dense<0.000000e+00> : vector<2x256xf32>
    %220 = tpu.matmul %217, %216, %cst_35 {dimension_numbers = #tpu.dot_dimension_numbers<[1], [0], [0], [1], [0, 0, 1, 1], [], []>} : vector<2x64xf32>, vector<64x256xf32>, vector<2x256xf32> -> vector<2x256xf32>
    %221 = arith.addf %219, %220 : vector<2x256xf32>
    %222 = vector.extract_strided_slice %221 {offsets = [0, 0], sizes = [2, 192], strides = [1, 1]} : vector<2x256xf32> to vector<2x192xf32>
    %223 = arith.negf %222 : vector<2x192xf32>
    %224 = math.exp %223 : vector<2x192xf32>
    %cst_36 = arith.constant 1.000000e+00 : f32
    %225 = vector.broadcast %cst_36 : f32 to vector<2x192xf32>
    %226 = arith.addf %225, %224 : vector<2x192xf32>
    %227 = arith.divf %225, %226 : vector<2x192xf32>
    %228 = vector.extract_strided_slice %221 {offsets = [0, 192], sizes = [2, 64], strides = [1, 1]} : vector<2x256xf32> to vector<2x64xf32>
    %229 = math.tanh %228 : vector<2x64xf32>
    %230 = vector.extract_strided_slice %227 {offsets = [0, 64], sizes = [2, 64], strides = [1, 1]} : vector<2x192xf32> to vector<2x64xf32>
    %231 = arith.mulf %230, %218 : vector<2x64xf32>
    %232 = vector.extract_strided_slice %227 {offsets = [0, 0], sizes = [2, 64], strides = [1, 1]} : vector<2x192xf32> to vector<2x64xf32>
    %233 = arith.mulf %232, %229 : vector<2x64xf32>
    %234 = arith.addf %231, %233 : vector<2x64xf32>
    %235 = vector.extract_strided_slice %227 {offsets = [0, 128], sizes = [2, 64], strides = [1, 1]} : vector<2x192xf32> to vector<2x64xf32>
    %236 = math.tanh %234 : vector<2x64xf32>
    %237 = arith.mulf %235, %236 : vector<2x64xf32>
    %238 = vector.extract_strided_slice %215 {offsets = [2, 0], sizes = [2, 256], strides = [1, 1]} : vector<16x256xf32> to vector<2x256xf32>
    %cst_37 = arith.constant dense<0.000000e+00> : vector<2x256xf32>
    %239 = tpu.matmul %237, %216, %cst_37 {dimension_numbers = #tpu.dot_dimension_numbers<[1], [0], [0], [1], [0, 0, 1, 1], [], []>} : vector<2x64xf32>, vector<64x256xf32>, vector<2x256xf32> -> vector<2x256xf32>
    %240 = arith.addf %238, %239 : vector<2x256xf32>
    %241 = vector.extract_strided_slice %240 {offsets = [0, 0], sizes = [2, 192], strides = [1, 1]} : vector<2x256xf32> to vector<2x192xf32>
    %242 = arith.negf %241 : vector<2x192xf32>
    %243 = math.exp %242 : vector<2x192xf32>
    %cst_38 = arith.constant 1.000000e+00 : f32
    %244 = vector.broadcast %cst_38 : f32 to vector<2x192xf32>
    %245 = arith.addf %244, %243 : vector<2x192xf32>
    %246 = arith.divf %244, %245 : vector<2x192xf32>
    %247 = vector.extract_strided_slice %240 {offsets = [0, 192], sizes = [2, 64], strides = [1, 1]} : vector<2x256xf32> to vector<2x64xf32>
    %248 = math.tanh %247 : vector<2x64xf32>
    %249 = vector.extract_strided_slice %246 {offsets = [0, 64], sizes = [2, 64], strides = [1, 1]} : vector<2x192xf32> to vector<2x64xf32>
    %250 = arith.mulf %249, %234 : vector<2x64xf32>
    %251 = vector.extract_strided_slice %246 {offsets = [0, 0], sizes = [2, 64], strides = [1, 1]} : vector<2x192xf32> to vector<2x64xf32>
    %252 = arith.mulf %251, %248 : vector<2x64xf32>
    %253 = arith.addf %250, %252 : vector<2x64xf32>
    %254 = vector.extract_strided_slice %246 {offsets = [0, 128], sizes = [2, 64], strides = [1, 1]} : vector<2x192xf32> to vector<2x64xf32>
    %255 = math.tanh %253 : vector<2x64xf32>
    %256 = arith.mulf %254, %255 : vector<2x64xf32>
    %257 = vector.extract_strided_slice %215 {offsets = [4, 0], sizes = [2, 256], strides = [1, 1]} : vector<16x256xf32> to vector<2x256xf32>
    %cst_39 = arith.constant dense<0.000000e+00> : vector<2x256xf32>
    %258 = tpu.matmul %256, %216, %cst_39 {dimension_numbers = #tpu.dot_dimension_numbers<[1], [0], [0], [1], [0, 0, 1, 1], [], []>} : vector<2x64xf32>, vector<64x256xf32>, vector<2x256xf32> -> vector<2x256xf32>
    %259 = arith.addf %257, %258 : vector<2x256xf32>
    %260 = vector.extract_strided_slice %259 {offsets = [0, 0], sizes = [2, 192], strides = [1, 1]} : vector<2x256xf32> to vector<2x192xf32>
    %261 = arith.negf %260 : vector<2x192xf32>
    %262 = math.exp %261 : vector<2x192xf32>
    %cst_40 = arith.constant 1.000000e+00 : f32
    %263 = vector.broadcast %cst_40 : f32 to vector<2x192xf32>
    %264 = arith.addf %263, %262 : vector<2x192xf32>
    %265 = arith.divf %263, %264 : vector<2x192xf32>
    %266 = vector.extract_strided_slice %259 {offsets = [0, 192], sizes = [2, 64], strides = [1, 1]} : vector<2x256xf32> to vector<2x64xf32>
    %267 = math.tanh %266 : vector<2x64xf32>
    %268 = vector.extract_strided_slice %265 {offsets = [0, 64], sizes = [2, 64], strides = [1, 1]} : vector<2x192xf32> to vector<2x64xf32>
    %269 = arith.mulf %268, %253 : vector<2x64xf32>
    %270 = vector.extract_strided_slice %265 {offsets = [0, 0], sizes = [2, 64], strides = [1, 1]} : vector<2x192xf32> to vector<2x64xf32>
    %271 = arith.mulf %270, %267 : vector<2x64xf32>
    %272 = arith.addf %269, %271 : vector<2x64xf32>
    %273 = vector.extract_strided_slice %265 {offsets = [0, 128], sizes = [2, 64], strides = [1, 1]} : vector<2x192xf32> to vector<2x64xf32>
    %274 = math.tanh %272 : vector<2x64xf32>
    %275 = arith.mulf %273, %274 : vector<2x64xf32>
    %276 = vector.extract_strided_slice %215 {offsets = [6, 0], sizes = [2, 256], strides = [1, 1]} : vector<16x256xf32> to vector<2x256xf32>
    %cst_41 = arith.constant dense<0.000000e+00> : vector<2x256xf32>
    %277 = tpu.matmul %275, %216, %cst_41 {dimension_numbers = #tpu.dot_dimension_numbers<[1], [0], [0], [1], [0, 0, 1, 1], [], []>} : vector<2x64xf32>, vector<64x256xf32>, vector<2x256xf32> -> vector<2x256xf32>
    %278 = arith.addf %276, %277 : vector<2x256xf32>
    %279 = vector.extract_strided_slice %278 {offsets = [0, 0], sizes = [2, 192], strides = [1, 1]} : vector<2x256xf32> to vector<2x192xf32>
    %280 = arith.negf %279 : vector<2x192xf32>
    %281 = math.exp %280 : vector<2x192xf32>
    %cst_42 = arith.constant 1.000000e+00 : f32
    %282 = vector.broadcast %cst_42 : f32 to vector<2x192xf32>
    %283 = arith.addf %282, %281 : vector<2x192xf32>
    %284 = arith.divf %282, %283 : vector<2x192xf32>
    %285 = vector.extract_strided_slice %278 {offsets = [0, 192], sizes = [2, 64], strides = [1, 1]} : vector<2x256xf32> to vector<2x64xf32>
    %286 = math.tanh %285 : vector<2x64xf32>
    %287 = vector.extract_strided_slice %284 {offsets = [0, 64], sizes = [2, 64], strides = [1, 1]} : vector<2x192xf32> to vector<2x64xf32>
    %288 = arith.mulf %287, %272 : vector<2x64xf32>
    %289 = vector.extract_strided_slice %284 {offsets = [0, 0], sizes = [2, 64], strides = [1, 1]} : vector<2x192xf32> to vector<2x64xf32>
    %290 = arith.mulf %289, %286 : vector<2x64xf32>
    %291 = arith.addf %288, %290 : vector<2x64xf32>
    %292 = vector.extract_strided_slice %284 {offsets = [0, 128], sizes = [2, 64], strides = [1, 1]} : vector<2x192xf32> to vector<2x64xf32>
    %293 = math.tanh %291 : vector<2x64xf32>
    %294 = arith.mulf %292, %293 : vector<2x64xf32>
    %295 = vector.extract_strided_slice %215 {offsets = [8, 0], sizes = [2, 256], strides = [1, 1]} : vector<16x256xf32> to vector<2x256xf32>
    %cst_43 = arith.constant dense<0.000000e+00> : vector<2x256xf32>
    %296 = tpu.matmul %294, %216, %cst_43 {dimension_numbers = #tpu.dot_dimension_numbers<[1], [0], [0], [1], [0, 0, 1, 1], [], []>} : vector<2x64xf32>, vector<64x256xf32>, vector<2x256xf32> -> vector<2x256xf32>
    %297 = arith.addf %295, %296 : vector<2x256xf32>
    %298 = vector.extract_strided_slice %297 {offsets = [0, 0], sizes = [2, 192], strides = [1, 1]} : vector<2x256xf32> to vector<2x192xf32>
    %299 = arith.negf %298 : vector<2x192xf32>
    %300 = math.exp %299 : vector<2x192xf32>
    %cst_44 = arith.constant 1.000000e+00 : f32
    %301 = vector.broadcast %cst_44 : f32 to vector<2x192xf32>
    %302 = arith.addf %301, %300 : vector<2x192xf32>
    %303 = arith.divf %301, %302 : vector<2x192xf32>
    %304 = vector.extract_strided_slice %297 {offsets = [0, 192], sizes = [2, 64], strides = [1, 1]} : vector<2x256xf32> to vector<2x64xf32>
    %305 = math.tanh %304 : vector<2x64xf32>
    %306 = vector.extract_strided_slice %303 {offsets = [0, 64], sizes = [2, 64], strides = [1, 1]} : vector<2x192xf32> to vector<2x64xf32>
    %307 = arith.mulf %306, %291 : vector<2x64xf32>
    %308 = vector.extract_strided_slice %303 {offsets = [0, 0], sizes = [2, 64], strides = [1, 1]} : vector<2x192xf32> to vector<2x64xf32>
    %309 = arith.mulf %308, %305 : vector<2x64xf32>
    %310 = arith.addf %307, %309 : vector<2x64xf32>
    %311 = vector.extract_strided_slice %303 {offsets = [0, 128], sizes = [2, 64], strides = [1, 1]} : vector<2x192xf32> to vector<2x64xf32>
    %312 = math.tanh %310 : vector<2x64xf32>
    %313 = arith.mulf %311, %312 : vector<2x64xf32>
    %314 = vector.extract_strided_slice %215 {offsets = [10, 0], sizes = [2, 256], strides = [1, 1]} : vector<16x256xf32> to vector<2x256xf32>
    %cst_45 = arith.constant dense<0.000000e+00> : vector<2x256xf32>
    %315 = tpu.matmul %313, %216, %cst_45 {dimension_numbers = #tpu.dot_dimension_numbers<[1], [0], [0], [1], [0, 0, 1, 1], [], []>} : vector<2x64xf32>, vector<64x256xf32>, vector<2x256xf32> -> vector<2x256xf32>
    %316 = arith.addf %314, %315 : vector<2x256xf32>
    %317 = vector.extract_strided_slice %316 {offsets = [0, 0], sizes = [2, 192], strides = [1, 1]} : vector<2x256xf32> to vector<2x192xf32>
    %318 = arith.negf %317 : vector<2x192xf32>
    %319 = math.exp %318 : vector<2x192xf32>
    %cst_46 = arith.constant 1.000000e+00 : f32
    %320 = vector.broadcast %cst_46 : f32 to vector<2x192xf32>
    %321 = arith.addf %320, %319 : vector<2x192xf32>
    %322 = arith.divf %320, %321 : vector<2x192xf32>
    %323 = vector.extract_strided_slice %316 {offsets = [0, 192], sizes = [2, 64], strides = [1, 1]} : vector<2x256xf32> to vector<2x64xf32>
    %324 = math.tanh %323 : vector<2x64xf32>
    %325 = vector.extract_strided_slice %322 {offsets = [0, 64], sizes = [2, 64], strides = [1, 1]} : vector<2x192xf32> to vector<2x64xf32>
    %326 = arith.mulf %325, %310 : vector<2x64xf32>
    %327 = vector.extract_strided_slice %322 {offsets = [0, 0], sizes = [2, 64], strides = [1, 1]} : vector<2x192xf32> to vector<2x64xf32>
    %328 = arith.mulf %327, %324 : vector<2x64xf32>
    %329 = arith.addf %326, %328 : vector<2x64xf32>
    %330 = vector.extract_strided_slice %322 {offsets = [0, 128], sizes = [2, 64], strides = [1, 1]} : vector<2x192xf32> to vector<2x64xf32>
    %331 = math.tanh %329 : vector<2x64xf32>
    %332 = arith.mulf %330, %331 : vector<2x64xf32>
    %333 = vector.extract_strided_slice %215 {offsets = [12, 0], sizes = [2, 256], strides = [1, 1]} : vector<16x256xf32> to vector<2x256xf32>
    %cst_47 = arith.constant dense<0.000000e+00> : vector<2x256xf32>
    %334 = tpu.matmul %332, %216, %cst_47 {dimension_numbers = #tpu.dot_dimension_numbers<[1], [0], [0], [1], [0, 0, 1, 1], [], []>} : vector<2x64xf32>, vector<64x256xf32>, vector<2x256xf32> -> vector<2x256xf32>
    %335 = arith.addf %333, %334 : vector<2x256xf32>
    %336 = vector.extract_strided_slice %335 {offsets = [0, 0], sizes = [2, 192], strides = [1, 1]} : vector<2x256xf32> to vector<2x192xf32>
    %337 = arith.negf %336 : vector<2x192xf32>
    %338 = math.exp %337 : vector<2x192xf32>
    %cst_48 = arith.constant 1.000000e+00 : f32
    %339 = vector.broadcast %cst_48 : f32 to vector<2x192xf32>
    %340 = arith.addf %339, %338 : vector<2x192xf32>
    %341 = arith.divf %339, %340 : vector<2x192xf32>
    %342 = vector.extract_strided_slice %335 {offsets = [0, 192], sizes = [2, 64], strides = [1, 1]} : vector<2x256xf32> to vector<2x64xf32>
    %343 = math.tanh %342 : vector<2x64xf32>
    %344 = vector.extract_strided_slice %341 {offsets = [0, 64], sizes = [2, 64], strides = [1, 1]} : vector<2x192xf32> to vector<2x64xf32>
    %345 = arith.mulf %344, %329 : vector<2x64xf32>
    %346 = vector.extract_strided_slice %341 {offsets = [0, 0], sizes = [2, 64], strides = [1, 1]} : vector<2x192xf32> to vector<2x64xf32>
    %347 = arith.mulf %346, %343 : vector<2x64xf32>
    %348 = arith.addf %345, %347 : vector<2x64xf32>
    %349 = vector.extract_strided_slice %341 {offsets = [0, 128], sizes = [2, 64], strides = [1, 1]} : vector<2x192xf32> to vector<2x64xf32>
    %350 = math.tanh %348 : vector<2x64xf32>
    %351 = arith.mulf %349, %350 : vector<2x64xf32>
    %352 = vector.extract_strided_slice %215 {offsets = [14, 0], sizes = [2, 256], strides = [1, 1]} : vector<16x256xf32> to vector<2x256xf32>
    %cst_49 = arith.constant dense<0.000000e+00> : vector<2x256xf32>
    %353 = tpu.matmul %351, %216, %cst_49 {dimension_numbers = #tpu.dot_dimension_numbers<[1], [0], [0], [1], [0, 0, 1, 1], [], []>} : vector<2x64xf32>, vector<64x256xf32>, vector<2x256xf32> -> vector<2x256xf32>
    %354 = arith.addf %352, %353 : vector<2x256xf32>
    %355 = vector.extract_strided_slice %354 {offsets = [0, 0], sizes = [2, 192], strides = [1, 1]} : vector<2x256xf32> to vector<2x192xf32>
    %356 = arith.negf %355 : vector<2x192xf32>
    %357 = math.exp %356 : vector<2x192xf32>
    %cst_50 = arith.constant 1.000000e+00 : f32
    %358 = vector.broadcast %cst_50 : f32 to vector<2x192xf32>
    %359 = arith.addf %358, %357 : vector<2x192xf32>
    %360 = arith.divf %358, %359 : vector<2x192xf32>
    %361 = vector.extract_strided_slice %354 {offsets = [0, 192], sizes = [2, 64], strides = [1, 1]} : vector<2x256xf32> to vector<2x64xf32>
    %362 = math.tanh %361 : vector<2x64xf32>
    %363 = vector.extract_strided_slice %360 {offsets = [0, 64], sizes = [2, 64], strides = [1, 1]} : vector<2x192xf32> to vector<2x64xf32>
    %364 = arith.mulf %363, %348 : vector<2x64xf32>
    %365 = vector.extract_strided_slice %360 {offsets = [0, 0], sizes = [2, 64], strides = [1, 1]} : vector<2x192xf32> to vector<2x64xf32>
    %366 = arith.mulf %365, %362 : vector<2x64xf32>
    %367 = arith.addf %364, %366 : vector<2x64xf32>
    %368 = vector.extract_strided_slice %360 {offsets = [0, 128], sizes = [2, 64], strides = [1, 1]} : vector<2x192xf32> to vector<2x64xf32>
    %369 = math.tanh %367 : vector<2x64xf32>
    %370 = arith.mulf %368, %369 : vector<2x64xf32>
    %371 = vector.extract_strided_slice %237 {offsets = [0, 0], sizes = [2, 32], strides = [1, 1]} : vector<2x64xf32> to vector<2x32xf32>
    %372 = vector.extract_strided_slice %370 {offsets = [0, 32], sizes = [2, 32], strides = [1, 1]} : vector<2x64xf32> to vector<2x32xf32>
    %373 = tpu.concatenate %371, %372 in 1 : vector<2x32xf32>, vector<2x32xf32> -> vector<2x64xf32>
    %374 = vector.extract_strided_slice %256 {offsets = [0, 0], sizes = [2, 32], strides = [1, 1]} : vector<2x64xf32> to vector<2x32xf32>
    %375 = vector.extract_strided_slice %351 {offsets = [0, 32], sizes = [2, 32], strides = [1, 1]} : vector<2x64xf32> to vector<2x32xf32>
    %376 = tpu.concatenate %374, %375 in 1 : vector<2x32xf32>, vector<2x32xf32> -> vector<2x64xf32>
    %377 = vector.extract_strided_slice %275 {offsets = [0, 0], sizes = [2, 32], strides = [1, 1]} : vector<2x64xf32> to vector<2x32xf32>
    %378 = vector.extract_strided_slice %332 {offsets = [0, 32], sizes = [2, 32], strides = [1, 1]} : vector<2x64xf32> to vector<2x32xf32>
    %379 = tpu.concatenate %377, %378 in 1 : vector<2x32xf32>, vector<2x32xf32> -> vector<2x64xf32>
    %380 = vector.extract_strided_slice %294 {offsets = [0, 0], sizes = [2, 32], strides = [1, 1]} : vector<2x64xf32> to vector<2x32xf32>
    %381 = vector.extract_strided_slice %313 {offsets = [0, 32], sizes = [2, 32], strides = [1, 1]} : vector<2x64xf32> to vector<2x32xf32>
    %382 = tpu.concatenate %380, %381 in 1 : vector<2x32xf32>, vector<2x32xf32> -> vector<2x64xf32>
    %383 = vector.extract_strided_slice %313 {offsets = [0, 0], sizes = [2, 32], strides = [1, 1]} : vector<2x64xf32> to vector<2x32xf32>
    %384 = vector.extract_strided_slice %294 {offsets = [0, 32], sizes = [2, 32], strides = [1, 1]} : vector<2x64xf32> to vector<2x32xf32>
    %385 = tpu.concatenate %383, %384 in 1 : vector<2x32xf32>, vector<2x32xf32> -> vector<2x64xf32>
    %386 = vector.extract_strided_slice %332 {offsets = [0, 0], sizes = [2, 32], strides = [1, 1]} : vector<2x64xf32> to vector<2x32xf32>
    %387 = vector.extract_strided_slice %275 {offsets = [0, 32], sizes = [2, 32], strides = [1, 1]} : vector<2x64xf32> to vector<2x32xf32>
    %388 = tpu.concatenate %386, %387 in 1 : vector<2x32xf32>, vector<2x32xf32> -> vector<2x64xf32>
    %389 = vector.extract_strided_slice %351 {offsets = [0, 0], sizes = [2, 32], strides = [1, 1]} : vector<2x64xf32> to vector<2x32xf32>
    %390 = vector.extract_strided_slice %256 {offsets = [0, 32], sizes = [2, 32], strides = [1, 1]} : vector<2x64xf32> to vector<2x32xf32>
    %391 = tpu.concatenate %389, %390 in 1 : vector<2x32xf32>, vector<2x32xf32> -> vector<2x64xf32>
    %392 = vector.extract_strided_slice %370 {offsets = [0, 0], sizes = [2, 32], strides = [1, 1]} : vector<2x64xf32> to vector<2x32xf32>
    %393 = vector.extract_strided_slice %237 {offsets = [0, 32], sizes = [2, 32], strides = [1, 1]} : vector<2x64xf32> to vector<2x32xf32>
    %394 = tpu.concatenate %392, %393 in 1 : vector<2x32xf32>, vector<2x32xf32> -> vector<2x64xf32>
    %395 = vector.shape_cast %373 : vector<2x64xf32> to vector<2x1x64xf32>
    %396 = vector.shape_cast %376 : vector<2x64xf32> to vector<2x1x64xf32>
    %397 = vector.shape_cast %379 : vector<2x64xf32> to vector<2x1x64xf32>
    %398 = vector.shape_cast %382 : vector<2x64xf32> to vector<2x1x64xf32>
    %399 = vector.shape_cast %385 : vector<2x64xf32> to vector<2x1x64xf32>
    %400 = vector.shape_cast %388 : vector<2x64xf32> to vector<2x1x64xf32>
    %401 = vector.shape_cast %391 : vector<2x64xf32> to vector<2x1x64xf32>
    %402 = vector.shape_cast %394 : vector<2x64xf32> to vector<2x1x64xf32>
    %403 = tpu.concatenate %395, %396, %397, %398, %399, %400, %401, %402 in 1 : vector<2x1x64xf32>, vector<2x1x64xf32>, vector<2x1x64xf32>, vector<2x1x64xf32>, vector<2x1x64xf32>, vector<2x1x64xf32>, vector<2x1x64xf32>, vector<2x1x64xf32> -> vector<2x8x64xf32>
    %404 = vector.shape_cast %403 : vector<2x8x64xf32> to vector<16x64xf32>
    %c0_51 = arith.constant 0 : index
    %c0_52 = arith.constant 0 : index
    %405 = vector.load %arg7[%c0_51, %c0_52] : memref<64x256xf32, #tpu.memory_space<vmem>>, vector<64x256xf32>
    %cst_53 = arith.constant dense<0.000000e+00> : vector<16x256xf32>
    %406 = tpu.matmul %404, %405, %cst_53 {dimension_numbers = #tpu.dot_dimension_numbers<[1], [0], [0], [1], [0, 0, 1, 1], [], []>} : vector<16x64xf32>, vector<64x256xf32>, vector<16x256xf32> -> vector<16x256xf32>
    %c0_54 = arith.constant 0 : index
    %c0_55 = arith.constant 0 : index
    %407 = vector.load %arg8[%c0_54, %c0_55] : memref<1x256xf32, #tpu.memory_space<vmem>>, vector<1x256xf32>
    %408 = vector.broadcast %407 : vector<1x256xf32> to vector<16x256xf32>
    %409 = arith.addf %406, %408 : vector<16x256xf32>
    %410 = math.tanh %409 : vector<16x256xf32>
    %411 = vector.shape_cast %410 : vector<16x256xf32> to vector<2x8x256xf32>
    %c0_56 = arith.constant 0 : index
    %c0_57 = arith.constant 0 : index
    %c0_58 = arith.constant 0 : index
    %412 = vector.load %arg9[%c0_56, %c0_57, %c0_58] : memref<2x8x256xf32, #tpu.memory_space<vmem>>, vector<2x8x256xf32>
    tpu.vector_store %arg9[%c0_56, %c0_57, %c0_58], %411 {strides = array<i32>} : memref<2x8x256xf32, #tpu.memory_space<vmem>>, vector<2x8x256xf32>,
    return
  }
}

</mosaic_0001>

<llo_original>
// kernel: deep_clustering_forward.1
$region0: #{deep_clustering_forward.1}
  #allocation0 [shape = 'u32[]', space=smem, size = 0x4, offset = 0x4, fixed_abs, tag = 'smem constant byte address 0x4 - core index']
  #allocation1 [shape = 'u32[144,128]{1,0:T(1,128)}', space=vmem, size = 0x12000, scoped, tag = 'internal scratch']
  %s0 = inlined_call_operand.hbm [shape: f32[2,8,32], index: 0, kind: input, shape index: {}]
  %s1 = inlined_call_operand.hbm [shape: f32[64,256], index: 1, kind: input, shape index: {}]
  %s2 = inlined_call_operand.vmem [shape: f32[1,256], index: 2, kind: input, shape index: {}]
  %s3 = inlined_call_operand.hbm [shape: f32[64,256], index: 3, kind: input, shape index: {}]
  %s4 = inlined_call_operand.hbm [shape: f32[128,256], index: 4, kind: input, shape index: {}]
  %s5 = inlined_call_operand.vmem [shape: f32[1,256], index: 5, kind: input, shape index: {}]
  %s6 = inlined_call_operand.hbm [shape: f32[64,256], index: 6, kind: input, shape index: {}]
  %s7 = inlined_call_operand.hbm [shape: f32[64,256], index: 7, kind: input, shape index: {}]
  %s8 = inlined_call_operand.vmem [shape: f32[1,256], index: 8, kind: input, shape index: {}]
  %s9 = inlined_call_operand.vmem [shape: f32[2,8,256], index: 9, kind: output, shape index: {}]
  %s10 = sld [smem:[#allocation0]]
  $region70: #{deep_clustering_forward.1} parent=0
    _
  %s12 = ssub.s32 1, %s10
  %s13 = scalar_select 0, %s12, %s10
  $region1: #{deep_clustering_forward.1} parent=0
    #allocation2 [shape = 'u8[8192]{0}', space=vmem, size = 0x2000, scoped, tag = 'input window, operand 0, single buffered']
    #allocation3 [shape = 's32[1]{0}', space=sflag, size = 0x4, scoped, tag = 'scoped memory for deep_clustering_forward.1']
    #allocation4 [shape = 'u8[65536]{0}', space=vmem, size = 0x10000, scoped, tag = 'input window, operand 1, single buffered']
    #allocation5 [shape = 's32[1]{0}', space=sflag, size = 0x4, scoped, tag = 'scoped memory for deep_clustering_forward.1']
    #allocation6 [shape = 'u8[65536]{0}', space=vmem, size = 0x10000, scoped, tag = 'input window, operand 3, single buffered']
    #allocation7 [shape = 'u8[131072]{0}', space=vmem, size = 0x20000, scoped, tag = 'input window, operand 4, single buffered']
    #allocation8 [shape = 's32[1]{0}', space=sflag, size = 0x4, scoped, tag = 'scoped memory for deep_clustering_forward.1']
    #allocation9 [shape = 'u8[65536]{0}', space=vmem, size = 0x10000, scoped, tag = 'input window, operand 6, single buffered']
    #allocation10 [shape = 'u8[65536]{0}', space=vmem, size = 0x10000, scoped, tag = 'input window, operand 7, single buffered']
    #allocation11 [shape = 's32[1]{0}', space=sflag, size = 0x4, scoped, tag = 'scoped memory for deep_clustering_forward.1']
    %14 = vsyncpa [#allocation3], 0
    %15 = vsyncpa [#allocation5], 0
    %16 = vsyncpa [#allocation8], 0
    %17 = vsyncpa [#allocation11], 0
    // Predicated region
    $region2: #{deep_clustering_forward.1} parent=1 // pred_check
      _
    $region3: #{deep_clustering_forward.1} parent=1 // pred_check_branch
      %19 = sbr.rel (0) target = $region5
    $region4: #{deep_clustering_forward.1} parent=1 // pred_region
      %s21 = ssub.s32 256, 256
      %22 = vsyncadd [#allocation3], %s21
      %s23 = sshll.u32 [#allocation2], 4
      %s24 = int_to_ptr.vmem [resolvable:$true] %s23
      %29 = dma.hbm_to_vmem [thread:$0]  %s0, 256, %s24, [#allocation3], 128, 128, 8
    $region5: #{deep_clustering_forward.1} parent=1 // pred_fallthru
      _
    // Predicated region
    $region6: #{deep_clustering_forward.1} parent=1 // pred_check
      _
    $region7: #{deep_clustering_forward.1} parent=1 // pred_check_branch
      %31 = sbr.rel (0) target = $region9
    $region8: #{deep_clustering_forward.1} parent=1 // pred_region
      %s33 = ssub.s32 2048, 2048
      %34 = vsyncadd [#allocation5], %s33
      %s35 = sshll.u32 [#allocation4], 4
      %s36 = int_to_ptr.vmem [resolvable:$true] %s35
      %41 = dma.hbm_to_vmem [thread:$0]  %s1, 2048, %s36, [#allocation5], 256, 256, 16
    $region9: #{deep_clustering_forward.1} parent=1 // pred_fallthru
      _
    // Predicated region
    $region10: #{deep_clustering_forward.1} parent=1 // pred_check
      _
    $region11: #{deep_clustering_forward.1} parent=1 // pred_check_branch
      %43 = sbr.rel (0) target = $region13
    $region12: #{deep_clustering_forward.1} parent=1 // pred_region
      _
    $region13: #{deep_clustering_forward.1} parent=1 // pred_fallthru
      _
    // Predicated region
    $region14: #{deep_clustering_forward.1} parent=1 // pred_check
      _
    $region15: #{deep_clustering_forward.1} parent=1 // pred_check_branch
      %45 = sbr.rel (0) target = $region17
    $region16: #{deep_clustering_forward.1} parent=1 // pred_region
      %s47 = ssub.s32 2048, 2048
      %48 = vsyncadd [#allocation5], %s47
      %s49 = sshll.u32 [#allocation6], 4
      %s50 = int_to_ptr.vmem [resolvable:$true] %s49
      %55 = dma.hbm_to_vmem [thread:$0]  %s3, 2048, %s50, [#allocation5], 256, 256, 16
    $region17: #{deep_clustering_forward.1} parent=1 // pred_fallthru
      _
    // Predicated region
    $region18: #{deep_clustering_forward.1} parent=1 // pred_check
      _
    $region19: #{deep_clustering_forward.1} parent=1 // pred_check_branch
      %57 = sbr.rel (0) target = $region21
    $region20: #{deep_clustering_forward.1} parent=1 // pred_region
      %s59 = ssub.s32 4096, 4096
      %60 = vsyncadd [#allocation8], %s59
      %s61 = sshll.u32 [#allocation7], 4
      %s62 = int_to_ptr.vmem [resolvable:$true] %s61
      %67 = dma.hbm_to_vmem [thread:$0]  %s4, 4096, %s62, [#allocation8], 256, 256, 16
    $region21: #{deep_clustering_forward.1} parent=1 // pred_fallthru
      _
    // Predicated region
    $region22: #{deep_clustering_forward.1} parent=1 // pred_check
      _
    $region23: #{deep_clustering_forward.1} parent=1 // pred_check_branch
      %69 = sbr.rel (0) target = $region25
    $region24: #{deep_clustering_forward.1} parent=1 // pred_region
      _
    $region25: #{deep_clustering_forward.1} parent=1 // pred_fallthru
      _
    // Predicated region
    $region26: #{deep_clustering_forward.1} parent=1 // pred_check
      _
    $region27: #{deep_clustering_forward.1} parent=1 // pred_check_branch
      %71 = sbr.rel (0) target = $region29
    $region28: #{deep_clustering_forward.1} parent=1 // pred_region
      %s73 = ssub.s32 2048, 2048
      %74 = vsyncadd [#allocation8], %s73
      %s75 = sshll.u32 [#allocation9], 4
      %s76 = int_to_ptr.vmem [resolvable:$true] %s75
      %81 = dma.hbm_to_vmem [thread:$0]  %s6, 2048, %s76, [#allocation8], 256, 256, 16
    $region29: #{deep_clustering_forward.1} parent=1 // pred_fallthru
      _
    // Predicated region
    $region30: #{deep_clustering_forward.1} parent=1 // pred_check
      _
    $region31: #{deep_clustering_forward.1} parent=1 // pred_check_branch
      %83 = sbr.rel (0) target = $region33
    $region32: #{deep_clustering_forward.1} parent=1 // pred_region
      %s85 = ssub.s32 2048, 2048
      %86 = vsyncadd [#allocation11], %s85
      %s87 = sshll.u32 [#allocation10], 4
      %s88 = int_to_ptr.vmem [resolvable:$true] %s87
      %93 = dma.hbm_to_vmem [thread:$0]  %s7, 2048, %s88, [#allocation11], 256, 256, 16
    $region33: #{deep_clustering_forward.1} parent=1 // pred_fallthru
      _
    // Predicated region
    $region34: #{deep_clustering_forward.1} parent=1 // pred_check
      _
    $region35: #{deep_clustering_forward.1} parent=1 // pred_check_branch
      %95 = sbr.rel (0) target = $region37
    $region36: #{deep_clustering_forward.1} parent=1 // pred_region
      _
    $region37: #{deep_clustering_forward.1} parent=1 // pred_fallthru
      _
    // Predicated region
    $region38: #{deep_clustering_forward.1} parent=1 // pred_check
      _
    $region39: #{deep_clustering_forward.1} parent=1 // pred_check_branch
      %97 = sbr.rel (0) target = $region41
    $region40: #{deep_clustering_forward.1} parent=1 // pred_region
      %98 = dma.done [#allocation3], 256
    $region41: #{deep_clustering_forward.1} parent=1 // pred_fallthru
      _
    // Predicated region
    $region42: #{deep_clustering_forward.1} parent=1 // pred_check
      _
    $region43: #{deep_clustering_forward.1} parent=1 // pred_check_branch
      %100 = sbr.rel (0) target = $region45
    $region44: #{deep_clustering_forward.1} parent=1 // pred_region
      %101 = dma.done [#allocation5], 2048
    $region45: #{deep_clustering_forward.1} parent=1 // pred_fallthru
      _
    // Predicated region
    $region46: #{deep_clustering_forward.1} parent=1 // pred_check
      _
    $region47: #{deep_clustering_forward.1} parent=1 // pred_check_branch
      %103 = sbr.rel (0) target = $region49
    $region48: #{deep_clustering_forward.1} parent=1 // pred_region
      %104 = dma.done [#allocation5], 2048
    $region49: #{deep_clustering_forward.1} parent=1 // pred_fallthru
      _
    // Predicated region
    $region50: #{deep_clustering_forward.1} parent=1 // pred_check
      _
    $region51: #{deep_clustering_forward.1} parent=1 // pred_check_branch
      %106 = sbr.rel (0) target = $region53
    $region52: #{deep_clustering_forward.1} parent=1 // pred_region
      %107 = dma.done [#allocation8], 4096
    $region53: #{deep_clustering_forward.1} parent=1 // pred_fallthru
      _
    // Predicated region
    $region54: #{deep_clustering_forward.1} parent=1 // pred_check
      _
    $region55: #{deep_clustering_forward.1} parent=1 // pred_check_branch
      %109 = sbr.rel (0) target = $region57
    $region56: #{deep_clustering_forward.1} parent=1 // pred_region
      %110 = dma.done [#allocation8], 2048
    $region57: #{deep_clustering_forward.1} parent=1 // pred_fallthru
      _
    // Predicated region
    $region58: #{deep_clustering_forward.1} parent=1 // pred_check
      _
    $region59: #{deep_clustering_forward.1} parent=1 // pred_check_branch
      %112 = sbr.rel (0) target = $region61
    $region60: #{deep_clustering_forward.1} parent=1 // pred_region
      %113 = dma.done [#allocation11], 2048
    $region61: #{deep_clustering_forward.1} parent=1 // pred_fallthru
      _
    %v114 = vld [vmem:[#allocation2] sm:$0xff]
    %v115 = vld [vmem:[#allocation2 + $0x8] sm:$0xff]
    %v118 = vrot.slane %v115, 7
    %vm119 = vcmask 1041409
    %v120 = vsel %vm119, %v118, %v114
    %v122 = vrot.slane %v114, 7
    %v123 = vrot.slane %v115, 6
    %v124 = vsel %vm119, %v123, %v122
    %125 = vrot.lane.b32.xlu0 %v124, 32
    %v126 = vpop.permute.xlu0 %125
    %vm128 = vcmask 261120
    %v129 = vsel %vm128, %v120, %v126
    %vm130 = vcmask 1042434
    %v131 = vsel %vm130, %v118, %v114
    %v133 = vrot.slane %v114, 5
    %v134 = vrot.slane %v115, 4
    %v135 = vsel %vm130, %v134, %v133
    %136 = vrot.lane.b32.xlu0 %v135, 32
    %v137 = vpop.permute.xlu0 %136
    %v139 = vsel %vm128, %v131, %v137
    %vm140 = vcmask 1043459
    %v141 = vsel %vm140, %v118, %v114
    %v143 = vrot.slane %v114, 3
    %v144 = vrot.slane %v115, 2
    %v145 = vsel %vm140, %v144, %v143
    %146 = vrot.lane.b32.xlu0 %v145, 32
    %v147 = vpop.permute.xlu0 %146
    %v149 = vsel %vm128, %v141, %v147
    %vm150 = vcmask 1044484
    %v151 = vsel %vm150, %v118, %v114
    %v153 = vrot.slane %v114, 1
    %v154 = vsel %vm150, %v115, %v153
    %155 = vrot.lane.b32.xlu0 %v154, 32
    %v156 = vpop.permute.xlu0 %155
    %v158 = vsel %vm128, %v151, %v156
    %vm159 = vcmask 1045509
    %v160 = vsel %vm159, %v118, %v114
    %v162 = vsel %vm159, %v123, %v122
    %163 = vrot.lane.b32.xlu0 %v162, 32
    %v164 = vpop.permute.xlu0 %163
    %v166 = vsel %vm128, %v160, %v164
    %vm167 = vcmask 1046534
    %v168 = vsel %vm167, %v118, %v114
    %v170 = vsel %vm167, %v134, %v133
    %171 = vrot.lane.b32.xlu0 %v170, 32
    %v172 = vpop.permute.xlu0 %171
    %v174 = vsel %vm128, %v168, %v172
    %vm175 = vcmask 1047559
    %v176 = vsel %vm175, %v118, %v114
    %v178 = vsel %vm175, %v144, %v143
    %179 = vrot.lane.b32.xlu0 %v178, 32
    %v180 = vpop.permute.xlu0 %179
    %v182 = vsel %vm128, %v176, %v180
    %185 = vrot.lane.b32.xlu0 %v153, 32
    %v186 = vpop.permute.xlu0 %185
    %187 = vrot.lane.b32.xlu0 %v115, 32
    %v188 = vpop.permute.xlu0 %187
    %v191 = vsel %vm128, %v114, %v186
    %v192 = vsel %vm128, %v118, %v188
    %v194 = vrot.slane %v139, 7
    %v197 = vrot.slane %v149, 6
    %v200 = vrot.slane %v158, 5
    %v203 = vrot.slane %v166, 4
    %v206 = vrot.slane %v174, 3
    %v209 = vrot.slane %v182, 2
    %vm213 = vcmask 1046528
    %v214 = vrot.slane %v191, 1
    %v215 = vrot.slane %v192, 1
    %v216 = vsel %vm213, %v214, %v215
    %vm218 = vcmask 1041408
    %v219 = vsel %vm218, %v129, %v194
    %vm220 = vcmask 1043456
    %v221 = vsel %vm220, %v219, %v197
    %vm222 = vcmask 1045504
    %v223 = vsel %vm222, %v221, %v200
    %v224 = vsel %vm218, %v203, %v206
    %v225 = vsel %vm220, %v224, %v209
    %v226 = vsel %vm222, %v225, %v216
    %v227 = vld [vmem:[#allocation4] sm:$0xff]
    %v228 = vld [vmem:[#allocation4 + $0x8] sm:$0xff]
    %v229 = vld [vmem:[#allocation4 + $0x10] sm:$0xff]
    %v230 = vld [vmem:[#allocation4 + $0x18] sm:$0xff]
    %v231 = vld [vmem:[#allocation4 + $0x20] sm:$0xff]
    %v232 = vld [vmem:[#allocation4 + $0x28] sm:$0xff]
    %v233 = vld [vmem:[#allocation4 + $0x30] sm:$0xff]
    %v234 = vld [vmem:[#allocation4 + $0x38] sm:$0xff]
    %v235 = vld [vmem:[#allocation4 + $0x40] sm:$0xff]
    %v236 = vld [vmem:[#allocation4 + $0x48] sm:$0xff]
    %v237 = vld [vmem:[#allocation4 + $0x50] sm:$0xff]
    %v238 = vld [vmem:[#allocation4 + $0x58] sm:$0xff]
    %v239 = vld [vmem:[#allocation4 + $0x60] sm:$0xff]
    %v240 = vld [vmem:[#allocation4 + $0x68] sm:$0xff]
    %v241 = vld [vmem:[#allocation4 + $0x70] sm:$0xff]
    %v242 = vld [vmem:[#allocation4 + $0x78] sm:$0xff]
    %v243 = vld [vmem:[%s2] sm:$0x3]
    %v245 = vlaneseq
    %v246 = vshrl.u32 %v245, 7
    %v247 = vsub.s32 0, %v246
    %v248 = vrot.slane %v243, %v247
    %v249 = vlaneseq
    %v250 = vshrl.u32 %v249, 7
    %v251 = vsub.s32 1, %v250
    %v252 = vrot.slane %v243, %v251
    %vm255 = vcmask 523264
    %v257 = vsel %vm255, %v223, 0
    %v260 = vsel %vm255, %v226, 0
    %262 = vmatprep.subr.mxu0 %v228
    %263 = vmatpush1.msra.mxu0 %v227
    %264 = vmatprep.subr.mxu0 %v230
    %265 = vmatpush1.msra.mxu0 %v229
    %266 = vmatprep.subr.mxu0 %v232
    %267 = vmatpush1.msra.mxu0 %v231
    %268 = vmatprep.subr.mxu0 %v234
    %269 = vmatpush1.msra.mxu0 %v233
    %270 = vmatprep.subr.mxu0 %v236
    %271 = vmatpush1.msra.mxu0 %v235
    %272 = vmatprep.subr.mxu0 %v238
    %273 = vmatpush1.msra.mxu0 %v237
    %274 = vmatprep.subr.mxu0 %v240
    %275 = vmatpush1.msra.mxu0 %v239
    %276 = vmatprep.subr.mxu0 %v242
    %277 = vmatpush1.msra.mxu0 %v241
    %278 = vmatprep.subr.mxu0 0.0
    %279 = vmatpush1.msra.mxu0 0.0
    %280 = vmatprep.subr.mxu0 0.0
    %281 = vmatpush1.msra.mxu0 0.0
    %282 = vmatprep.subr.mxu0 0.0
    %283 = vmatpush1.msra.mxu0 0.0
    %284 = vmatprep.subr.mxu0 0.0
    %285 = vmatpush1.msra.mxu0 0.0
    %286 = vmatprep.subr.mxu0 0.0
    %287 = vmatpush1.msra.mxu0 0.0
    %288 = vmatprep.subr.mxu0 0.0
    %289 = vmatpush1.msra.mxu0 0.0
    %290 = vmatprep.subr.mxu0 0.0
    %291 = vmatpush1.msra.mxu0 0.0
    %292 = vmatprep.subr.mxu0 0.0
    %293 = vmatpush1.msra.mxu0 0.0
    %294 = vmatprep.subr.mxu0 0.0
    %295 = vmatpush1.msra.mxu0 0.0
    %296 = vmatprep.subr.mxu0 0.0
    %297 = vmatpush1.msra.mxu0 0.0
    %298 = vmatprep.subr.mxu0 0.0
    %299 = vmatpush1.msra.mxu0 0.0
    %300 = vmatprep.subr.mxu0 0.0
    %301 = vmatpush1.msra.mxu0 0.0
    %302 = vmatprep.subr.mxu0 0.0
    %303 = vmatpush1.msra.mxu0 0.0
    %304 = vmatprep.subr.mxu0 0.0
    %305 = vmatpush1.msra.mxu0 0.0
    %306 = vmatprep.subr.mxu0 0.0
    %307 = vmatpush1.msra.mxu0 0.0
    %308 = vmatprep.subr.mxu0 0.0
    %309 = vmatpush1.msra.mxu0 0.0
    %310 = vmatprep.subr.mxu0 0.0
    %311 = vmatpush1.msra.mxu0 0.0
    %312 = vmatprep.subr.mxu0 0.0
    %313 = vmatpush1.msra.mxu0 0.0
    %314 = vmatprep.subr.mxu0 0.0
    %315 = vmatpush1.msra.mxu0 0.0
    %316 = vmatprep.subr.mxu0 0.0
    %317 = vmatpush1.msra.mxu0 0.0
    %318 = vmatprep.subr.mxu0 0.0
    %319 = vmatpush1.msra.mxu0 0.0
    %320 = vmatprep.subr.mxu0 0.0
    %321 = vmatpush1.msra.mxu0 0.0
    %322 = vmatprep.subr.mxu0 0.0
    %323 = vmatpush1.msra.mxu0 0.0
    %324 = vmatprep.subr.mxu0 0.0
    %325 = vmatpush1.msra.mxu0 0.0
    %326 = vmatprep.mubr.f32.mxu0 0.0
    %327 = vmatmul.mubr.f32.gmra.mrb[0].mxu0 %v257
    %v328 = vpop.f32.mrb[0].mxu0
    %v329 = vadd.f32 %v248, %v328
    %v330 = vpop.f32.mrb[0].mxu0
    %v331 = vadd.f32 %v252, %v330
    %332 = vmatprep.mubr.f32.mxu0 0.0
    %333 = vmatmul.mubr.f32.gmra.mrb[0].mxu0 %v260
    %v334 = vpop.f32.mrb[0].mxu0
    %v335 = vadd.f32 %v248, %v334
    %v336 = vpop.f32.mrb[0].mxu0
    %v337 = vadd.f32 %v252, %v336
    %338 = vdwg.mxu0
    %v339 = vld [vmem:[#allocation6] sm:$0xff]
    %v340 = vld [vmem:[#allocation6 + $0x8] sm:$0xff]
    %v341 = vld [vmem:[#allocation6 + $0x10] sm:$0xff]
    %v342 = vld [vmem:[#allocation6 + $0x18] sm:$0xff]
    %v343 = vld [vmem:[#allocation6 + $0x20] sm:$0xff]
    %v344 = vld [vmem:[#allocation6 + $0x28] sm:$0xff]
    %v345 = vld [vmem:[#allocation6 + $0x30] sm:$0xff]
    %v346 = vld [vmem:[#allocation6 + $0x38] sm:$0xff]
    %v347 = vld [vmem:[#allocation6 + $0x40] sm:$0xff]
    %v348 = vld [vmem:[#allocation6 + $0x48] sm:$0xff]
    %v349 = vld [vmem:[#allocation6 + $0x50] sm:$0xff]
    %v350 = vld [vmem:[#allocation6 + $0x58] sm:$0xff]
    %v351 = vld [vmem:[#allocation6 + $0x60] sm:$0xff]
    %v352 = vld [vmem:[#allocation6 + $0x68] sm:$0xff]
    %v353 = vld [vmem:[#allocation6 + $0x70] sm:$0xff]
    %v354 = vld [vmem:[#allocation6 + $0x78] sm:$0xff]
    %v356 = vsel %vm255, 0.0, 0
    %358 = vmatprep.subr.mxu0 %v340
    %359 = vmatpush1.msra.mxu0 %v339
    %360 = vmatprep.subr.mxu0 %v342
    %361 = vmatpush1.msra.mxu0 %v341
    %362 = vmatprep.subr.mxu0 %v344
    %363 = vmatpush1.msra.mxu0 %v343
    %364 = vmatprep.subr.mxu0 %v346
    %365 = vmatpush1.msra.mxu0 %v345
    %366 = vmatprep.subr.mxu0 %v348
    %367 = vmatpush1.msra.mxu0 %v347
    %368 = vmatprep.subr.mxu0 %v350
    %369 = vmatpush1.msra.mxu0 %v349
    %370 = vmatprep.subr.mxu0 %v352
    %371 = vmatpush1.msra.mxu0 %v351
    %372 = vmatprep.subr.mxu0 %v354
    %373 = vmatpush1.msra.mxu0 %v353
    %374 = vmatprep.subr.mxu0 0.0
    %375 = vmatpush1.msra.mxu0 0.0
    %376 = vmatprep.subr.mxu0 0.0
    %377 = vmatpush1.msra.mxu0 0.0
    %378 = vmatprep.subr.mxu0 0.0
    %379 = vmatpush1.msra.mxu0 0.0
    %380 = vmatprep.subr.mxu0 0.0
    %381 = vmatpush1.msra.mxu0 0.0
    %382 = vmatprep.subr.mxu0 0.0
    %383 = vmatpush1.msra.mxu0 0.0
    %384 = vmatprep.subr.mxu0 0.0
    %385 = vmatpush1.msra.mxu0 0.0
    %386 = vmatprep.subr.mxu0 0.0
    %387 = vmatpush1.msra.mxu0 0.0
    %388 = vmatprep.subr.mxu0 0.0
    %389 = vmatpush1.msra.mxu0 0.0
    %390 = vmatprep.subr.mxu0 0.0
    %391 = vmatpush1.msra.mxu0 0.0
    %392 = vmatprep.subr.mxu0 0.0
    %393 = vmatpush1.msra.mxu0 0.0
    %394 = vmatprep.subr.mxu0 0.0
    %395 = vmatpush1.msra.mxu0 0.0
    %396 = vmatprep.subr.mxu0 0.0
    %397 = vmatpush1.msra.mxu0 0.0
    %398 = vmatprep.subr.mxu0 0.0
    %399 = vmatpush1.msra.mxu0 0.0
    %400 = vmatprep.subr.mxu0 0.0
    %401 = vmatpush1.msra.mxu0 0.0
    %402 = vmatprep.subr.mxu0 0.0
    %403 = vmatpush1.msra.mxu0 0.0
    %404 = vmatprep.subr.mxu0 0.0
    %405 = vmatpush1.msra.mxu0 0.0
    %406 = vmatprep.subr.mxu0 0.0
    %407 = vmatpush1.msra.mxu0 0.0
    %408 = vmatprep.subr.mxu0 0.0
    %409 = vmatpush1.msra.mxu0 0.0
    %410 = vmatprep.subr.mxu0 0.0
    %411 = vmatpush1.msra.mxu0 0.0
    %412 = vmatprep.subr.mxu0 0.0
    %413 = vmatpush1.msra.mxu0 0.0
    %414 = vmatprep.subr.mxu0 0.0
    %415 = vmatpush1.msra.mxu0 0.0
    %416 = vmatprep.subr.mxu0 0.0
    %417 = vmatpush1.msra.mxu0 0.0
    %418 = vmatprep.subr.mxu0 0.0
    %419 = vmatpush1.msra.mxu0 0.0
    %420 = vmatprep.subr.mxu0 0.0
    %421 = vmatpush1.msra.mxu0 0.0
    %422 = vmatprep.mubr.f32.mxu0 0.0
    %423 = vmatmul.mubr.f32.gmra.mrb[0].mxu0 %v356
    %v424 = vpop.f32.mrb[0].mxu0
    %v425 = vadd.f32 0.0, %v424
    %v426 = vpop.f32.mrb[0].mxu0
    %v427 = vadd.f32 0.0, %v426
    %428 = vdwg.mxu0
    %v429 = vadd.f32 %v329, %v425
    %v430 = vadd.f32 %v331, %v427
    %v431 = vxor.u32 %v429, 2147483648
    %v432 = vxor.u32 %v430, 2147483648
    %v433 = vmul.f32 %v431, 1.442695
    %v434 = vpow.pop %v433
    %v435 = vmul.f32 %v432, 1.442695
    %v436 = vpow.pop %v435
    %v437 = vadd.f32 %v434, 1.0
    %v438 = vadd.f32 %v436, 1.0
    %v439 = vrcp.pop %v437
    %v440 = vmul.f32 1.0, %v439
    %v441 = vrcp.pop %v438
    %v442 = vmul.f32 1.0, %v441
    %v443 = vtanh.pop %v430
    %v444 = vmul.f32 %v440, 0.0
    %446 = vrot.lane.b32.xlu0 %v443, 64
    %v447 = vpop.permute.xlu0 %446
    %v449 = vmul.f32 %v440, %v447
    %451 = vrot.lane.b32.xlu0 %v449, 64
    %v452 = vpop.permute.xlu0 %451
    %v454 = vadd.f32 %v444, %v452
    %v455 = vtanh.pop %v454
    %457 = vrot.lane.b32.xlu0 %v455, 64
    %v458 = vpop.permute.xlu0 %457
    %v460 = vmul.f32 %v442, %v458
    %v462 = vsel %vm255, %v460, 0
    %464 = vmatprep.subr.mxu0 %v340
    %465 = vmatpush1.msra.mxu0 %v339
    %466 = vmatprep.subr.mxu0 %v342
    %467 = vmatpush1.msra.mxu0 %v341
    %468 = vmatprep.subr.mxu0 %v344
    %469 = vmatpush1.msra.mxu0 %v343
    %470 = vmatprep.subr.mxu0 %v346
    %471 = vmatpush1.msra.mxu0 %v345
    %472 = vmatprep.subr.mxu0 %v348
    %473 = vmatpush1.msra.mxu0 %v347
    %474 = vmatprep.subr.mxu0 %v350
    %475 = vmatpush1.msra.mxu0 %v349
    %476 = vmatprep.subr.mxu0 %v352
    %477 = vmatpush1.msra.mxu0 %v351
    %478 = vmatprep.subr.mxu0 %v354
    %479 = vmatpush1.msra.mxu0 %v353
    %480 = vmatprep.subr.mxu0 0.0
    %481 = vmatpush1.msra.mxu0 0.0
    %482 = vmatprep.subr.mxu0 0.0
    %483 = vmatpush1.msra.mxu0 0.0
    %484 = vmatprep.subr.mxu0 0.0
    %485 = vmatpush1.msra.mxu0 0.0
    %486 = vmatprep.subr.mxu0 0.0
    %487 = vmatpush1.msra.mxu0 0.0
    %488 = vmatprep.subr.mxu0 0.0
    %489 = vmatpush1.msra.mxu0 0.0
    %490 = vmatprep.subr.mxu0 0.0
    %491 = vmatpush1.msra.mxu0 0.0
    %492 = vmatprep.subr.mxu0 0.0
    %493 = vmatpush1.msra.mxu0 0.0
    %494 = vmatprep.subr.mxu0 0.0
    %495 = vmatpush1.msra.mxu0 0.0
    %496 = vmatprep.subr.mxu0 0.0
    %497 = vmatpush1.msra.mxu0 0.0
    %498 = vmatprep.subr.mxu0 0.0
    %499 = vmatpush1.msra.mxu0 0.0
    %500 = vmatprep.subr.mxu0 0.0
    %501 = vmatpush1.msra.mxu0 0.0
    %502 = vmatprep.subr.mxu0 0.0
    %503 = vmatpush1.msra.mxu0 0.0
    %504 = vmatprep.subr.mxu0 0.0
    %505 = vmatpush1.msra.mxu0 0.0
    %506 = vmatprep.subr.mxu0 0.0
    %507 = vmatpush1.msra.mxu0 0.0
    %508 = vmatprep.subr.mxu0 0.0
    %509 = vmatpush1.msra.mxu0 0.0
    %510 = vmatprep.subr.mxu0 0.0
    %511 = vmatpush1.msra.mxu0 0.0
    %512 = vmatprep.subr.mxu0 0.0
    %513 = vmatpush1.msra.mxu0 0.0
    %514 = vmatprep.subr.mxu0 0.0
    %515 = vmatpush1.msra.mxu0 0.0
    %516 = vmatprep.subr.mxu0 0.0
    %517 = vmatpush1.msra.mxu0 0.0
    %518 = vmatprep.subr.mxu0 0.0
    %519 = vmatpush1.msra.mxu0 0.0
    %520 = vmatprep.subr.mxu0 0.0
    %521 = vmatpush1.msra.mxu0 0.0
    %522 = vmatprep.subr.mxu0 0.0
    %523 = vmatpush1.msra.mxu0 0.0
    %524 = vmatprep.subr.mxu0 0.0
    %525 = vmatpush1.msra.mxu0 0.0
    %526 = vmatprep.subr.mxu0 0.0
    %527 = vmatpush1.msra.mxu0 0.0
    %528 = vmatprep.mubr.f32.mxu0 0.0
    %529 = vmatmul.mubr.f32.gmra.mrb[0].mxu0 %v462
    %v530 = vpop.f32.mrb[0].mxu0
    %v531 = vadd.f32 0.0, %v530
    %v532 = vpop.f32.mrb[0].mxu0
    %v533 = vadd.f32 0.0, %v532
    %534 = vdwg.mxu0
    %v537 = vrot.slane %v531, 6
    %v538 = vrot.slane %v533, 6
    %v541 = vadd.f32 %v329, %v537
    %v542 = vadd.f32 %v331, %v538
    %v543 = vxor.u32 %v541, 2147483648
    %v544 = vxor.u32 %v542, 2147483648
    %v545 = vmul.f32 %v543, 1.442695
    %v546 = vpow.pop %v545
    %v547 = vmul.f32 %v544, 1.442695
    %v548 = vpow.pop %v547
    %v549 = vadd.f32 %v546, 1.0
    %v550 = vadd.f32 %v548, 1.0
    %v551 = vrcp.pop %v549
    %v552 = vmul.f32 1.0, %v551
    %v553 = vrcp.pop %v550
    %v554 = vmul.f32 1.0, %v553
    %v555 = vtanh.pop %v542
    %v557 = vrot.slane %v454, 6
    %v559 = vmul.f32 %v552, %v557
    %561 = vrot.lane.b32.xlu0 %v555, 64
    %v562 = vpop.permute.xlu0 %561
    %v564 = vmul.f32 %v552, %v562
    %566 = vrot.lane.b32.xlu0 %v564, 64
    %v567 = vpop.permute.xlu0 %566
    %v569 = vadd.f32 %v559, %v567
    %v570 = vtanh.pop %v569
    %572 = vrot.lane.b32.xlu0 %v570, 64
    %v573 = vpop.permute.xlu0 %572
    %v575 = vmul.f32 %v554, %v573
    %v577 = vrot.slane %v575, 2
    %v578 = vsel %vm255, %v577, 0
    %580 = vmatprep.subr.mxu0 %v340
    %581 = vmatpush1.msra.mxu0 %v339
    %582 = vmatprep.subr.mxu0 %v342
    %583 = vmatpush1.msra.mxu0 %v341
    %584 = vmatprep.subr.mxu0 %v344
    %585 = vmatpush1.msra.mxu0 %v343
    %586 = vmatprep.subr.mxu0 %v346
    %587 = vmatpush1.msra.mxu0 %v345
    %588 = vmatprep.subr.mxu0 %v348
    %589 = vmatpush1.msra.mxu0 %v347
    %590 = vmatprep.subr.mxu0 %v350
    %591 = vmatpush1.msra.mxu0 %v349
    %592 = vmatprep.subr.mxu0 %v352
    %593 = vmatpush1.msra.mxu0 %v351
    %594 = vmatprep.subr.mxu0 %v354
    %595 = vmatpush1.msra.mxu0 %v353
    %596 = vmatprep.subr.mxu0 0.0
    %597 = vmatpush1.msra.mxu0 0.0
    %598 = vmatprep.subr.mxu0 0.0
    %599 = vmatpush1.msra.mxu0 0.0
    %600 = vmatprep.subr.mxu0 0.0
    %601 = vmatpush1.msra.mxu0 0.0
    %602 = vmatprep.subr.mxu0 0.0
    %603 = vmatpush1.msra.mxu0 0.0
    %604 = vmatprep.subr.mxu0 0.0
    %605 = vmatpush1.msra.mxu0 0.0
    %606 = vmatprep.subr.mxu0 0.0
    %607 = vmatpush1.msra.mxu0 0.0
    %608 = vmatprep.subr.mxu0 0.0
    %609 = vmatpush1.msra.mxu0 0.0
    %610 = vmatprep.subr.mxu0 0.0
    %611 = vmatpush1.msra.mxu0 0.0
    %612 = vmatprep.subr.mxu0 0.0
    %613 = vmatpush1.msra.mxu0 0.0
    %614 = vmatprep.subr.mxu0 0.0
    %615 = vmatpush1.msra.mxu0 0.0
    %616 = vmatprep.subr.mxu0 0.0
    %617 = vmatpush1.msra.mxu0 0.0
    %618 = vmatprep.subr.mxu0 0.0
    %619 = vmatpush1.msra.mxu0 0.0
    %620 = vmatprep.subr.mxu0 0.0
    %621 = vmatpush1.msra.mxu0 0.0
    %622 = vmatprep.subr.mxu0 0.0
    %623 = vmatpush1.msra.mxu0 0.0
    %624 = vmatprep.subr.mxu0 0.0
    %625 = vmatpush1.msra.mxu0 0.0
    %626 = vmatprep.subr.mxu0 0.0
    %627 = vmatpush1.msra.mxu0 0.0
    %628 = vmatprep.subr.mxu0 0.0
    %629 = vmatpush1.msra.mxu0 0.0
    %630 = vmatprep.subr.mxu0 0.0
    %631 = vmatpush1.msra.mxu0 0.0
    %632 = vmatprep.subr.mxu0 0.0
    %633 = vmatpush1.msra.mxu0 0.0
    %634 = vmatprep.subr.mxu0 0.0
    %635 = vmatpush1.msra.mxu0 0.0
    %636 = vmatprep.subr.mxu0 0.0
    %637 = vmatpush1.msra.mxu0 0.0
    %638 = vmatprep.subr.mxu0 0.0
    %639 = vmatpush1.msra.mxu0 0.0
    %640 = vmatprep.subr.mxu0 0.0
    %641 = vmatpush1.msra.mxu0 0.0
    %642 = vmatprep.subr.mxu0 0.0
    %643 = vmatpush1.msra.mxu0 0.0
    %644 = vmatprep.mubr.f32.mxu0 0.0
    %645 = vmatmul.mubr.f32.gmra.mrb[0].mxu0 %v578
    %v646 = vpop.f32.mrb[0].mxu0
    %v647 = vadd.f32 0.0, %v646
    %v648 = vpop.f32.mrb[0].mxu0
    %v649 = vadd.f32 0.0, %v648
    %650 = vdwg.mxu0
    %v653 = vrot.slane %v647, 4
    %v654 = vrot.slane %v649, 4
    %v657 = vadd.f32 %v329, %v653
    %v658 = vadd.f32 %v331, %v654
    %v659 = vxor.u32 %v657, 2147483648
    %v660 = vxor.u32 %v658, 2147483648
    %v661 = vmul.f32 %v659, 1.442695
    %v662 = vpow.pop %v661
    %v663 = vmul.f32 %v660, 1.442695
    %v664 = vpow.pop %v663
    %v665 = vadd.f32 %v662, 1.0
    %v666 = vadd.f32 %v664, 1.0
    %v667 = vrcp.pop %v665
    %v668 = vmul.f32 1.0, %v667
    %v669 = vrcp.pop %v666
    %v670 = vmul.f32 1.0, %v669
    %v671 = vtanh.pop %v658
    %v673 = vrot.slane %v569, 6
    %v675 = vmul.f32 %v668, %v673
    %677 = vrot.lane.b32.xlu0 %v671, 64
    %v678 = vpop.permute.xlu0 %677
    %v680 = vmul.f32 %v668, %v678
    %682 = vrot.lane.b32.xlu0 %v680, 64
    %v683 = vpop.permute.xlu0 %682
    %v685 = vadd.f32 %v675, %v683
    %v686 = vtanh.pop %v685
    %688 = vrot.lane.b32.xlu0 %v686, 64
    %v689 = vpop.permute.xlu0 %688
    %v691 = vmul.f32 %v670, %v689
    %v693 = vrot.slane %v691, 4
    %v694 = vsel %vm255, %v693, 0
    %696 = vmatprep.subr.mxu0 %v340
    %697 = vmatpush1.msra.mxu0 %v339
    %698 = vmatprep.subr.mxu0 %v342
    %699 = vmatpush1.msra.mxu0 %v341
    %700 = vmatprep.subr.mxu0 %v344
    %701 = vmatpush1.msra.mxu0 %v343
    %702 = vmatprep.subr.mxu0 %v346
    %703 = vmatpush1.msra.mxu0 %v345
    %704 = vmatprep.subr.mxu0 %v348
    %705 = vmatpush1.msra.mxu0 %v347
    %706 = vmatprep.subr.mxu0 %v350
    %707 = vmatpush1.msra.mxu0 %v349
    %708 = vmatprep.subr.mxu0 %v352
    %709 = vmatpush1.msra.mxu0 %v351
    %710 = vmatprep.subr.mxu0 %v354
    %711 = vmatpush1.msra.mxu0 %v353
    %712 = vmatprep.subr.mxu0 0.0
    %713 = vmatpush1.msra.mxu0 0.0
    %714 = vmatprep.subr.mxu0 0.0
    %715 = vmatpush1.msra.mxu0 0.0
    %716 = vmatprep.subr.mxu0 0.0
    %717 = vmatpush1.msra.mxu0 0.0
    %718 = vmatprep.subr.mxu0 0.0
    %719 = vmatpush1.msra.mxu0 0.0
    %720 = vmatprep.subr.mxu0 0.0
    %721 = vmatpush1.msra.mxu0 0.0
    %722 = vmatprep.subr.mxu0 0.0
    %723 = vmatpush1.msra.mxu0 0.0
    %724 = vmatprep.subr.mxu0 0.0
    %725 = vmatpush1.msra.mxu0 0.0
    %726 = vmatprep.subr.mxu0 0.0
    %727 = vmatpush1.msra.mxu0 0.0
    %728 = vmatprep.subr.mxu0 0.0
    %729 = vmatpush1.msra.mxu0 0.0
    %730 = vmatprep.subr.mxu0 0.0
    %731 = vmatpush1.msra.mxu0 0.0
    %732 = vmatprep.subr.mxu0 0.0
    %733 = vmatpush1.msra.mxu0 0.0
    %734 = vmatprep.subr.mxu0 0.0
    %735 = vmatpush1.msra.mxu0 0.0
    %736 = vmatprep.subr.mxu0 0.0
    %737 = vmatpush1.msra.mxu0 0.0
    %738 = vmatprep.subr.mxu0 0.0
    %739 = vmatpush1.msra.mxu0 0.0
    %740 = vmatprep.subr.mxu0 0.0
    %741 = vmatpush1.msra.mxu0 0.0
    %742 = vmatprep.subr.mxu0 0.0
    %743 = vmatpush1.msra.mxu0 0.0
    %744 = vmatprep.subr.mxu0 0.0
    %745 = vmatpush1.msra.mxu0 0.0
    %746 = vmatprep.subr.mxu0 0.0
    %747 = vmatpush1.msra.mxu0 0.0
    %748 = vmatprep.subr.mxu0 0.0
    %749 = vmatpush1.msra.mxu0 0.0
    %750 = vmatprep.subr.mxu0 0.0
    %751 = vmatpush1.msra.mxu0 0.0
    %752 = vmatprep.subr.mxu0 0.0
    %753 = vmatpush1.msra.mxu0 0.0
    %754 = vmatprep.subr.mxu0 0.0
    %755 = vmatpush1.msra.mxu0 0.0
    %756 = vmatprep.subr.mxu0 0.0
    %757 = vmatpush1.msra.mxu0 0.0
    %758 = vmatprep.subr.mxu0 0.0
    %759 = vmatpush1.msra.mxu0 0.0
    %760 = vmatprep.mubr.f32.mxu0 0.0
    %761 = vmatmul.mubr.f32.gmra.mrb[0].mxu0 %v694
    %v762 = vpop.f32.mrb[0].mxu0
    %v763 = vadd.f32 0.0, %v762
    %v764 = vpop.f32.mrb[0].mxu0
    %v765 = vadd.f32 0.0, %v764
    %766 = vdwg.mxu0
    %v769 = vrot.slane %v763, 2
    %v770 = vrot.slane %v765, 2
    %v773 = vadd.f32 %v329, %v769
    %v774 = vadd.f32 %v331, %v770
    %v775 = vxor.u32 %v773, 2147483648
    %v776 = vxor.u32 %v774, 2147483648
    %v777 = vmul.f32 %v775, 1.442695
    %v778 = vpow.pop %v777
    %v779 = vmul.f32 %v776, 1.442695
    %v780 = vpow.pop %v779
    %v781 = vadd.f32 %v778, 1.0
    %v782 = vadd.f32 %v780, 1.0
    %v783 = vrcp.pop %v781
    %v784 = vmul.f32 1.0, %v783
    %v785 = vrcp.pop %v782
    %v786 = vmul.f32 1.0, %v785
    %v787 = vtanh.pop %v774
    %v789 = vrot.slane %v685, 6
    %v791 = vmul.f32 %v784, %v789
    %793 = vrot.lane.b32.xlu0 %v787, 64
    %v794 = vpop.permute.xlu0 %793
    %v796 = vmul.f32 %v784, %v794
    %798 = vrot.lane.b32.xlu0 %v796, 64
    %v799 = vpop.permute.xlu0 %798
    %v801 = vadd.f32 %v791, %v799
    %v802 = vtanh.pop %v801
    %804 = vrot.lane.b32.xlu0 %v802, 64
    %v805 = vpop.permute.xlu0 %804
    %v807 = vmul.f32 %v786, %v805
    %v809 = vrot.slane %v807, 6
    %v810 = vsel %vm255, %v809, 0
    %812 = vmatprep.subr.mxu0 %v340
    %813 = vmatpush1.msra.mxu0 %v339
    %814 = vmatprep.subr.mxu0 %v342
    %815 = vmatpush1.msra.mxu0 %v341
    %816 = vmatprep.subr.mxu0 %v344
    %817 = vmatpush1.msra.mxu0 %v343
    %818 = vmatprep.subr.mxu0 %v346
    %819 = vmatpush1.msra.mxu0 %v345
    %820 = vmatprep.subr.mxu0 %v348
    %821 = vmatpush1.msra.mxu0 %v347
    %822 = vmatprep.subr.mxu0 %v350
    %823 = vmatpush1.msra.mxu0 %v349
    %824 = vmatprep.subr.mxu0 %v352
    %825 = vmatpush1.msra.mxu0 %v351
    %826 = vmatprep.subr.mxu0 %v354
    %827 = vmatpush1.msra.mxu0 %v353
    %828 = vmatprep.subr.mxu0 0.0
    %829 = vmatpush1.msra.mxu0 0.0
    %830 = vmatprep.subr.mxu0 0.0
    %831 = vmatpush1.msra.mxu0 0.0
    %832 = vmatprep.subr.mxu0 0.0
    %833 = vmatpush1.msra.mxu0 0.0
    %834 = vmatprep.subr.mxu0 0.0
    %835 = vmatpush1.msra.mxu0 0.0
    %836 = vmatprep.subr.mxu0 0.0
    %837 = vmatpush1.msra.mxu0 0.0
    %838 = vmatprep.subr.mxu0 0.0
    %839 = vmatpush1.msra.mxu0 0.0
    %840 = vmatprep.subr.mxu0 0.0
    %841 = vmatpush1.msra.mxu0 0.0
    %842 = vmatprep.subr.mxu0 0.0
    %843 = vmatpush1.msra.mxu0 0.0
    %844 = vmatprep.subr.mxu0 0.0
    %845 = vmatpush1.msra.mxu0 0.0
    %846 = vmatprep.subr.mxu0 0.0
    %847 = vmatpush1.msra.mxu0 0.0
    %848 = vmatprep.subr.mxu0 0.0
    %849 = vmatpush1.msra.mxu0 0.0
    %850 = vmatprep.subr.mxu0 0.0
    %851 = vmatpush1.msra.mxu0 0.0
    %852 = vmatprep.subr.mxu0 0.0
    %853 = vmatpush1.msra.mxu0 0.0
    %854 = vmatprep.subr.mxu0 0.0
    %855 = vmatpush1.msra.mxu0 0.0
    %856 = vmatprep.subr.mxu0 0.0
    %857 = vmatpush1.msra.mxu0 0.0
    %858 = vmatprep.subr.mxu0 0.0
    %859 = vmatpush1.msra.mxu0 0.0
    %860 = vmatprep.subr.mxu0 0.0
    %861 = vmatpush1.msra.mxu0 0.0
    %862 = vmatprep.subr.mxu0 0.0
    %863 = vmatpush1.msra.mxu0 0.0
    %864 = vmatprep.subr.mxu0 0.0
    %865 = vmatpush1.msra.mxu0 0.0
    %866 = vmatprep.subr.mxu0 0.0
    %867 = vmatpush1.msra.mxu0 0.0
    %868 = vmatprep.subr.mxu0 0.0
    %869 = vmatpush1.msra.mxu0 0.0
    %870 = vmatprep.subr.mxu0 0.0
    %871 = vmatpush1.msra.mxu0 0.0
    %872 = vmatprep.subr.mxu0 0.0
    %873 = vmatpush1.msra.mxu0 0.0
    %874 = vmatprep.subr.mxu0 0.0
    %875 = vmatpush1.msra.mxu0 0.0
    %876 = vmatprep.mubr.f32.mxu0 0.0
    %877 = vmatmul.mubr.f32.gmra.mrb[0].mxu0 %v810
    %v878 = vpop.f32.mrb[0].mxu0
    %v879 = vadd.f32 0.0, %v878
    %v880 = vpop.f32.mrb[0].mxu0
    %v881 = vadd.f32 0.0, %v880
    %882 = vdwg.mxu0
    %v883 = vadd.f32 %v335, %v879
    %v884 = vadd.f32 %v337, %v881
    %v885 = vxor.u32 %v883, 2147483648
    %v886 = vxor.u32 %v884, 2147483648
    %v887 = vmul.f32 %v885, 1.442695
    %v888 = vpow.pop %v887
    %v889 = vmul.f32 %v886, 1.442695
    %v890 = vpow.pop %v889
    %v891 = vadd.f32 %v888, 1.0
    %v892 = vadd.f32 %v890, 1.0
    %v893 = vrcp.pop %v891
    %v894 = vmul.f32 1.0, %v893
    %v895 = vrcp.pop %v892
    %v896 = vmul.f32 1.0, %v895
    %v897 = vtanh.pop %v884
    %v899 = vrot.slane %v801, 6
    %v901 = vmul.f32 %v894, %v899
    %903 = vrot.lane.b32.xlu0 %v897, 64
    %v904 = vpop.permute.xlu0 %903
    %v906 = vmul.f32 %v894, %v904
    %908 = vrot.lane.b32.xlu0 %v906, 64
    %v909 = vpop.permute.xlu0 %908
    %v911 = vadd.f32 %v901, %v909
    %v912 = vtanh.pop %v911
    %914 = vrot.lane.b32.xlu0 %v912, 64
    %v915 = vpop.permute.xlu0 %914
    %v917 = vmul.f32 %v896, %v915
    %v919 = vsel %vm255, %v917, 0
    %921 = vmatprep.subr.mxu0 %v340
    %922 = vmatpush1.msra.mxu0 %v339
    %923 = vmatprep.subr.mxu0 %v342
    %924 = vmatpush1.msra.mxu0 %v341
    %925 = vmatprep.subr.mxu0 %v344
    %926 = vmatpush1.msra.mxu0 %v343
    %927 = vmatprep.subr.mxu0 %v346
    %928 = vmatpush1.msra.mxu0 %v345
    %929 = vmatprep.subr.mxu0 %v348
    %930 = vmatpush1.msra.mxu0 %v347
    %931 = vmatprep.subr.mxu0 %v350
    %932 = vmatpush1.msra.mxu0 %v349
    %933 = vmatprep.subr.mxu0 %v352
    %934 = vmatpush1.msra.mxu0 %v351
    %935 = vmatprep.subr.mxu0 %v354
    %936 = vmatpush1.msra.mxu0 %v353
    %937 = vmatprep.subr.mxu0 0.0
    %938 = vmatpush1.msra.mxu0 0.0
    %939 = vmatprep.subr.mxu0 0.0
    %940 = vmatpush1.msra.mxu0 0.0
    %941 = vmatprep.subr.mxu0 0.0
    %942 = vmatpush1.msra.mxu0 0.0
    %943 = vmatprep.subr.mxu0 0.0
    %944 = vmatpush1.msra.mxu0 0.0
    %945 = vmatprep.subr.mxu0 0.0
    %946 = vmatpush1.msra.mxu0 0.0
    %947 = vmatprep.subr.mxu0 0.0
    %948 = vmatpush1.msra.mxu0 0.0
    %949 = vmatprep.subr.mxu0 0.0
    %950 = vmatpush1.msra.mxu0 0.0
    %951 = vmatprep.subr.mxu0 0.0
    %952 = vmatpush1.msra.mxu0 0.0
    %953 = vmatprep.subr.mxu0 0.0
    %954 = vmatpush1.msra.mxu0 0.0
    %955 = vmatprep.subr.mxu0 0.0
    %956 = vmatpush1.msra.mxu0 0.0
    %957 = vmatprep.subr.mxu0 0.0
    %958 = vmatpush1.msra.mxu0 0.0
    %959 = vmatprep.subr.mxu0 0.0
    %960 = vmatpush1.msra.mxu0 0.0
    %961 = vmatprep.subr.mxu0 0.0
    %962 = vmatpush1.msra.mxu0 0.0
    %963 = vmatprep.subr.mxu0 0.0
    %964 = vmatpush1.msra.mxu0 0.0
    %965 = vmatprep.subr.mxu0 0.0
    %966 = vmatpush1.msra.mxu0 0.0
    %967 = vmatprep.subr.mxu0 0.0
    %968 = vmatpush1.msra.mxu0 0.0
    %969 = vmatprep.subr.mxu0 0.0
    %970 = vmatpush1.msra.mxu0 0.0
    %971 = vmatprep.subr.mxu0 0.0
    %972 = vmatpush1.msra.mxu0 0.0
    %973 = vmatprep.subr.mxu0 0.0
    %974 = vmatpush1.msra.mxu0 0.0
    %975 = vmatprep.subr.mxu0 0.0
    %976 = vmatpush1.msra.mxu0 0.0
    %977 = vmatprep.subr.mxu0 0.0
    %978 = vmatpush1.msra.mxu0 0.0
    %979 = vmatprep.subr.mxu0 0.0
    %980 = vmatpush1.msra.mxu0 0.0
    %981 = vmatprep.subr.mxu0 0.0
    %982 = vmatpush1.msra.mxu0 0.0
    %983 = vmatprep.subr.mxu0 0.0
    %984 = vmatpush1.msra.mxu0 0.0
    %985 = vmatprep.mubr.f32.mxu0 0.0
    %986 = vmatmul.mubr.f32.gmra.mrb[0].mxu0 %v919
    %v987 = vpop.f32.mrb[0].mxu0
    %v988 = vadd.f32 0.0, %v987
    %v989 = vpop.f32.mrb[0].mxu0
    %v990 = vadd.f32 0.0, %v989
    %991 = vdwg.mxu0
    %v994 = vrot.slane %v988, 6
    %v995 = vrot.slane %v990, 6
    %v998 = vadd.f32 %v335, %v994
    %v999 = vadd.f32 %v337, %v995
    %v1000 = vxor.u32 %v998, 2147483648
    %v1001 = vxor.u32 %v999, 2147483648
    %v1002 = vmul.f32 %v1000, 1.442695
    %v1003 = vpow.pop %v1002
    %v1004 = vmul.f32 %v1001, 1.442695
    %v1005 = vpow.pop %v1004
    %v1006 = vadd.f32 %v1003, 1.0
    %v1007 = vadd.f32 %v1005, 1.0
    %v1008 = vrcp.pop %v1006
    %v1009 = vmul.f32 1.0, %v1008
    %v1010 = vrcp.pop %v1007
    %v1011 = vmul.f32 1.0, %v1010
    %v1012 = vtanh.pop %v999
    %v1014 = vrot.slane %v911, 6
    %v1016 = vmul.f32 %v1009, %v1014
    %1018 = vrot.lane.b32.xlu0 %v1012, 64
    %v1019 = vpop.permute.xlu0 %1018
    %v1021 = vmul.f32 %v1009, %v1019
    %1023 = vrot.lane.b32.xlu0 %v1021, 64
    %v1024 = vpop.permute.xlu0 %1023
    %v1026 = vadd.f32 %v1016, %v1024
    %v1027 = vtanh.pop %v1026
    %1029 = vrot.lane.b32.xlu0 %v1027, 64
    %v1030 = vpop.permute.xlu0 %1029
    %v1032 = vmul.f32 %v1011, %v1030
    %v1034 = vrot.slane %v1032, 2
    %v1035 = vsel %vm255, %v1034, 0
    %1037 = vmatprep.subr.mxu0 %v340
    %1038 = vmatpush1.msra.mxu0 %v339
    %1039 = vmatprep.subr.mxu0 %v342
    %1040 = vmatpush1.msra.mxu0 %v341
    %1041 = vmatprep.subr.mxu0 %v344
    %1042 = vmatpush1.msra.mxu0 %v343
    %1043 = vmatprep.subr.mxu0 %v346
    %1044 = vmatpush1.msra.mxu0 %v345
    %1045 = vmatprep.subr.mxu0 %v348
    %1046 = vmatpush1.msra.mxu0 %v347
    %1047 = vmatprep.subr.mxu0 %v350
    %1048 = vmatpush1.msra.mxu0 %v349
    %1049 = vmatprep.subr.mxu0 %v352
    %1050 = vmatpush1.msra.mxu0 %v351
    %1051 = vmatprep.subr.mxu0 %v354
    %1052 = vmatpush1.msra.mxu0 %v353
    %1053 = vmatprep.subr.mxu0 0.0
    %1054 = vmatpush1.msra.mxu0 0.0
    %1055 = vmatprep.subr.mxu0 0.0
    %1056 = vmatpush1.msra.mxu0 0.0
    %1057 = vmatprep.subr.mxu0 0.0
    %1058 = vmatpush1.msra.mxu0 0.0
    %1059 = vmatprep.subr.mxu0 0.0
    %1060 = vmatpush1.msra.mxu0 0.0
    %1061 = vmatprep.subr.mxu0 0.0
    %1062 = vmatpush1.msra.mxu0 0.0
    %1063 = vmatprep.subr.mxu0 0.0
    %1064 = vmatpush1.msra.mxu0 0.0
    %1065 = vmatprep.subr.mxu0 0.0
    %1066 = vmatpush1.msra.mxu0 0.0
    %1067 = vmatprep.subr.mxu0 0.0
    %1068 = vmatpush1.msra.mxu0 0.0
    %1069 = vmatprep.subr.mxu0 0.0
    %1070 = vmatpush1.msra.mxu0 0.0
    %1071 = vmatprep.subr.mxu0 0.0
    %1072 = vmatpush1.msra.mxu0 0.0
    %1073 = vmatprep.subr.mxu0 0.0
    %1074 = vmatpush1.msra.mxu0 0.0
    %1075 = vmatprep.subr.mxu0 0.0
    %1076 = vmatpush1.msra.mxu0 0.0
    %1077 = vmatprep.subr.mxu0 0.0
    %1078 = vmatpush1.msra.mxu0 0.0
    %1079 = vmatprep.subr.mxu0 0.0
    %1080 = vmatpush1.msra.mxu0 0.0
    %1081 = vmatprep.subr.mxu0 0.0
    %1082 = vmatpush1.msra.mxu0 0.0
    %1083 = vmatprep.subr.mxu0 0.0
    %1084 = vmatpush1.msra.mxu0 0.0
    %1085 = vmatprep.subr.mxu0 0.0
    %1086 = vmatpush1.msra.mxu0 0.0
    %1087 = vmatprep.subr.mxu0 0.0
    %1088 = vmatpush1.msra.mxu0 0.0
    %1089 = vmatprep.subr.mxu0 0.0
    %1090 = vmatpush1.msra.mxu0 0.0
    %1091 = vmatprep.subr.mxu0 0.0
    %1092 = vmatpush1.msra.mxu0 0.0
    %1093 = vmatprep.subr.mxu0 0.0
    %1094 = vmatpush1.msra.mxu0 0.0
    %1095 = vmatprep.subr.mxu0 0.0
    %1096 = vmatpush1.msra.mxu0 0.0
    %1097 = vmatprep.subr.mxu0 0.0
    %1098 = vmatpush1.msra.mxu0 0.0
    %1099 = vmatprep.subr.mxu0 0.0
    %1100 = vmatpush1.msra.mxu0 0.0
    %1101 = vmatprep.mubr.f32.mxu0 0.0
    %1102 = vmatmul.mubr.f32.gmra.mrb[0].mxu0 %v1035
    %v1103 = vpop.f32.mrb[0].mxu0
    %v1104 = vadd.f32 0.0, %v1103
    %v1105 = vpop.f32.mrb[0].mxu0
    %v1106 = vadd.f32 0.0, %v1105
    %1107 = vdwg.mxu0
    %v1110 = vrot.slane %v1104, 4
    %v1111 = vrot.slane %v1106, 4
    %v1114 = vadd.f32 %v335, %v1110
    %v1115 = vadd.f32 %v337, %v1111
    %v1116 = vxor.u32 %v1114, 2147483648
    %v1117 = vxor.u32 %v1115, 2147483648
    %v1118 = vmul.f32 %v1116, 1.442695
    %v1119 = vpow.pop %v1118
    %v1120 = vmul.f32 %v1117, 1.442695
    %v1121 = vpow.pop %v1120
    %v1122 = vadd.f32 %v1119, 1.0
    %v1123 = vadd.f32 %v1121, 1.0
    %v1124 = vrcp.pop %v1122
    %v1125 = vmul.f32 1.0, %v1124
    %v1126 = vrcp.pop %v1123
    %v1127 = vmul.f32 1.0, %v1126
    %v1128 = vtanh.pop %v1115
    %v1130 = vrot.slane %v1026, 6
    %v1132 = vmul.f32 %v1125, %v1130
    %1134 = vrot.lane.b32.xlu0 %v1128, 64
    %v1135 = vpop.permute.xlu0 %1134
    %v1137 = vmul.f32 %v1125, %v1135
    %1139 = vrot.lane.b32.xlu0 %v1137, 64
    %v1140 = vpop.permute.xlu0 %1139
    %v1142 = vadd.f32 %v1132, %v1140
    %v1143 = vtanh.pop %v1142
    %1145 = vrot.lane.b32.xlu0 %v1143, 64
    %v1146 = vpop.permute.xlu0 %1145
    %v1148 = vmul.f32 %v1127, %v1146
    %v1150 = vrot.slane %v1148, 4
    %v1151 = vsel %vm255, %v1150, 0
    %1153 = vmatprep.subr.mxu0 %v340
    %1154 = vmatpush1.msra.mxu0 %v339
    %1155 = vmatprep.subr.mxu0 %v342
    %1156 = vmatpush1.msra.mxu0 %v341
    %1157 = vmatprep.subr.mxu0 %v344
    %1158 = vmatpush1.msra.mxu0 %v343
    %1159 = vmatprep.subr.mxu0 %v346
    %1160 = vmatpush1.msra.mxu0 %v345
    %1161 = vmatprep.subr.mxu0 %v348
    %1162 = vmatpush1.msra.mxu0 %v347
    %1163 = vmatprep.subr.mxu0 %v350
    %1164 = vmatpush1.msra.mxu0 %v349
    %1165 = vmatprep.subr.mxu0 %v352
    %1166 = vmatpush1.msra.mxu0 %v351
    %1167 = vmatprep.subr.mxu0 %v354
    %1168 = vmatpush1.msra.mxu0 %v353
    %1169 = vmatprep.subr.mxu0 0.0
    %1170 = vmatpush1.msra.mxu0 0.0
    %1171 = vmatprep.subr.mxu0 0.0
    %1172 = vmatpush1.msra.mxu0 0.0
    %1173 = vmatprep.subr.mxu0 0.0
    %1174 = vmatpush1.msra.mxu0 0.0
    %1175 = vmatprep.subr.mxu0 0.0
    %1176 = vmatpush1.msra.mxu0 0.0
    %1177 = vmatprep.subr.mxu0 0.0
    %1178 = vmatpush1.msra.mxu0 0.0
    %1179 = vmatprep.subr.mxu0 0.0
    %1180 = vmatpush1.msra.mxu0 0.0
    %1181 = vmatprep.subr.mxu0 0.0
    %1182 = vmatpush1.msra.mxu0 0.0
    %1183 = vmatprep.subr.mxu0 0.0
    %1184 = vmatpush1.msra.mxu0 0.0
    %1185 = vmatprep.subr.mxu0 0.0
    %1186 = vmatpush1.msra.mxu0 0.0
    %1187 = vmatprep.subr.mxu0 0.0
    %1188 = vmatpush1.msra.mxu0 0.0
    %1189 = vmatprep.subr.mxu0 0.0
    %1190 = vmatpush1.msra.mxu0 0.0
    %1191 = vmatprep.subr.mxu0 0.0
    %1192 = vmatpush1.msra.mxu0 0.0
    %1193 = vmatprep.subr.mxu0 0.0
    %1194 = vmatpush1.msra.mxu0 0.0
    %1195 = vmatprep.subr.mxu0 0.0
    %1196 = vmatpush1.msra.mxu0 0.0
    %1197 = vmatprep.subr.mxu0 0.0
    %1198 = vmatpush1.msra.mxu0 0.0
    %1199 = vmatprep.subr.mxu0 0.0
    %1200 = vmatpush1.msra.mxu0 0.0
    %1201 = vmatprep.subr.mxu0 0.0
    %1202 = vmatpush1.msra.mxu0 0.0
    %1203 = vmatprep.subr.mxu0 0.0
    %1204 = vmatpush1.msra.mxu0 0.0
    %1205 = vmatprep.subr.mxu0 0.0
    %1206 = vmatpush1.msra.mxu0 0.0
    %1207 = vmatprep.subr.mxu0 0.0
    %1208 = vmatpush1.msra.mxu0 0.0
    %1209 = vmatprep.subr.mxu0 0.0
    %1210 = vmatpush1.msra.mxu0 0.0
    %1211 = vmatprep.subr.mxu0 0.0
    %1212 = vmatpush1.msra.mxu0 0.0
    %1213 = vmatprep.subr.mxu0 0.0
    %1214 = vmatpush1.msra.mxu0 0.0
    %1215 = vmatprep.subr.mxu0 0.0
    %1216 = vmatpush1.msra.mxu0 0.0
    %1217 = vmatprep.mubr.f32.mxu0 0.0
    %1218 = vmatmul.mubr.f32.gmra.mrb[0].mxu0 %v1151
    %v1219 = vpop.f32.mrb[0].mxu0
    %v1220 = vadd.f32 0.0, %v1219
    %v1221 = vpop.f32.mrb[0].mxu0
    %v1222 = vadd.f32 0.0, %v1221
    %1223 = vdwg.mxu0
    %v1226 = vrot.slane %v1220, 2
    %v1227 = vrot.slane %v1222, 2
    %v1230 = vadd.f32 %v335, %v1226
    %v1231 = vadd.f32 %v337, %v1227
    %v1232 = vxor.u32 %v1230, 2147483648
    %v1233 = vxor.u32 %v1231, 2147483648
    %v1234 = vmul.f32 %v1232, 1.442695
    %v1235 = vpow.pop %v1234
    %v1236 = vmul.f32 %v1233, 1.442695
    %v1237 = vpow.pop %v1236
    %v1238 = vadd.f32 %v1235, 1.0
    %v1239 = vadd.f32 %v1237, 1.0
    %v1240 = vrcp.pop %v1238
    %v1241 = vmul.f32 1.0, %v1240
    %v1242 = vrcp.pop %v1239
    %v1243 = vmul.f32 1.0, %v1242
    %v1244 = vtanh.pop %v1231
    %v1246 = vrot.slane %v1142, 6
    %v1248 = vmul.f32 %v1241, %v1246
    %1250 = vrot.lane.b32.xlu0 %v1244, 64
    %v1251 = vpop.permute.xlu0 %1250
    %v1253 = vmul.f32 %v1241, %v1251
    %1255 = vrot.lane.b32.xlu0 %v1253, 64
    %v1256 = vpop.permute.xlu0 %1255
    %v1258 = vadd.f32 %v1248, %v1256
    %v1259 = vtanh.pop %v1258
    %1261 = vrot.lane.b32.xlu0 %v1259, 64
    %v1262 = vpop.permute.xlu0 %1261
    %v1264 = vmul.f32 %v1243, %v1262
    %v1266 = vrot.slane %v1264, 6
    %1267 = vrot.lane.b32.xlu0 %v1266, 64
    %v1268 = vpop.permute.xlu0 %1267
    %v1270 = vsel %vm255, %v460, %v1268
    %v1271 = vrot.slane %v1148, 2
    %1272 = vrot.lane.b32.xlu0 %v1271, 64
    %v1273 = vpop.permute.xlu0 %1272
    %v1275 = vsel %vm255, %v575, %v1273
    %v1276 = vrot.slane %v1032, 6
    %1277 = vrot.lane.b32.xlu0 %v1276, 64
    %v1278 = vpop.permute.xlu0 %1277
    %v1280 = vsel %vm255, %v691, %v1278
    %v1281 = vrot.slane %v917, 2
    %1282 = vrot.lane.b32.xlu0 %v1281, 64
    %v1283 = vpop.permute.xlu0 %1282
    %v1285 = vsel %vm255, %v807, %v1283
    %1286 = vrot.lane.b32.xlu0 %v809, 64
    %v1287 = vpop.permute.xlu0 %1286
    %v1289 = vsel %vm255, %v917, %v1287
    %v1290 = vrot.slane %v691, 2
    %1291 = vrot.lane.b32.xlu0 %v1290, 64
    %v1292 = vpop.permute.xlu0 %1291
    %v1294 = vsel %vm255, %v1032, %v1292
    %v1295 = vrot.slane %v575, 6
    %1296 = vrot.lane.b32.xlu0 %v1295, 64
    %v1297 = vpop.permute.xlu0 %1296
    %v1299 = vsel %vm255, %v1148, %v1297
    %v1300 = vrot.slane %v460, 2
    %1301 = vrot.lane.b32.xlu0 %v1300, 64
    %v1302 = vpop.permute.xlu0 %1301
    %v1304 = vsel %vm255, %v1264, %v1302
    %v1305 = vsel %vm218, %v1270, %v1275
    %v1306 = vsel %vm220, %v1305, %v1280
    %v1307 = vsel %vm222, %v1306, %v1285
    %v1308 = vsel %vm218, %v1289, %v1294
    %v1309 = vsel %vm220, %v1308, %v1299
    %v1310 = vsel %vm222, %v1309, %v1304
    %v1311 = vld [vmem:[#allocation7] sm:$0xff]
    %v1312 = vld [vmem:[#allocation7 + $0x8] sm:$0xff]
    %v1313 = vld [vmem:[#allocation7 + $0x10] sm:$0xff]
    %v1314 = vld [vmem:[#allocation7 + $0x18] sm:$0xff]
    %v1315 = vld [vmem:[#allocation7 + $0x20] sm:$0xff]
    %v1316 = vld [vmem:[#allocation7 + $0x28] sm:$0xff]
    %v1317 = vld [vmem:[#allocation7 + $0x30] sm:$0xff]
    %v1318 = vld [vmem:[#allocation7 + $0x38] sm:$0xff]
    %v1319 = vld [vmem:[#allocation7 + $0x40] sm:$0xff]
    %v1320 = vld [vmem:[#allocation7 + $0x48] sm:$0xff]
    %v1321 = vld [vmem:[#allocation7 + $0x50] sm:$0xff]
    %v1322 = vld [vmem:[#allocation7 + $0x58] sm:$0xff]
    %v1323 = vld [vmem:[#allocation7 + $0x60] sm:$0xff]
    %v1324 = vld [vmem:[#allocation7 + $0x68] sm:$0xff]
    %v1325 = vld [vmem:[#allocation7 + $0x70] sm:$0xff]
    %v1326 = vld [vmem:[#allocation7 + $0x78] sm:$0xff]
    %v1327 = vld [vmem:[#allocation7 + $0x80] sm:$0xff]
    %v1328 = vld [vmem:[#allocation7 + $0x88] sm:$0xff]
    %v1329 = vld [vmem:[#allocation7 + $0x90] sm:$0xff]
    %v1330 = vld [vmem:[#allocation7 + $0x98] sm:$0xff]
    %v1331 = vld [vmem:[#allocation7 + $0xa0] sm:$0xff]
    %v1332 = vld [vmem:[#allocation7 + $0xa8] sm:$0xff]
    %v1333 = vld [vmem:[#allocation7 + $0xb0] sm:$0xff]
    %v1334 = vld [vmem:[#allocation7 + $0xb8] sm:$0xff]
    %v1335 = vld [vmem:[#allocation7 + $0xc0] sm:$0xff]
    %v1336 = vld [vmem:[#allocation7 + $0xc8] sm:$0xff]
    %v1337 = vld [vmem:[#allocation7 + $0xd0] sm:$0xff]
    %v1338 = vld [vmem:[#allocation7 + $0xd8] sm:$0xff]
    %v1339 = vld [vmem:[#allocation7 + $0xe0] sm:$0xff]
    %v1340 = vld [vmem:[#allocation7 + $0xe8] sm:$0xff]
    %v1341 = vld [vmem:[#allocation7 + $0xf0] sm:$0xff]
    %v1342 = vld [vmem:[#allocation7 + $0xf8] sm:$0xff]
    %v1343 = vld [vmem:[%s5] sm:$0x3]
    %v1345 = vlaneseq
    %v1346 = vshrl.u32 %v1345, 7
    %v1347 = vsub.s32 0, %v1346
    %v1348 = vrot.slane %v1343, %v1347
    %v1349 = vlaneseq
    %v1350 = vshrl.u32 %v1349, 7
    %v1351 = vsub.s32 1, %v1350
    %v1352 = vrot.slane %v1343, %v1351
    %1355 = vmatprep.subr.mxu0 %v1312
    %1356 = vmatpush1.msra.mxu0 %v1311
    %1357 = vmatprep.subr.mxu0 %v1314
    %1358 = vmatpush1.msra.mxu0 %v1313
    %1359 = vmatprep.subr.mxu0 %v1316
    %1360 = vmatpush1.msra.mxu0 %v1315
    %1361 = vmatprep.subr.mxu0 %v1318
    %1362 = vmatpush1.msra.mxu0 %v1317
    %1363 = vmatprep.subr.mxu0 %v1320
    %1364 = vmatpush1.msra.mxu0 %v1319
    %1365 = vmatprep.subr.mxu0 %v1322
    %1366 = vmatpush1.msra.mxu0 %v1321
    %1367 = vmatprep.subr.mxu0 %v1324
    %1368 = vmatpush1.msra.mxu0 %v1323
    %1369 = vmatprep.subr.mxu0 %v1326
    %1370 = vmatpush1.msra.mxu0 %v1325
    %1371 = vmatprep.subr.mxu0 %v1328
    %1372 = vmatpush1.msra.mxu0 %v1327
    %1373 = vmatprep.subr.mxu0 %v1330
    %1374 = vmatpush1.msra.mxu0 %v1329
    %1375 = vmatprep.subr.mxu0 %v1332
    %1376 = vmatpush1.msra.mxu0 %v1331
    %1377 = vmatprep.subr.mxu0 %v1334
    %1378 = vmatpush1.msra.mxu0 %v1333
    %1379 = vmatprep.subr.mxu0 %v1336
    %1380 = vmatpush1.msra.mxu0 %v1335
    %1381 = vmatprep.subr.mxu0 %v1338
    %1382 = vmatpush1.msra.mxu0 %v1337
    %1383 = vmatprep.subr.mxu0 %v1340
    %1384 = vmatpush1.msra.mxu0 %v1339
    %1385 = vmatprep.subr.mxu0 %v1342
    %1386 = vmatpush1.msra.mxu0 %v1341
    %1387 = vmatprep.subr.mxu0 0.0
    %1388 = vmatpush1.msra.mxu0 0.0
    %1389 = vmatprep.subr.mxu0 0.0
    %1390 = vmatpush1.msra.mxu0 0.0
    %1391 = vmatprep.subr.mxu0 0.0
    %1392 = vmatpush1.msra.mxu0 0.0
    %1393 = vmatprep.subr.mxu0 0.0
    %1394 = vmatpush1.msra.mxu0 0.0
    %1395 = vmatprep.subr.mxu0 0.0
    %1396 = vmatpush1.msra.mxu0 0.0
    %1397 = vmatprep.subr.mxu0 0.0
    %1398 = vmatpush1.msra.mxu0 0.0
    %1399 = vmatprep.subr.mxu0 0.0
    %1400 = vmatpush1.msra.mxu0 0.0
    %1401 = vmatprep.subr.mxu0 0.0
    %1402 = vmatpush1.msra.mxu0 0.0
    %1403 = vmatprep.subr.mxu0 0.0
    %1404 = vmatpush1.msra.mxu0 0.0
    %1405 = vmatprep.subr.mxu0 0.0
    %1406 = vmatpush1.msra.mxu0 0.0
    %1407 = vmatprep.subr.mxu0 0.0
    %1408 = vmatpush1.msra.mxu0 0.0
    %1409 = vmatprep.subr.mxu0 0.0
    %1410 = vmatpush1.msra.mxu0 0.0
    %1411 = vmatprep.subr.mxu0 0.0
    %1412 = vmatpush1.msra.mxu0 0.0
    %1413 = vmatprep.subr.mxu0 0.0
    %1414 = vmatpush1.msra.mxu0 0.0
    %1415 = vmatprep.subr.mxu0 0.0
    %1416 = vmatpush1.msra.mxu0 0.0
    %1417 = vmatprep.subr.mxu0 0.0
    %1418 = vmatpush1.msra.mxu0 0.0
    %1419 = vmatprep.mubr.f32.mxu0 0.0
    %1420 = vmatmul.mubr.f32.gmra.mrb[0].mxu0 %v1307
    %v1421 = vpop.f32.mrb[0].mxu0
    %v1422 = vadd.f32 %v1348, %v1421
    %v1423 = vpop.f32.mrb[0].mxu0
    %v1424 = vadd.f32 %v1352, %v1423
    %1425 = vmatprep.mubr.f32.mxu0 0.0
    %1426 = vmatmul.mubr.f32.gmra.mrb[0].mxu0 %v1310
    %v1427 = vpop.f32.mrb[0].mxu0
    %v1428 = vadd.f32 %v1348, %v1427
    %v1429 = vpop.f32.mrb[0].mxu0
    %v1430 = vadd.f32 %v1352, %v1429
    %1431 = vdwg.mxu0
    %v1432 = vld [vmem:[#allocation9] sm:$0xff]
    %v1433 = vld [vmem:[#allocation9 + $0x8] sm:$0xff]
    %v1434 = vld [vmem:[#allocation9 + $0x10] sm:$0xff]
    %v1435 = vld [vmem:[#allocation9 + $0x18] sm:$0xff]
    %v1436 = vld [vmem:[#allocation9 + $0x20] sm:$0xff]
    %v1437 = vld [vmem:[#allocation9 + $0x28] sm:$0xff]
    %v1438 = vld [vmem:[#allocation9 + $0x30] sm:$0xff]
    %v1439 = vld [vmem:[#allocation9 + $0x38] sm:$0xff]
    %v1440 = vld [vmem:[#allocation9 + $0x40] sm:$0xff]
    %v1441 = vld [vmem:[#allocation9 + $0x48] sm:$0xff]
    %v1442 = vld [vmem:[#allocation9 + $0x50] sm:$0xff]
    %v1443 = vld [vmem:[#allocation9 + $0x58] sm:$0xff]
    %v1444 = vld [vmem:[#allocation9 + $0x60] sm:$0xff]
    %v1445 = vld [vmem:[#allocation9 + $0x68] sm:$0xff]
    %v1446 = vld [vmem:[#allocation9 + $0x70] sm:$0xff]
    %v1447 = vld [vmem:[#allocation9 + $0x78] sm:$0xff]
    %1448 = vmatprep.subr.mxu0 %v1433
    %1449 = vmatpush1.msra.mxu0 %v1432
    %1450 = vmatprep.subr.mxu0 %v1435
    %1451 = vmatpush1.msra.mxu0 %v1434
    %1452 = vmatprep.subr.mxu0 %v1437
    %1453 = vmatpush1.msra.mxu0 %v1436
    %1454 = vmatprep.subr.mxu0 %v1439
    %1455 = vmatpush1.msra.mxu0 %v1438
    %1456 = vmatprep.subr.mxu0 %v1441
    %1457 = vmatpush1.msra.mxu0 %v1440
    %1458 = vmatprep.subr.mxu0 %v1443
    %1459 = vmatpush1.msra.mxu0 %v1442
    %1460 = vmatprep.subr.mxu0 %v1445
    %1461 = vmatpush1.msra.mxu0 %v1444
    %1462 = vmatprep.subr.mxu0 %v1447
    %1463 = vmatpush1.msra.mxu0 %v1446
    %1464 = vmatprep.subr.mxu0 0.0
    %1465 = vmatpush1.msra.mxu0 0.0
    %1466 = vmatprep.subr.mxu0 0.0
    %1467 = vmatpush1.msra.mxu0 0.0
    %1468 = vmatprep.subr.mxu0 0.0
    %1469 = vmatpush1.msra.mxu0 0.0
    %1470 = vmatprep.subr.mxu0 0.0
    %1471 = vmatpush1.msra.mxu0 0.0
    %1472 = vmatprep.subr.mxu0 0.0
    %1473 = vmatpush1.msra.mxu0 0.0
    %1474 = vmatprep.subr.mxu0 0.0
    %1475 = vmatpush1.msra.mxu0 0.0
    %1476 = vmatprep.subr.mxu0 0.0
    %1477 = vmatpush1.msra.mxu0 0.0
    %1478 = vmatprep.subr.mxu0 0.0
    %1479 = vmatpush1.msra.mxu0 0.0
    %1480 = vmatprep.subr.mxu0 0.0
    %1481 = vmatpush1.msra.mxu0 0.0
    %1482 = vmatprep.subr.mxu0 0.0
    %1483 = vmatpush1.msra.mxu0 0.0
    %1484 = vmatprep.subr.mxu0 0.0
    %1485 = vmatpush1.msra.mxu0 0.0
    %1486 = vmatprep.subr.mxu0 0.0
    %1487 = vmatpush1.msra.mxu0 0.0
    %1488 = vmatprep.subr.mxu0 0.0
    %1489 = vmatpush1.msra.mxu0 0.0
    %1490 = vmatprep.subr.mxu0 0.0
    %1491 = vmatpush1.msra.mxu0 0.0
    %1492 = vmatprep.subr.mxu0 0.0
    %1493 = vmatpush1.msra.mxu0 0.0
    %1494 = vmatprep.subr.mxu0 0.0
    %1495 = vmatpush1.msra.mxu0 0.0
    %1496 = vmatprep.subr.mxu0 0.0
    %1497 = vmatpush1.msra.mxu0 0.0
    %1498 = vmatprep.subr.mxu0 0.0
    %1499 = vmatpush1.msra.mxu0 0.0
    %1500 = vmatprep.subr.mxu0 0.0
    %1501 = vmatpush1.msra.mxu0 0.0
    %1502 = vmatprep.subr.mxu0 0.0
    %1503 = vmatpush1.msra.mxu0 0.0
    %1504 = vmatprep.subr.mxu0 0.0
    %1505 = vmatpush1.msra.mxu0 0.0
    %1506 = vmatprep.subr.mxu0 0.0
    %1507 = vmatpush1.msra.mxu0 0.0
    %1508 = vmatprep.subr.mxu0 0.0
    %1509 = vmatpush1.msra.mxu0 0.0
    %1510 = vmatprep.subr.mxu0 0.0
    %1511 = vmatpush1.msra.mxu0 0.0
    %1512 = vmatprep.mubr.f32.mxu0 0.0
    %1513 = vmatmul.mubr.f32.gmra.mrb[0].mxu0 %v356
    %v1514 = vpop.f32.mrb[0].mxu0
    %v1515 = vadd.f32 0.0, %v1514
    %v1516 = vpop.f32.mrb[0].mxu0
    %v1517 = vadd.f32 0.0, %v1516
    %1518 = vdwg.mxu0
    %v1519 = vadd.f32 %v1422, %v1515
    %v1520 = vadd.f32 %v1424, %v1517
    %v1521 = vxor.u32 %v1519, 2147483648
    %v1522 = vxor.u32 %v1520, 2147483648
    %v1523 = vmul.f32 %v1521, 1.442695
    %v1524 = vpow.pop %v1523
    %v1525 = vmul.f32 %v1522, 1.442695
    %v1526 = vpow.pop %v1525
    %v1527 = vadd.f32 %v1524, 1.0
    %v1528 = vadd.f32 %v1526, 1.0
    %v1529 = vrcp.pop %v1527
    %v1530 = vmul.f32 1.0, %v1529
    %v1531 = vrcp.pop %v1528
    %v1532 = vmul.f32 1.0, %v1531
    %v1533 = vtanh.pop %v1520
    %v1534 = vmul.f32 %v1530, 0.0
    %1536 = vrot.lane.b32.xlu0 %v1533, 64
    %v1537 = vpop.permute.xlu0 %1536
    %v1539 = vmul.f32 %v1530, %v1537
    %1541 = vrot.lane.b32.xlu0 %v1539, 64
    %v1542 = vpop.permute.xlu0 %1541
    %v1544 = vadd.f32 %v1534, %v1542
    %v1545 = vtanh.pop %v1544
    %1547 = vrot.lane.b32.xlu0 %v1545, 64
    %v1548 = vpop.permute.xlu0 %1547
    %v1550 = vmul.f32 %v1532, %v1548
    %v1552 = vsel %vm255, %v1550, 0
    %1554 = vmatprep.subr.mxu0 %v1433
    %1555 = vmatpush1.msra.mxu0 %v1432
    %1556 = vmatprep.subr.mxu0 %v1435
    %1557 = vmatpush1.msra.mxu0 %v1434
    %1558 = vmatprep.subr.mxu0 %v1437
    %1559 = vmatpush1.msra.mxu0 %v1436
    %1560 = vmatprep.subr.mxu0 %v1439
    %1561 = vmatpush1.msra.mxu0 %v1438
    %1562 = vmatprep.subr.mxu0 %v1441
    %1563 = vmatpush1.msra.mxu0 %v1440
    %1564 = vmatprep.subr.mxu0 %v1443
    %1565 = vmatpush1.msra.mxu0 %v1442
    %1566 = vmatprep.subr.mxu0 %v1445
    %1567 = vmatpush1.msra.mxu0 %v1444
    %1568 = vmatprep.subr.mxu0 %v1447
    %1569 = vmatpush1.msra.mxu0 %v1446
    %1570 = vmatprep.subr.mxu0 0.0
    %1571 = vmatpush1.msra.mxu0 0.0
    %1572 = vmatprep.subr.mxu0 0.0
    %1573 = vmatpush1.msra.mxu0 0.0
    %1574 = vmatprep.subr.mxu0 0.0
    %1575 = vmatpush1.msra.mxu0 0.0
    %1576 = vmatprep.subr.mxu0 0.0
    %1577 = vmatpush1.msra.mxu0 0.0
    %1578 = vmatprep.subr.mxu0 0.0
    %1579 = vmatpush1.msra.mxu0 0.0
    %1580 = vmatprep.subr.mxu0 0.0
    %1581 = vmatpush1.msra.mxu0 0.0
    %1582 = vmatprep.subr.mxu0 0.0
    %1583 = vmatpush1.msra.mxu0 0.0
    %1584 = vmatprep.subr.mxu0 0.0
    %1585 = vmatpush1.msra.mxu0 0.0
    %1586 = vmatprep.subr.mxu0 0.0
    %1587 = vmatpush1.msra.mxu0 0.0
    %1588 = vmatprep.subr.mxu0 0.0
    %1589 = vmatpush1.msra.mxu0 0.0
    %1590 = vmatprep.subr.mxu0 0.0
    %1591 = vmatpush1.msra.mxu0 0.0
    %1592 = vmatprep.subr.mxu0 0.0
    %1593 = vmatpush1.msra.mxu0 0.0
    %1594 = vmatprep.subr.mxu0 0.0
    %1595 = vmatpush1.msra.mxu0 0.0
    %1596 = vmatprep.subr.mxu0 0.0
    %1597 = vmatpush1.msra.mxu0 0.0
    %1598 = vmatprep.subr.mxu0 0.0
    %1599 = vmatpush1.msra.mxu0 0.0
    %1600 = vmatprep.subr.mxu0 0.0
    %1601 = vmatpush1.msra.mxu0 0.0
    %1602 = vmatprep.subr.mxu0 0.0
    %1603 = vmatpush1.msra.mxu0 0.0
    %1604 = vmatprep.subr.mxu0 0.0
    %1605 = vmatpush1.msra.mxu0 0.0
    %1606 = vmatprep.subr.mxu0 0.0
    %1607 = vmatpush1.msra.mxu0 0.0
    %1608 = vmatprep.subr.mxu0 0.0
    %1609 = vmatpush1.msra.mxu0 0.0
    %1610 = vmatprep.subr.mxu0 0.0
    %1611 = vmatpush1.msra.mxu0 0.0
    %1612 = vmatprep.subr.mxu0 0.0
    %1613 = vmatpush1.msra.mxu0 0.0
    %1614 = vmatprep.subr.mxu0 0.0
    %1615 = vmatpush1.msra.mxu0 0.0
    %1616 = vmatprep.subr.mxu0 0.0
    %1617 = vmatpush1.msra.mxu0 0.0
    %1618 = vmatprep.mubr.f32.mxu0 0.0
    %1619 = vmatmul.mubr.f32.gmra.mrb[0].mxu0 %v1552
    %v1620 = vpop.f32.mrb[0].mxu0
    %v1621 = vadd.f32 0.0, %v1620
    %v1622 = vpop.f32.mrb[0].mxu0
    %v1623 = vadd.f32 0.0, %v1622
    %1624 = vdwg.mxu0
    %v1627 = vrot.slane %v1621, 6
    %v1628 = vrot.slane %v1623, 6
    %v1631 = vadd.f32 %v1422, %v1627
    %v1632 = vadd.f32 %v1424, %v1628
    %v1633 = vxor.u32 %v1631, 2147483648
    %v1634 = vxor.u32 %v1632, 2147483648
    %v1635 = vmul.f32 %v1633, 1.442695
    %v1636 = vpow.pop %v1635
    %v1637 = vmul.f32 %v1634, 1.442695
    %v1638 = vpow.pop %v1637
    %v1639 = vadd.f32 %v1636, 1.0
    %v1640 = vadd.f32 %v1638, 1.0
    %v1641 = vrcp.pop %v1639
    %v1642 = vmul.f32 1.0, %v1641
    %v1643 = vrcp.pop %v1640
    %v1644 = vmul.f32 1.0, %v1643
    %v1645 = vtanh.pop %v1632
    %v1647 = vrot.slane %v1544, 6
    %v1649 = vmul.f32 %v1642, %v1647
    %1651 = vrot.lane.b32.xlu0 %v1645, 64
    %v1652 = vpop.permute.xlu0 %1651
    %v1654 = vmul.f32 %v1642, %v1652
    %1656 = vrot.lane.b32.xlu0 %v1654, 64
    %v1657 = vpop.permute.xlu0 %1656
    %v1659 = vadd.f32 %v1649, %v1657
    %v1660 = vtanh.pop %v1659
    %1662 = vrot.lane.b32.xlu0 %v1660, 64
    %v1663 = vpop.permute.xlu0 %1662
    %v1665 = vmul.f32 %v1644, %v1663
    %v1667 = vrot.slane %v1665, 2
    %v1668 = vsel %vm255, %v1667, 0
    %1670 = vmatprep.subr.mxu0 %v1433
    %1671 = vmatpush1.msra.mxu0 %v1432
    %1672 = vmatprep.subr.mxu0 %v1435
    %1673 = vmatpush1.msra.mxu0 %v1434
    %1674 = vmatprep.subr.mxu0 %v1437
    %1675 = vmatpush1.msra.mxu0 %v1436
    %1676 = vmatprep.subr.mxu0 %v1439
    %1677 = vmatpush1.msra.mxu0 %v1438
    %1678 = vmatprep.subr.mxu0 %v1441
    %1679 = vmatpush1.msra.mxu0 %v1440
    %1680 = vmatprep.subr.mxu0 %v1443
    %1681 = vmatpush1.msra.mxu0 %v1442
    %1682 = vmatprep.subr.mxu0 %v1445
    %1683 = vmatpush1.msra.mxu0 %v1444
    %1684 = vmatprep.subr.mxu0 %v1447
    %1685 = vmatpush1.msra.mxu0 %v1446
    %1686 = vmatprep.subr.mxu0 0.0
    %1687 = vmatpush1.msra.mxu0 0.0
    %1688 = vmatprep.subr.mxu0 0.0
    %1689 = vmatpush1.msra.mxu0 0.0
    %1690 = vmatprep.subr.mxu0 0.0
    %1691 = vmatpush1.msra.mxu0 0.0
    %1692 = vmatprep.subr.mxu0 0.0
    %1693 = vmatpush1.msra.mxu0 0.0
    %1694 = vmatprep.subr.mxu0 0.0
    %1695 = vmatpush1.msra.mxu0 0.0
    %1696 = vmatprep.subr.mxu0 0.0
    %1697 = vmatpush1.msra.mxu0 0.0
    %1698 = vmatprep.subr.mxu0 0.0
    %1699 = vmatpush1.msra.mxu0 0.0
    %1700 = vmatprep.subr.mxu0 0.0
    %1701 = vmatpush1.msra.mxu0 0.0
    %1702 = vmatprep.subr.mxu0 0.0
    %1703 = vmatpush1.msra.mxu0 0.0
    %1704 = vmatprep.subr.mxu0 0.0
    %1705 = vmatpush1.msra.mxu0 0.0
    %1706 = vmatprep.subr.mxu0 0.0
    %1707 = vmatpush1.msra.mxu0 0.0
    %1708 = vmatprep.subr.mxu0 0.0
    %1709 = vmatpush1.msra.mxu0 0.0
    %1710 = vmatprep.subr.mxu0 0.0
    %1711 = vmatpush1.msra.mxu0 0.0
    %1712 = vmatprep.subr.mxu0 0.0
    %1713 = vmatpush1.msra.mxu0 0.0
    %1714 = vmatprep.subr.mxu0 0.0
    %1715 = vmatpush1.msra.mxu0 0.0
    %1716 = vmatprep.subr.mxu0 0.0
    %1717 = vmatpush1.msra.mxu0 0.0
    %1718 = vmatprep.subr.mxu0 0.0
    %1719 = vmatpush1.msra.mxu0 0.0
    %1720 = vmatprep.subr.mxu0 0.0
    %1721 = vmatpush1.msra.mxu0 0.0
    %1722 = vmatprep.subr.mxu0 0.0
    %1723 = vmatpush1.msra.mxu0 0.0
    %1724 = vmatprep.subr.mxu0 0.0
    %1725 = vmatpush1.msra.mxu0 0.0
    %1726 = vmatprep.subr.mxu0 0.0
    %1727 = vmatpush1.msra.mxu0 0.0
    %1728 = vmatprep.subr.mxu0 0.0
    %1729 = vmatpush1.msra.mxu0 0.0
    %1730 = vmatprep.subr.mxu0 0.0
    %1731 = vmatpush1.msra.mxu0 0.0
    %1732 = vmatprep.subr.mxu0 0.0
    %1733 = vmatpush1.msra.mxu0 0.0
    %1734 = vmatprep.mubr.f32.mxu0 0.0
    %1735 = vmatmul.mubr.f32.gmra.mrb[0].mxu0 %v1668
    %v1736 = vpop.f32.mrb[0].mxu0
    %v1737 = vadd.f32 0.0, %v1736
    %v1738 = vpop.f32.mrb[0].mxu0
    %v1739 = vadd.f32 0.0, %v1738
    %1740 = vdwg.mxu0
    %v1743 = vrot.slane %v1737, 4
    %v1744 = vrot.slane %v1739, 4
    %v1747 = vadd.f32 %v1422, %v1743
    %v1748 = vadd.f32 %v1424, %v1744
    %v1749 = vxor.u32 %v1747, 2147483648
    %v1750 = vxor.u32 %v1748, 2147483648
    %v1751 = vmul.f32 %v1749, 1.442695
    %v1752 = vpow.pop %v1751
    %v1753 = vmul.f32 %v1750, 1.442695
    %v1754 = vpow.pop %v1753
    %v1755 = vadd.f32 %v1752, 1.0
    %v1756 = vadd.f32 %v1754, 1.0
    %v1757 = vrcp.pop %v1755
    %v1758 = vmul.f32 1.0, %v1757
    %v1759 = vrcp.pop %v1756
    %v1760 = vmul.f32 1.0, %v1759
    %v1761 = vtanh.pop %v1748
    %v1763 = vrot.slane %v1659, 6
    %v1765 = vmul.f32 %v1758, %v1763
    %1767 = vrot.lane.b32.xlu0 %v1761, 64
    %v1768 = vpop.permute.xlu0 %1767
    %v1770 = vmul.f32 %v1758, %v1768
    %1772 = vrot.lane.b32.xlu0 %v1770, 64
    %v1773 = vpop.permute.xlu0 %1772
    %v1775 = vadd.f32 %v1765, %v1773
    %v1776 = vtanh.pop %v1775
    %1778 = vrot.lane.b32.xlu0 %v1776, 64
    %v1779 = vpop.permute.xlu0 %1778
    %v1781 = vmul.f32 %v1760, %v1779
    %v1783 = vrot.slane %v1781, 4
    %v1784 = vsel %vm255, %v1783, 0
    %1786 = vmatprep.subr.mxu0 %v1433
    %1787 = vmatpush1.msra.mxu0 %v1432
    %1788 = vmatprep.subr.mxu0 %v1435
    %1789 = vmatpush1.msra.mxu0 %v1434
    %1790 = vmatprep.subr.mxu0 %v1437
    %1791 = vmatpush1.msra.mxu0 %v1436
    %1792 = vmatprep.subr.mxu0 %v1439
    %1793 = vmatpush1.msra.mxu0 %v1438
    %1794 = vmatprep.subr.mxu0 %v1441
    %1795 = vmatpush1.msra.mxu0 %v1440
    %1796 = vmatprep.subr.mxu0 %v1443
    %1797 = vmatpush1.msra.mxu0 %v1442
    %1798 = vmatprep.subr.mxu0 %v1445
    %1799 = vmatpush1.msra.mxu0 %v1444
    %1800 = vmatprep.subr.mxu0 %v1447
    %1801 = vmatpush1.msra.mxu0 %v1446
    %1802 = vmatprep.subr.mxu0 0.0
    %1803 = vmatpush1.msra.mxu0 0.0
    %1804 = vmatprep.subr.mxu0 0.0
    %1805 = vmatpush1.msra.mxu0 0.0
    %1806 = vmatprep.subr.mxu0 0.0
    %1807 = vmatpush1.msra.mxu0 0.0
    %1808 = vmatprep.subr.mxu0 0.0
    %1809 = vmatpush1.msra.mxu0 0.0
    %1810 = vmatprep.subr.mxu0 0.0
    %1811 = vmatpush1.msra.mxu0 0.0
    %1812 = vmatprep.subr.mxu0 0.0
    %1813 = vmatpush1.msra.mxu0 0.0
    %1814 = vmatprep.subr.mxu0 0.0
    %1815 = vmatpush1.msra.mxu0 0.0
    %1816 = vmatprep.subr.mxu0 0.0
    %1817 = vmatpush1.msra.mxu0 0.0
    %1818 = vmatprep.subr.mxu0 0.0
    %1819 = vmatpush1.msra.mxu0 0.0
    %1820 = vmatprep.subr.mxu0 0.0
    %1821 = vmatpush1.msra.mxu0 0.0
    %1822 = vmatprep.subr.mxu0 0.0
    %1823 = vmatpush1.msra.mxu0 0.0
    %1824 = vmatprep.subr.mxu0 0.0
    %1825 = vmatpush1.msra.mxu0 0.0
    %1826 = vmatprep.subr.mxu0 0.0
    %1827 = vmatpush1.msra.mxu0 0.0
    %1828 = vmatprep.subr.mxu0 0.0
    %1829 = vmatpush1.msra.mxu0 0.0
    %1830 = vmatprep.subr.mxu0 0.0
    %1831 = vmatpush1.msra.mxu0 0.0
    %1832 = vmatprep.subr.mxu0 0.0
    %1833 = vmatpush1.msra.mxu0 0.0
    %1834 = vmatprep.subr.mxu0 0.0
    %1835 = vmatpush1.msra.mxu0 0.0
    %1836 = vmatprep.subr.mxu0 0.0
    %1837 = vmatpush1.msra.mxu0 0.0
    %1838 = vmatprep.subr.mxu0 0.0
    %1839 = vmatpush1.msra.mxu0 0.0
    %1840 = vmatprep.subr.mxu0 0.0
    %1841 = vmatpush1.msra.mxu0 0.0
    %1842 = vmatprep.subr.mxu0 0.0
    %1843 = vmatpush1.msra.mxu0 0.0
    %1844 = vmatprep.subr.mxu0 0.0
    %1845 = vmatpush1.msra.mxu0 0.0
    %1846 = vmatprep.subr.mxu0 0.0
    %1847 = vmatpush1.msra.mxu0 0.0
    %1848 = vmatprep.subr.mxu0 0.0
    %1849 = vmatpush1.msra.mxu0 0.0
    %1850 = vmatprep.mubr.f32.mxu0 0.0
    %1851 = vmatmul.mubr.f32.gmra.mrb[0].mxu0 %v1784
    %v1852 = vpop.f32.mrb[0].mxu0
    %v1853 = vadd.f32 0.0, %v1852
    %v1854 = vpop.f32.mrb[0].mxu0
    %v1855 = vadd.f32 0.0, %v1854
    %1856 = vdwg.mxu0
    %v1859 = vrot.slane %v1853, 2
    %v1860 = vrot.slane %v1855, 2
    %v1863 = vadd.f32 %v1422, %v1859
    %v1864 = vadd.f32 %v1424, %v1860
    %v1865 = vxor.u32 %v1863, 2147483648
    %v1866 = vxor.u32 %v1864, 2147483648
    %v1867 = vmul.f32 %v1865, 1.442695
    %v1868 = vpow.pop %v1867
    %v1869 = vmul.f32 %v1866, 1.442695
    %v1870 = vpow.pop %v1869
    %v1871 = vadd.f32 %v1868, 1.0
    %v1872 = vadd.f32 %v1870, 1.0
    %v1873 = vrcp.pop %v1871
    %v1874 = vmul.f32 1.0, %v1873
    %v1875 = vrcp.pop %v1872
    %v1876 = vmul.f32 1.0, %v1875
    %v1877 = vtanh.pop %v1864
    %v1879 = vrot.slane %v1775, 6
    %v1881 = vmul.f32 %v1874, %v1879
    %1883 = vrot.lane.b32.xlu0 %v1877, 64
    %v1884 = vpop.permute.xlu0 %1883
    %v1886 = vmul.f32 %v1874, %v1884
    %1888 = vrot.lane.b32.xlu0 %v1886, 64
    %v1889 = vpop.permute.xlu0 %1888
    %v1891 = vadd.f32 %v1881, %v1889
    %v1892 = vtanh.pop %v1891
    %1894 = vrot.lane.b32.xlu0 %v1892, 64
    %v1895 = vpop.permute.xlu0 %1894
    %v1897 = vmul.f32 %v1876, %v1895
    %v1899 = vrot.slane %v1897, 6
    %v1900 = vsel %vm255, %v1899, 0
    %1902 = vmatprep.subr.mxu0 %v1433
    %1903 = vmatpush1.msra.mxu0 %v1432
    %1904 = vmatprep.subr.mxu0 %v1435
    %1905 = vmatpush1.msra.mxu0 %v1434
    %1906 = vmatprep.subr.mxu0 %v1437
    %1907 = vmatpush1.msra.mxu0 %v1436
    %1908 = vmatprep.subr.mxu0 %v1439
    %1909 = vmatpush1.msra.mxu0 %v1438
    %1910 = vmatprep.subr.mxu0 %v1441
    %1911 = vmatpush1.msra.mxu0 %v1440
    %1912 = vmatprep.subr.mxu0 %v1443
    %1913 = vmatpush1.msra.mxu0 %v1442
    %1914 = vmatprep.subr.mxu0 %v1445
    %1915 = vmatpush1.msra.mxu0 %v1444
    %1916 = vmatprep.subr.mxu0 %v1447
    %1917 = vmatpush1.msra.mxu0 %v1446
    %1918 = vmatprep.subr.mxu0 0.0
    %1919 = vmatpush1.msra.mxu0 0.0
    %1920 = vmatprep.subr.mxu0 0.0
    %1921 = vmatpush1.msra.mxu0 0.0
    %1922 = vmatprep.subr.mxu0 0.0
    %1923 = vmatpush1.msra.mxu0 0.0
    %1924 = vmatprep.subr.mxu0 0.0
    %1925 = vmatpush1.msra.mxu0 0.0
    %1926 = vmatprep.subr.mxu0 0.0
    %1927 = vmatpush1.msra.mxu0 0.0
    %1928 = vmatprep.subr.mxu0 0.0
    %1929 = vmatpush1.msra.mxu0 0.0
    %1930 = vmatprep.subr.mxu0 0.0
    %1931 = vmatpush1.msra.mxu0 0.0
    %1932 = vmatprep.subr.mxu0 0.0
    %1933 = vmatpush1.msra.mxu0 0.0
    %1934 = vmatprep.subr.mxu0 0.0
    %1935 = vmatpush1.msra.mxu0 0.0
    %1936 = vmatprep.subr.mxu0 0.0
    %1937 = vmatpush1.msra.mxu0 0.0
    %1938 = vmatprep.subr.mxu0 0.0
    %1939 = vmatpush1.msra.mxu0 0.0
    %1940 = vmatprep.subr.mxu0 0.0
    %1941 = vmatpush1.msra.mxu0 0.0
    %1942 = vmatprep.subr.mxu0 0.0
    %1943 = vmatpush1.msra.mxu0 0.0
    %1944 = vmatprep.subr.mxu0 0.0
    %1945 = vmatpush1.msra.mxu0 0.0
    %1946 = vmatprep.subr.mxu0 0.0
    %1947 = vmatpush1.msra.mxu0 0.0
    %1948 = vmatprep.subr.mxu0 0.0
    %1949 = vmatpush1.msra.mxu0 0.0
    %1950 = vmatprep.subr.mxu0 0.0
    %1951 = vmatpush1.msra.mxu0 0.0
    %1952 = vmatprep.subr.mxu0 0.0
    %1953 = vmatpush1.msra.mxu0 0.0
    %1954 = vmatprep.subr.mxu0 0.0
    %1955 = vmatpush1.msra.mxu0 0.0
    %1956 = vmatprep.subr.mxu0 0.0
    %1957 = vmatpush1.msra.mxu0 0.0
    %1958 = vmatprep.subr.mxu0 0.0
    %1959 = vmatpush1.msra.mxu0 0.0
    %1960 = vmatprep.subr.mxu0 0.0
    %1961 = vmatpush1.msra.mxu0 0.0
    %1962 = vmatprep.subr.mxu0 0.0
    %1963 = vmatpush1.msra.mxu0 0.0
    %1964 = vmatprep.subr.mxu0 0.0
    %1965 = vmatpush1.msra.mxu0 0.0
    %1966 = vmatprep.mubr.f32.mxu0 0.0
    %1967 = vmatmul.mubr.f32.gmra.mrb[0].mxu0 %v1900
    %v1968 = vpop.f32.mrb[0].mxu0
    %v1969 = vadd.f32 0.0, %v1968
    %v1970 = vpop.f32.mrb[0].mxu0
    %v1971 = vadd.f32 0.0, %v1970
    %1972 = vdwg.mxu0
    %v1973 = vadd.f32 %v1428, %v1969
    %v1974 = vadd.f32 %v1430, %v1971
    %v1975 = vxor.u32 %v1973, 2147483648
    %v1976 = vxor.u32 %v1974, 2147483648
    %v1977 = vmul.f32 %v1975, 1.442695
    %v1978 = vpow.pop %v1977
    %v1979 = vmul.f32 %v1976, 1.442695
    %v1980 = vpow.pop %v1979
    %v1981 = vadd.f32 %v1978, 1.0
    %v1982 = vadd.f32 %v1980, 1.0
    %v1983 = vrcp.pop %v1981
    %v1984 = vmul.f32 1.0, %v1983
    %v1985 = vrcp.pop %v1982
    %v1986 = vmul.f32 1.0, %v1985
    %v1987 = vtanh.pop %v1974
    %v1989 = vrot.slane %v1891, 6
    %v1991 = vmul.f32 %v1984, %v1989
    %1993 = vrot.lane.b32.xlu0 %v1987, 64
    %v1994 = vpop.permute.xlu0 %1993
    %v1996 = vmul.f32 %v1984, %v1994
    %1998 = vrot.lane.b32.xlu0 %v1996, 64
    %v1999 = vpop.permute.xlu0 %1998
    %v2001 = vadd.f32 %v1991, %v1999
    %v2002 = vtanh.pop %v2001
    %2004 = vrot.lane.b32.xlu0 %v2002, 64
    %v2005 = vpop.permute.xlu0 %2004
    %v2007 = vmul.f32 %v1986, %v2005
    %v2009 = vsel %vm255, %v2007, 0
    %2011 = vmatprep.subr.mxu0 %v1433
    %2012 = vmatpush1.msra.mxu0 %v1432
    %2013 = vmatprep.subr.mxu0 %v1435
    %2014 = vmatpush1.msra.mxu0 %v1434
    %2015 = vmatprep.subr.mxu0 %v1437
    %2016 = vmatpush1.msra.mxu0 %v1436
    %2017 = vmatprep.subr.mxu0 %v1439
    %2018 = vmatpush1.msra.mxu0 %v1438
    %2019 = vmatprep.subr.mxu0 %v1441
    %2020 = vmatpush1.msra.mxu0 %v1440
    %2021 = vmatprep.subr.mxu0 %v1443
    %2022 = vmatpush1.msra.mxu0 %v1442
    %2023 = vmatprep.subr.mxu0 %v1445
    %2024 = vmatpush1.msra.mxu0 %v1444
    %2025 = vmatprep.subr.mxu0 %v1447
    %2026 = vmatpush1.msra.mxu0 %v1446
    %2027 = vmatprep.subr.mxu0 0.0
    %2028 = vmatpush1.msra.mxu0 0.0
    %2029 = vmatprep.subr.mxu0 0.0
    %2030 = vmatpush1.msra.mxu0 0.0
    %2031 = vmatprep.subr.mxu0 0.0
    %2032 = vmatpush1.msra.mxu0 0.0
    %2033 = vmatprep.subr.mxu0 0.0
    %2034 = vmatpush1.msra.mxu0 0.0
    %2035 = vmatprep.subr.mxu0 0.0
    %2036 = vmatpush1.msra.mxu0 0.0
    %2037 = vmatprep.subr.mxu0 0.0
    %2038 = vmatpush1.msra.mxu0 0.0
    %2039 = vmatprep.subr.mxu0 0.0
    %2040 = vmatpush1.msra.mxu0 0.0
    %2041 = vmatprep.subr.mxu0 0.0
    %2042 = vmatpush1.msra.mxu0 0.0
    %2043 = vmatprep.subr.mxu0 0.0
    %2044 = vmatpush1.msra.mxu0 0.0
    %2045 = vmatprep.subr.mxu0 0.0
    %2046 = vmatpush1.msra.mxu0 0.0
    %2047 = vmatprep.subr.mxu0 0.0
    %2048 = vmatpush1.msra.mxu0 0.0
    %2049 = vmatprep.subr.mxu0 0.0
    %2050 = vmatpush1.msra.mxu0 0.0
    %2051 = vmatprep.subr.mxu0 0.0
    %2052 = vmatpush1.msra.mxu0 0.0
    %2053 = vmatprep.subr.mxu0 0.0
    %2054 = vmatpush1.msra.mxu0 0.0
    %2055 = vmatprep.subr.mxu0 0.0
    %2056 = vmatpush1.msra.mxu0 0.0
    %2057 = vmatprep.subr.mxu0 0.0
    %2058 = vmatpush1.msra.mxu0 0.0
    %2059 = vmatprep.subr.mxu0 0.0
    %2060 = vmatpush1.msra.mxu0 0.0
    %2061 = vmatprep.subr.mxu0 0.0
    %2062 = vmatpush1.msra.mxu0 0.0
    %2063 = vmatprep.subr.mxu0 0.0
    %2064 = vmatpush1.msra.mxu0 0.0
    %2065 = vmatprep.subr.mxu0 0.0
    %2066 = vmatpush1.msra.mxu0 0.0
    %2067 = vmatprep.subr.mxu0 0.0
    %2068 = vmatpush1.msra.mxu0 0.0
    %2069 = vmatprep.subr.mxu0 0.0
    %2070 = vmatpush1.msra.mxu0 0.0
    %2071 = vmatprep.subr.mxu0 0.0
    %2072 = vmatpush1.msra.mxu0 0.0
    %2073 = vmatprep.subr.mxu0 0.0
    %2074 = vmatpush1.msra.mxu0 0.0
    %2075 = vmatprep.mubr.f32.mxu0 0.0
    %2076 = vmatmul.mubr.f32.gmra.mrb[0].mxu0 %v2009
    %v2077 = vpop.f32.mrb[0].mxu0
    %v2078 = vadd.f32 0.0, %v2077
    %v2079 = vpop.f32.mrb[0].mxu0
    %v2080 = vadd.f32 0.0, %v2079
    %2081 = vdwg.mxu0
    %v2084 = vrot.slane %v2078, 6
    %v2085 = vrot.slane %v2080, 6
    %v2088 = vadd.f32 %v1428, %v2084
    %v2089 = vadd.f32 %v1430, %v2085
    %v2090 = vxor.u32 %v2088, 2147483648
    %v2091 = vxor.u32 %v2089, 2147483648
    %v2092 = vmul.f32 %v2090, 1.442695
    %v2093 = vpow.pop %v2092
    %v2094 = vmul.f32 %v2091, 1.442695
    %v2095 = vpow.pop %v2094
    %v2096 = vadd.f32 %v2093, 1.0
    %v2097 = vadd.f32 %v2095, 1.0
    %v2098 = vrcp.pop %v2096
    %v2099 = vmul.f32 1.0, %v2098
    %v2100 = vrcp.pop %v2097
    %v2101 = vmul.f32 1.0, %v2100
    %v2102 = vtanh.pop %v2089
    %v2104 = vrot.slane %v2001, 6
    %v2106 = vmul.f32 %v2099, %v2104
    %2108 = vrot.lane.b32.xlu0 %v2102, 64
    %v2109 = vpop.permute.xlu0 %2108
    %v2111 = vmul.f32 %v2099, %v2109
    %2113 = vrot.lane.b32.xlu0 %v2111, 64
    %v2114 = vpop.permute.xlu0 %2113
    %v2116 = vadd.f32 %v2106, %v2114
    %v2117 = vtanh.pop %v2116
    %2119 = vrot.lane.b32.xlu0 %v2117, 64
    %v2120 = vpop.permute.xlu0 %2119
    %v2122 = vmul.f32 %v2101, %v2120
    %v2124 = vrot.slane %v2122, 2
    %v2125 = vsel %vm255, %v2124, 0
    %2127 = vmatprep.subr.mxu0 %v1433
    %2128 = vmatpush1.msra.mxu0 %v1432
    %2129 = vmatprep.subr.mxu0 %v1435
    %2130 = vmatpush1.msra.mxu0 %v1434
    %2131 = vmatprep.subr.mxu0 %v1437
    %2132 = vmatpush1.msra.mxu0 %v1436
    %2133 = vmatprep.subr.mxu0 %v1439
    %2134 = vmatpush1.msra.mxu0 %v1438
    %2135 = vmatprep.subr.mxu0 %v1441
    %2136 = vmatpush1.msra.mxu0 %v1440
    %2137 = vmatprep.subr.mxu0 %v1443
    %2138 = vmatpush1.msra.mxu0 %v1442
    %2139 = vmatprep.subr.mxu0 %v1445
    %2140 = vmatpush1.msra.mxu0 %v1444
    %2141 = vmatprep.subr.mxu0 %v1447
    %2142 = vmatpush1.msra.mxu0 %v1446
    %2143 = vmatprep.subr.mxu0 0.0
    %2144 = vmatpush1.msra.mxu0 0.0
    %2145 = vmatprep.subr.mxu0 0.0
    %2146 = vmatpush1.msra.mxu0 0.0
    %2147 = vmatprep.subr.mxu0 0.0
    %2148 = vmatpush1.msra.mxu0 0.0
    %2149 = vmatprep.subr.mxu0 0.0
    %2150 = vmatpush1.msra.mxu0 0.0
    %2151 = vmatprep.subr.mxu0 0.0
    %2152 = vmatpush1.msra.mxu0 0.0
    %2153 = vmatprep.subr.mxu0 0.0
    %2154 = vmatpush1.msra.mxu0 0.0
    %2155 = vmatprep.subr.mxu0 0.0
    %2156 = vmatpush1.msra.mxu0 0.0
    %2157 = vmatprep.subr.mxu0 0.0
    %2158 = vmatpush1.msra.mxu0 0.0
    %2159 = vmatprep.subr.mxu0 0.0
    %2160 = vmatpush1.msra.mxu0 0.0
    %2161 = vmatprep.subr.mxu0 0.0
    %2162 = vmatpush1.msra.mxu0 0.0
    %2163 = vmatprep.subr.mxu0 0.0
    %2164 = vmatpush1.msra.mxu0 0.0
    %2165 = vmatprep.subr.mxu0 0.0
    %2166 = vmatpush1.msra.mxu0 0.0
    %2167 = vmatprep.subr.mxu0 0.0
    %2168 = vmatpush1.msra.mxu0 0.0
    %2169 = vmatprep.subr.mxu0 0.0
    %2170 = vmatpush1.msra.mxu0 0.0
    %2171 = vmatprep.subr.mxu0 0.0
    %2172 = vmatpush1.msra.mxu0 0.0
    %2173 = vmatprep.subr.mxu0 0.0
    %2174 = vmatpush1.msra.mxu0 0.0
    %2175 = vmatprep.subr.mxu0 0.0
    %2176 = vmatpush1.msra.mxu0 0.0
    %2177 = vmatprep.subr.mxu0 0.0
    %2178 = vmatpush1.msra.mxu0 0.0
    %2179 = vmatprep.subr.mxu0 0.0
    %2180 = vmatpush1.msra.mxu0 0.0
    %2181 = vmatprep.subr.mxu0 0.0
    %2182 = vmatpush1.msra.mxu0 0.0
    %2183 = vmatprep.subr.mxu0 0.0
    %2184 = vmatpush1.msra.mxu0 0.0
    %2185 = vmatprep.subr.mxu0 0.0
    %2186 = vmatpush1.msra.mxu0 0.0
    %2187 = vmatprep.subr.mxu0 0.0
    %2188 = vmatpush1.msra.mxu0 0.0
    %2189 = vmatprep.subr.mxu0 0.0
    %2190 = vmatpush1.msra.mxu0 0.0
    %2191 = vmatprep.mubr.f32.mxu0 0.0
    %2192 = vmatmul.mubr.f32.gmra.mrb[0].mxu0 %v2125
    %v2193 = vpop.f32.mrb[0].mxu0
    %v2194 = vadd.f32 0.0, %v2193
    %v2195 = vpop.f32.mrb[0].mxu0
    %v2196 = vadd.f32 0.0, %v2195
    %2197 = vdwg.mxu0
    %v2200 = vrot.slane %v2194, 4
    %v2201 = vrot.slane %v2196, 4
    %v2204 = vadd.f32 %v1428, %v2200
    %v2205 = vadd.f32 %v1430, %v2201
    %v2206 = vxor.u32 %v2204, 2147483648
    %v2207 = vxor.u32 %v2205, 2147483648
    %v2208 = vmul.f32 %v2206, 1.442695
    %v2209 = vpow.pop %v2208
    %v2210 = vmul.f32 %v2207, 1.442695
    %v2211 = vpow.pop %v2210
    %v2212 = vadd.f32 %v2209, 1.0
    %v2213 = vadd.f32 %v2211, 1.0
    %v2214 = vrcp.pop %v2212
    %v2215 = vmul.f32 1.0, %v2214
    %v2216 = vrcp.pop %v2213
    %v2217 = vmul.f32 1.0, %v2216
    %v2218 = vtanh.pop %v2205
    %v2220 = vrot.slane %v2116, 6
    %v2222 = vmul.f32 %v2215, %v2220
    %2224 = vrot.lane.b32.xlu0 %v2218, 64
    %v2225 = vpop.permute.xlu0 %2224
    %v2227 = vmul.f32 %v2215, %v2225
    %2229 = vrot.lane.b32.xlu0 %v2227, 64
    %v2230 = vpop.permute.xlu0 %2229
    %v2232 = vadd.f32 %v2222, %v2230
    %v2233 = vtanh.pop %v2232
    %2235 = vrot.lane.b32.xlu0 %v2233, 64
    %v2236 = vpop.permute.xlu0 %2235
    %v2238 = vmul.f32 %v2217, %v2236
    %v2240 = vrot.slane %v2238, 4
    %v2241 = vsel %vm255, %v2240, 0
    %2243 = vmatprep.subr.mxu0 %v1433
    %2244 = vmatpush1.msra.mxu0 %v1432
    %2245 = vmatprep.subr.mxu0 %v1435
    %2246 = vmatpush1.msra.mxu0 %v1434
    %2247 = vmatprep.subr.mxu0 %v1437
    %2248 = vmatpush1.msra.mxu0 %v1436
    %2249 = vmatprep.subr.mxu0 %v1439
    %2250 = vmatpush1.msra.mxu0 %v1438
    %2251 = vmatprep.subr.mxu0 %v1441
    %2252 = vmatpush1.msra.mxu0 %v1440
    %2253 = vmatprep.subr.mxu0 %v1443
    %2254 = vmatpush1.msra.mxu0 %v1442
    %2255 = vmatprep.subr.mxu0 %v1445
    %2256 = vmatpush1.msra.mxu0 %v1444
    %2257 = vmatprep.subr.mxu0 %v1447
    %2258 = vmatpush1.msra.mxu0 %v1446
    %2259 = vmatprep.subr.mxu0 0.0
    %2260 = vmatpush1.msra.mxu0 0.0
    %2261 = vmatprep.subr.mxu0 0.0
    %2262 = vmatpush1.msra.mxu0 0.0
    %2263 = vmatprep.subr.mxu0 0.0
    %2264 = vmatpush1.msra.mxu0 0.0
    %2265 = vmatprep.subr.mxu0 0.0
    %2266 = vmatpush1.msra.mxu0 0.0
    %2267 = vmatprep.subr.mxu0 0.0
    %2268 = vmatpush1.msra.mxu0 0.0
    %2269 = vmatprep.subr.mxu0 0.0
    %2270 = vmatpush1.msra.mxu0 0.0
    %2271 = vmatprep.subr.mxu0 0.0
    %2272 = vmatpush1.msra.mxu0 0.0
    %2273 = vmatprep.subr.mxu0 0.0
    %2274 = vmatpush1.msra.mxu0 0.0
    %2275 = vmatprep.subr.mxu0 0.0
    %2276 = vmatpush1.msra.mxu0 0.0
    %2277 = vmatprep.subr.mxu0 0.0
    %2278 = vmatpush1.msra.mxu0 0.0
    %2279 = vmatprep.subr.mxu0 0.0
    %2280 = vmatpush1.msra.mxu0 0.0
    %2281 = vmatprep.subr.mxu0 0.0
    %2282 = vmatpush1.msra.mxu0 0.0
    %2283 = vmatprep.subr.mxu0 0.0
    %2284 = vmatpush1.msra.mxu0 0.0
    %2285 = vmatprep.subr.mxu0 0.0
    %2286 = vmatpush1.msra.mxu0 0.0
    %2287 = vmatprep.subr.mxu0 0.0
    %2288 = vmatpush1.msra.mxu0 0.0
    %2289 = vmatprep.subr.mxu0 0.0
    %2290 = vmatpush1.msra.mxu0 0.0
    %2291 = vmatprep.subr.mxu0 0.0
    %2292 = vmatpush1.msra.mxu0 0.0
    %2293 = vmatprep.subr.mxu0 0.0
    %2294 = vmatpush1.msra.mxu0 0.0
    %2295 = vmatprep.subr.mxu0 0.0
    %2296 = vmatpush1.msra.mxu0 0.0
    %2297 = vmatprep.subr.mxu0 0.0
    %2298 = vmatpush1.msra.mxu0 0.0
    %2299 = vmatprep.subr.mxu0 0.0
    %2300 = vmatpush1.msra.mxu0 0.0
    %2301 = vmatprep.subr.mxu0 0.0
    %2302 = vmatpush1.msra.mxu0 0.0
    %2303 = vmatprep.subr.mxu0 0.0
    %2304 = vmatpush1.msra.mxu0 0.0
    %2305 = vmatprep.subr.mxu0 0.0
    %2306 = vmatpush1.msra.mxu0 0.0
    %2307 = vmatprep.mubr.f32.mxu0 0.0
    %2308 = vmatmul.mubr.f32.gmra.mrb[0].mxu0 %v2241
    %v2309 = vpop.f32.mrb[0].mxu0
    %v2310 = vadd.f32 0.0, %v2309
    %v2311 = vpop.f32.mrb[0].mxu0
    %v2312 = vadd.f32 0.0, %v2311
    %2313 = vdwg.mxu0
    %v2316 = vrot.slane %v2310, 2
    %v2317 = vrot.slane %v2312, 2
    %v2320 = vadd.f32 %v1428, %v2316
    %v2321 = vadd.f32 %v1430, %v2317
    %v2322 = vxor.u32 %v2320, 2147483648
    %v2323 = vxor.u32 %v2321, 2147483648
    %v2324 = vmul.f32 %v2322, 1.442695
    %v2325 = vpow.pop %v2324
    %v2326 = vmul.f32 %v2323, 1.442695
    %v2327 = vpow.pop %v2326
    %v2328 = vadd.f32 %v2325, 1.0
    %v2329 = vadd.f32 %v2327, 1.0
    %v2330 = vrcp.pop %v2328
    %v2331 = vmul.f32 1.0, %v2330
    %v2332 = vrcp.pop %v2329
    %v2333 = vmul.f32 1.0, %v2332
    %v2334 = vtanh.pop %v2321
    %v2336 = vrot.slane %v2232, 6
    %v2338 = vmul.f32 %v2331, %v2336
    %2340 = vrot.lane.b32.xlu0 %v2334, 64
    %v2341 = vpop.permute.xlu0 %2340
    %v2343 = vmul.f32 %v2331, %v2341
    %2345 = vrot.lane.b32.xlu0 %v2343, 64
    %v2346 = vpop.permute.xlu0 %2345
    %v2348 = vadd.f32 %v2338, %v2346
    %v2349 = vtanh.pop %v2348
    %2351 = vrot.lane.b32.xlu0 %v2349, 64
    %v2352 = vpop.permute.xlu0 %2351
    %v2354 = vmul.f32 %v2333, %v2352
    %v2356 = vrot.slane %v2354, 6
    %v2358 = vsel %vm128, %v1550, %v2356
    %v2359 = vrot.slane %v2238, 2
    %v2361 = vsel %vm128, %v1665, %v2359
    %v2362 = vrot.slane %v2122, 6
    %v2364 = vsel %vm128, %v1781, %v2362
    %v2365 = vrot.slane %v2007, 2
    %v2367 = vsel %vm128, %v1897, %v2365
    %v2369 = vsel %vm128, %v2007, %v1899
    %v2370 = vrot.slane %v1781, 2
    %v2372 = vsel %vm128, %v2122, %v2370
    %v2373 = vrot.slane %v1665, 6
    %v2375 = vsel %vm128, %v2238, %v2373
    %v2376 = vrot.slane %v1550, 2
    %v2378 = vsel %vm128, %v2354, %v2376
    %v2381 = vunpack.c.l.s4 1966171168
    %v2382 = vunpack.c.0.s8 %v2381
    %v2383 = vlaneseq
    %v2384 = vshrl.u32 %v2383, 7
    %v2385 = vsub.s32 %v2382, %v2384
    %v2386 = vrot.slane %v2358, %v2385
    %v2387 = vcombine.high %v2386, %v2386
    %v2389 = vunpack.c.l.s4 1966171168
    %v2390 = vunpack.c.0.s8 %v2389
    %v2391 = vlaneseq
    %v2392 = vshrl.u32 %v2391, 7
    %v2393 = vsub.s32 %v2390, %v2392
    %v2394 = vrot.slane %v2386, %v2393
    %v2396 = vunpack.c.l.s4 1966171168
    %v2397 = vunpack.c.0.s8 %v2396
    %v2398 = vlaneseq
    %v2399 = vshrl.u32 %v2398, 7
    %v2400 = vsub.s32 %v2397, %v2399
    %v2401 = vrot.slane %v2387, %v2400
    %v2406 = vunpack.c.l.s4 1966171168
    %v2407 = vunpack.c.0.s8 %v2406
    %v2408 = vlaneseq
    %v2409 = vshrl.u32 %v2408, 7
    %v2410 = vsub.s32 %v2407, %v2409
    %v2411 = vrot.slane %v2361, %v2410
    %v2412 = vcombine.high %v2411, %v2411
    %v2414 = vunpack.c.l.s4 1966171168
    %v2415 = vunpack.c.0.s8 %v2414
    %v2416 = vlaneseq
    %v2417 = vshrl.u32 %v2416, 7
    %v2418 = vsub.s32 %v2415, %v2417
    %v2419 = vrot.slane %v2411, %v2418
    %v2421 = vunpack.c.l.s4 1966171168
    %v2422 = vunpack.c.0.s8 %v2421
    %v2423 = vlaneseq
    %v2424 = vshrl.u32 %v2423, 7
    %v2425 = vsub.s32 %v2422, %v2424
    %v2426 = vrot.slane %v2412, %v2425
    %v2427 = vcombine.high %v2419, %v2419
    %v2428 = vcombine.high %v2426, %v2426
    %v2430 = vcombine.high %v2364, %v2364
    %v2432 = vunpack.c.l.s4 1966171168
    %v2433 = vunpack.c.0.s8 %v2432
    %v2434 = vlaneseq
    %v2435 = vshrl.u32 %v2434, 7
    %v2436 = vsub.s32 %v2433, %v2435
    %v2437 = vrot.slane %v2430, %v2436
    %v2438 = vcombine.high %v2437, %v2437
    %v2440 = vunpack.c.l.s4 1966171168
    %v2441 = vunpack.c.0.s8 %v2440
    %v2442 = vlaneseq
    %v2443 = vshrl.u32 %v2442, 7
    %v2444 = vsub.s32 %v2441, %v2443
    %v2445 = vrot.slane %v2437, %v2444
    %v2447 = vunpack.c.l.s4 1966171168
    %v2448 = vunpack.c.0.s8 %v2447
    %v2449 = vlaneseq
    %v2450 = vshrl.u32 %v2449, 7
    %v2451 = vsub.s32 %v2448, %v2450
    %v2452 = vrot.slane %v2438, %v2451
    %v2454 = vcombine.high %v2367, %v2367
    %v2456 = vunpack.c.l.s4 1966171168
    %v2457 = vunpack.c.0.s8 %v2456
    %v2458 = vlaneseq
    %v2459 = vshrl.u32 %v2458, 7
    %v2460 = vsub.s32 %v2457, %v2459
    %v2461 = vrot.slane %v2454, %v2460
    %v2462 = vcombine.high %v2461, %v2461
    %v2464 = vunpack.c.l.s4 1966171168
    %v2465 = vunpack.c.0.s8 %v2464
    %v2466 = vlaneseq
    %v2467 = vshrl.u32 %v2466, 7
    %v2468 = vsub.s32 %v2465, %v2467
    %v2469 = vrot.slane %v2461, %v2468
    %v2471 = vunpack.c.l.s4 1966171168
    %v2472 = vunpack.c.0.s8 %v2471
    %v2473 = vlaneseq
    %v2474 = vshrl.u32 %v2473, 7
    %v2475 = vsub.s32 %v2472, %v2474
    %v2476 = vrot.slane %v2462, %v2475
    %v2477 = vcombine.high %v2469, %v2469
    %v2478 = vcombine.high %v2476, %v2476
    %v2481 = vunpack.c.l.s4 1966171168
    %v2482 = vunpack.c.0.s8 %v2481
    %v2483 = vlaneseq
    %v2484 = vshrl.u32 %v2483, 7
    %v2485 = vsub.s32 %v2482, %v2484
    %v2486 = vrot.slane %v2369, %v2485
    %v2487 = vcombine.high %v2486, %v2486
    %v2489 = vunpack.c.l.s4 1966171168
    %v2490 = vunpack.c.0.s8 %v2489
    %v2491 = vlaneseq
    %v2492 = vshrl.u32 %v2491, 7
    %v2493 = vsub.s32 %v2490, %v2492
    %v2494 = vrot.slane %v2486, %v2493
    %v2496 = vunpack.c.l.s4 1966171168
    %v2497 = vunpack.c.0.s8 %v2496
    %v2498 = vlaneseq
    %v2499 = vshrl.u32 %v2498, 7
    %v2500 = vsub.s32 %v2497, %v2499
    %v2501 = vrot.slane %v2487, %v2500
    %v2504 = vunpack.c.l.s4 1966171168
    %v2505 = vunpack.c.0.s8 %v2504
    %v2506 = vlaneseq
    %v2507 = vshrl.u32 %v2506, 7
    %v2508 = vsub.s32 %v2505, %v2507
    %v2509 = vrot.slane %v2372, %v2508
    %v2510 = vcombine.high %v2509, %v2509
    %v2512 = vunpack.c.l.s4 1966171168
    %v2513 = vunpack.c.0.s8 %v2512
    %v2514 = vlaneseq
    %v2515 = vshrl.u32 %v2514, 7
    %v2516 = vsub.s32 %v2513, %v2515
    %v2517 = vrot.slane %v2509, %v2516
    %v2519 = vunpack.c.l.s4 1966171168
    %v2520 = vunpack.c.0.s8 %v2519
    %v2521 = vlaneseq
    %v2522 = vshrl.u32 %v2521, 7
    %v2523 = vsub.s32 %v2520, %v2522
    %v2524 = vrot.slane %v2510, %v2523
    %v2525 = vcombine.high %v2517, %v2517
    %v2526 = vcombine.high %v2524, %v2524
    %v2528 = vcombine.high %v2375, %v2375
    %v2530 = vunpack.c.l.s4 1966171168
    %v2531 = vunpack.c.0.s8 %v2530
    %v2532 = vlaneseq
    %v2533 = vshrl.u32 %v2532, 7
    %v2534 = vsub.s32 %v2531, %v2533
    %v2535 = vrot.slane %v2528, %v2534
    %v2536 = vcombine.high %v2535, %v2535
    %v2538 = vunpack.c.l.s4 1966171168
    %v2539 = vunpack.c.0.s8 %v2538
    %v2540 = vlaneseq
    %v2541 = vshrl.u32 %v2540, 7
    %v2542 = vsub.s32 %v2539, %v2541
    %v2543 = vrot.slane %v2535, %v2542
    %v2545 = vunpack.c.l.s4 1966171168
    %v2546 = vunpack.c.0.s8 %v2545
    %v2547 = vlaneseq
    %v2548 = vshrl.u32 %v2547, 7
    %v2549 = vsub.s32 %v2546, %v2548
    %v2550 = vrot.slane %v2536, %v2549
    %v2552 = vcombine.high %v2378, %v2378
    %v2554 = vunpack.c.l.s4 1966171168
    %v2555 = vunpack.c.0.s8 %v2554
    %v2556 = vlaneseq
    %v2557 = vshrl.u32 %v2556, 7
    %v2558 = vsub.s32 %v2555, %v2557
    %v2559 = vrot.slane %v2552, %v2558
    %v2560 = vcombine.high %v2559, %v2559
    %v2562 = vunpack.c.l.s4 1966171168
    %v2563 = vunpack.c.0.s8 %v2562
    %v2564 = vlaneseq
    %v2565 = vshrl.u32 %v2564, 7
    %v2566 = vsub.s32 %v2563, %v2565
    %v2567 = vrot.slane %v2559, %v2566
    %v2569 = vunpack.c.l.s4 1966171168
    %v2570 = vunpack.c.0.s8 %v2569
    %v2571 = vlaneseq
    %v2572 = vshrl.u32 %v2571, 7
    %v2573 = vsub.s32 %v2570, %v2572
    %v2574 = vrot.slane %v2560, %v2573
    %v2575 = vcombine.high %v2567, %v2567
    %v2576 = vcombine.high %v2574, %v2574
    %v2577 = vlaneseq
    %v2578 = vshrl.u32 %v2577, 7
    %v2579 = vsub.s32 0, %v2578
    %v2580 = vrot.slane %v2427, %v2579
    %v2581 = vlaneseq
    %v2582 = vshrl.u32 %v2581, 7
    %v2583 = vsub.s32 0, %v2582
    %v2584 = vrot.slane %v2428, %v2583
    %v2587 = vlaneseq
    %v2588 = vshrl.u32 %v2587, 7
    %v2589 = vsub.s32 0, %v2588
    %v2590 = vrot.slane %v2445, %v2589
    %v2591 = vlaneseq
    %v2592 = vshrl.u32 %v2591, 7
    %v2593 = vsub.s32 0, %v2592
    %v2594 = vrot.slane %v2452, %v2593
    %v2597 = vlaneseq
    %v2598 = vshrl.u32 %v2597, 7
    %v2599 = vsub.s32 0, %v2598
    %v2600 = vrot.slane %v2477, %v2599
    %v2601 = vlaneseq
    %v2602 = vshrl.u32 %v2601, 7
    %v2603 = vsub.s32 0, %v2602
    %v2604 = vrot.slane %v2478, %v2603
    %v2607 = vlaneseq
    %v2608 = vshrl.u32 %v2607, 7
    %v2609 = vsub.s32 0, %v2608
    %v2610 = vrot.slane %v2494, %v2609
    %v2611 = vlaneseq
    %v2612 = vshrl.u32 %v2611, 7
    %v2613 = vsub.s32 0, %v2612
    %v2614 = vrot.slane %v2501, %v2613
    %v2617 = vlaneseq
    %v2618 = vshrl.u32 %v2617, 7
    %v2619 = vsub.s32 0, %v2618
    %v2620 = vrot.slane %v2525, %v2619
    %v2621 = vlaneseq
    %v2622 = vshrl.u32 %v2621, 7
    %v2623 = vsub.s32 0, %v2622
    %v2624 = vrot.slane %v2526, %v2623
    %v2627 = vlaneseq
    %v2628 = vshrl.u32 %v2627, 7
    %v2629 = vsub.s32 0, %v2628
    %v2630 = vrot.slane %v2543, %v2629
    %v2631 = vlaneseq
    %v2632 = vshrl.u32 %v2631, 7
    %v2633 = vsub.s32 0, %v2632
    %v2634 = vrot.slane %v2550, %v2633
    %v2637 = vlaneseq
    %v2638 = vshrl.u32 %v2637, 7
    %v2639 = vsub.s32 0, %v2638
    %v2640 = vrot.slane %v2575, %v2639
    %v2641 = vlaneseq
    %v2642 = vshrl.u32 %v2641, 7
    %v2643 = vsub.s32 0, %v2642
    %v2644 = vrot.slane %v2576, %v2643
    %vm2647 = vcmask 1040384
    %v2648 = vsel %vm2647, %v2394, %v2580
    %v2649 = vsel %vm2647, %v2401, %v2584
    %v2650 = vsel %vm218, %v2648, %v2590
    %v2651 = vsel %vm218, %v2649, %v2594
    %vm2652 = vcmask 1042432
    %v2653 = vsel %vm2652, %v2650, %v2600
    %v2654 = vsel %vm2652, %v2651, %v2604
    %v2655 = vsel %vm220, %v2653, %v2610
    %v2656 = vsel %vm220, %v2654, %v2614
    %vm2657 = vcmask 1044480
    %v2658 = vsel %vm2657, %v2655, %v2620
    %v2659 = vsel %vm2657, %v2656, %v2624
    %v2660 = vsel %vm222, %v2658, %v2630
    %v2661 = vsel %vm222, %v2659, %v2634
    %v2662 = vsel %vm213, %v2660, %v2640
    %v2663 = vsel %vm213, %v2661, %v2644
    %v2664 = vld [vmem:[#allocation10] sm:$0xff]
    %v2665 = vld [vmem:[#allocation10 + $0x8] sm:$0xff]
    %v2666 = vld [vmem:[#allocation10 + $0x10] sm:$0xff]
    %v2667 = vld [vmem:[#allocation10 + $0x18] sm:$0xff]
    %v2668 = vld [vmem:[#allocation10 + $0x20] sm:$0xff]
    %v2669 = vld [vmem:[#allocation10 + $0x28] sm:$0xff]
    %v2670 = vld [vmem:[#allocation10 + $0x30] sm:$0xff]
    %v2671 = vld [vmem:[#allocation10 + $0x38] sm:$0xff]
    %v2672 = vld [vmem:[#allocation10 + $0x40] sm:$0xff]
    %v2673 = vld [vmem:[#allocation10 + $0x48] sm:$0xff]
    %v2674 = vld [vmem:[#allocation10 + $0x50] sm:$0xff]
    %v2675 = vld [vmem:[#allocation10 + $0x58] sm:$0xff]
    %v2676 = vld [vmem:[#allocation10 + $0x60] sm:$0xff]
    %v2677 = vld [vmem:[#allocation10 + $0x68] sm:$0xff]
    %v2678 = vld [vmem:[#allocation10 + $0x70] sm:$0xff]
    %v2679 = vld [vmem:[#allocation10 + $0x78] sm:$0xff]
    %v2680 = vld [vmem:[%s8] sm:$0x3]
    %v2682 = vlaneseq
    %v2683 = vshrl.u32 %v2682, 7
    %v2684 = vsub.s32 0, %v2683
    %v2685 = vrot.slane %v2680, %v2684
    %v2686 = vlaneseq
    %v2687 = vshrl.u32 %v2686, 7
    %v2688 = vsub.s32 1, %v2687
    %v2689 = vrot.slane %v2680, %v2688
    %v2693 = vsel %vm255, %v2662, 0
    %v2696 = vsel %vm255, %v2663, 0
    %2698 = vmatprep.subr.mxu0 %v2665
    %2699 = vmatpush1.msra.mxu0 %v2664
    %2700 = vmatprep.subr.mxu0 %v2667
    %2701 = vmatpush1.msra.mxu0 %v2666
    %2702 = vmatprep.subr.mxu0 %v2669
    %2703 = vmatpush1.msra.mxu0 %v2668
    %2704 = vmatprep.subr.mxu0 %v2671
    %2705 = vmatpush1.msra.mxu0 %v2670
    %2706 = vmatprep.subr.mxu0 %v2673
    %2707 = vmatpush1.msra.mxu0 %v2672
    %2708 = vmatprep.subr.mxu0 %v2675
    %2709 = vmatpush1.msra.mxu0 %v2674
    %2710 = vmatprep.subr.mxu0 %v2677
    %2711 = vmatpush1.msra.mxu0 %v2676
    %2712 = vmatprep.subr.mxu0 %v2679
    %2713 = vmatpush1.msra.mxu0 %v2678
    %2714 = vmatprep.subr.mxu0 0.0
    %2715 = vmatpush1.msra.mxu0 0.0
    %2716 = vmatprep.subr.mxu0 0.0
    %2717 = vmatpush1.msra.mxu0 0.0
    %2718 = vmatprep.subr.mxu0 0.0
    %2719 = vmatpush1.msra.mxu0 0.0
    %2720 = vmatprep.subr.mxu0 0.0
    %2721 = vmatpush1.msra.mxu0 0.0
    %2722 = vmatprep.subr.mxu0 0.0
    %2723 = vmatpush1.msra.mxu0 0.0
    %2724 = vmatprep.subr.mxu0 0.0
    %2725 = vmatpush1.msra.mxu0 0.0
    %2726 = vmatprep.subr.mxu0 0.0
    %2727 = vmatpush1.msra.mxu0 0.0
    %2728 = vmatprep.subr.mxu0 0.0
    %2729 = vmatpush1.msra.mxu0 0.0
    %2730 = vmatprep.subr.mxu0 0.0
    %2731 = vmatpush1.msra.mxu0 0.0
    %2732 = vmatprep.subr.mxu0 0.0
    %2733 = vmatpush1.msra.mxu0 0.0
    %2734 = vmatprep.subr.mxu0 0.0
    %2735 = vmatpush1.msra.mxu0 0.0
    %2736 = vmatprep.subr.mxu0 0.0
    %2737 = vmatpush1.msra.mxu0 0.0
    %2738 = vmatprep.subr.mxu0 0.0
    %2739 = vmatpush1.msra.mxu0 0.0
    %2740 = vmatprep.subr.mxu0 0.0
    %2741 = vmatpush1.msra.mxu0 0.0
    %2742 = vmatprep.subr.mxu0 0.0
    %2743 = vmatpush1.msra.mxu0 0.0
    %2744 = vmatprep.subr.mxu0 0.0
    %2745 = vmatpush1.msra.mxu0 0.0
    %2746 = vmatprep.subr.mxu0 0.0
    %2747 = vmatpush1.msra.mxu0 0.0
    %2748 = vmatprep.subr.mxu0 0.0
    %2749 = vmatpush1.msra.mxu0 0.0
    %2750 = vmatprep.subr.mxu0 0.0
    %2751 = vmatpush1.msra.mxu0 0.0
    %2752 = vmatprep.subr.mxu0 0.0
    %2753 = vmatpush1.msra.mxu0 0.0
    %2754 = vmatprep.subr.mxu0 0.0
    %2755 = vmatpush1.msra.mxu0 0.0
    %2756 = vmatprep.subr.mxu0 0.0
    %2757 = vmatpush1.msra.mxu0 0.0
    %2758 = vmatprep.subr.mxu0 0.0
    %2759 = vmatpush1.msra.mxu0 0.0
    %2760 = vmatprep.subr.mxu0 0.0
    %2761 = vmatpush1.msra.mxu0 0.0
    %2762 = vmatprep.mubr.f32.mxu0 0.0
    %2763 = vmatmul.mubr.f32.gmra.mrb[0].mxu0 %v2693
    %v2764 = vpop.f32.mrb[0].mxu0
    %v2765 = vadd.f32 %v2685, %v2764
    %v2766 = vpop.f32.mrb[0].mxu0
    %v2767 = vadd.f32 %v2689, %v2766
    %2768 = vmatprep.mubr.f32.mxu0 0.0
    %2769 = vmatmul.mubr.f32.gmra.mrb[0].mxu0 %v2696
    %v2770 = vpop.f32.mrb[0].mxu0
    %v2771 = vadd.f32 %v2685, %v2770
    %v2772 = vpop.f32.mrb[0].mxu0
    %v2773 = vadd.f32 %v2689, %v2772
    %2774 = vdwg.mxu0
    %v2775 = vtanh.pop %v2765
    %v2776 = vtanh.pop %v2767
    %v2777 = vtanh.pop %v2771
    %v2778 = vtanh.pop %v2773
    %2779 = vst [vmem:[%s9] sm:$0xff] %v2775
    %2780 = vst [vmem:[%s9 + $0x8] sm:$0xff] %v2776
    %2781 = vst [vmem:[%s9 + $0x10] sm:$0xff] %v2777
    %2782 = vst [vmem:[%s9 + $0x18] sm:$0xff] %v2778
    // Predicated region
    $region62: #{deep_clustering_forward.1} parent=1 // pred_check
      _
    $region63: #{deep_clustering_forward.1} parent=1 // pred_check_branch
      %2784 = sbr.rel (0) target = $region65
    $region64: #{deep_clustering_forward.1} parent=1 // pred_region
      _
    $region65: #{deep_clustering_forward.1} parent=1 // pred_fallthru
      _
    // Predicated region
    $region66: #{deep_clustering_forward.1} parent=1 // pred_check
      _
    $region67: #{deep_clustering_forward.1} parent=1 // pred_check_branch
      %2786 = sbr.rel (0) target = $region69
    $region68: #{deep_clustering_forward.1} parent=1 // pred_region
      _
    $region69: #{deep_clustering_forward.1} parent=1 // pred_fallthru
      _
    %2787 = vsyncpa [#allocation3], 1
    %2788 = vsyncpa [#allocation5], 1
    %2789 = vsyncpa [#allocation8], 1
    %2790 = vsyncpa [#allocation11], 1

</llo_original>
